<compile_context>
chip_gen: v7x
topology: tpu7x:2x2x1
jax: 0.10.0
libtpu: 0.0.40
codegen_flags: <defaults>
</compile_context>

<pallas_src>
import math
from functools import partial

import jax
import jax.numpy as jnp
from jax import lax
from jax.experimental import pallas as pl
from jax.experimental.pallas import tpu as pltpu


def _gelu_exact(x):
    # PyTorch nn.GELU() default = exact erf formulation.
    return 0.5 * x * (1.0 + lax.erf(x * (1.0 / math.sqrt(2.0))))


def _s2_kernel(x_ref, w1_ref, b1_ref, wa1_ref, wa2_ref, w2_ref, b2_ref, o_ref,
               *, W, H, C, Bt):
    N = W * H
    q = C // 4

    # ---- hoisted lane-index masks (computed once, shared by all shifts) ----
    col = lax.broadcasted_iota(jnp.int32, (1, N), 1)    # lane r = w*H + h
    ih = col % H                                         # h index
    m_w0 = col < H                                       # rows with w == 0
    m_wL = col >= N - H                                  # rows with w == W-1
    m_h0 = ih == 0                                       # rows with h == 0
    m_hL = ih == H - 1                                   # rows with h == H-1

    def s_wp(v):   # out[w] = in[w-1]   for w >= 1
        return jnp.where(m_w0, v, pltpu.roll(v, H % N, axis=1))

    def s_wm(v):   # out[w] = in[w+1]   for w <= W-2
        return jnp.where(m_wL, v, pltpu.roll(v, (-H) % N, axis=1))

    def s_hp(v):   # out[h] = in[h-1]   for h >= 1
        return jnp.where(m_h0, v, pltpu.roll(v, 1 % N, axis=1))

    def s_hm(v):   # out[h] = in[h+1]   for h <= H-2
        return jnp.where(m_hL, v, pltpu.roll(v, (N - 1) % N, axis=1))

    shifts1 = (s_wp, s_wm, s_hp, s_hm)   # spatial_shift1, per channel quarter
    shifts2 = (s_hp, s_hm, s_wp, s_wm)   # spatial_shift2, per channel quarter

    # ---- small static batch loop over the packed block -----------------
    for b in range(Bt):
        xb = x_ref[b]                                    # (C, N) bf16

        # mlp1: fused Linear(C, 3C) -> one (3C, C) @ (C, N) MXU matmul
        y = jnp.dot(w1_ref[...], xb,
                    preferred_element_type=jnp.float32) + b1_ref[...]  # (3C,N)

        # Spatial shifts + split-attention sum, per channel quarter
        # (no full-(C, N) concat copies).
        x1q, x2q, x3q, a_parts = [], [], [], []
        for i in range(4):
            y1i = y[i * q:(i + 1) * q]
            y2i = y[C + i * q:C + (i + 1) * q]
            x3i = y[2 * C + i * q:2 * C + (i + 1) * q]
            x1i = shifts1[i](y1i)
            x2i = shifts2[i](y2i)
            x1q.append(x1i)
            x2q.append(x2i)
            x3q.append(x3i)
            a_parts.append(jnp.sum(x1i + x2i + x3i, axis=1, keepdims=True))

        # SplitAttention: tiny (C,1) matvec chain; bf16 weights, f32 accum.
        a = jnp.concatenate(a_parts, axis=0)                          # (C, 1)
        g = _gelu_exact(jnp.dot(wa1_ref[...], a.astype(jnp.bfloat16),
                                preferred_element_type=jnp.float32))  # (C, 1)
        hat = jnp.dot(wa2_ref[...], g.astype(jnp.bfloat16),
                      preferred_element_type=jnp.float32)             # (3C, 1)
        h0, h1, h2 = hat[0:C], hat[C:2 * C], hat[2 * C:3 * C]
        m = jnp.maximum(jnp.maximum(h0, h1), h2)                      # softmax k=3
        e0 = jnp.exp(h0 - m)
        e1 = jnp.exp(h1 - m)
        e2 = jnp.exp(h2 - m)
        inv = 1.0 / (e0 + e1 + e2)
        a0, a1, a2 = e0 * inv, e1 * inv, e2 * inv                     # (C, 1)

        # Softmax-weighted combine per quarter, emitted directly in bf16
        # (this buffer is the mlp2 operand and has to exist anyway).
        out_q = []
        for i in range(4):
            sl = slice(i * q, (i + 1) * q)
            out_q.append((a0[sl] * x1q[i] + a1[sl] * x2q[i]
                          + a2[sl] * x3q[i]).astype(jnp.bfloat16))
        out_all = jnp.concatenate(out_q, axis=0)                      # (C, N) bf16

        # mlp2: Linear(C, C) -> (C, C) @ (C, N) MXU matmul
        res = jnp.dot(w2_ref[...], out_all,
                      preferred_element_type=jnp.float32) + b2_ref[...]
        o_ref[b] = res.astype(o_ref.dtype)


def _pick_bt(B, C, N, itemsize=2, max_bt=8, max_block_bytes=4 << 20):
    """Largest divisor of B (<= max_bt) whose input block stays small."""
    bt = 1
    for cand in range(1, min(B, max_bt) + 1):
        if B % cand == 0 and cand * C * N * itemsize <= max_block_bytes:
            bt = cand
    return bt


def s2_attention_pallas(x_nchw, params, *, out_dtype=jnp.bfloat16):
    B, C, W, H = x_nchw.shape
    assert C % 32 == 0, "C must be divisible by 32 (channel quarters, tiling)"
    N = W * H
    mlp1_w, mlp1_b, sa1_w, sa2_w, mlp2_w, mlp2_b = params

    # NCHW -> (B, C, N): pure reshape, no transpose. Activations travel
    # HBM<->VMEM in bf16 (kernel is HBM-bound at small shapes).
    x = x_nchw.reshape(B, C, N)
    if x.dtype != jnp.bfloat16:
        x = x.astype(jnp.bfloat16)

    # Native PyTorch weight matrices (y = W @ x_col). Matmul weights in bf16;
    # biases stay f32 (added to the f32 accumulators).
    w1 = mlp1_w.astype(jnp.bfloat16)                   # (3C, C)
    b1 = mlp1_b.reshape(3 * C, 1).astype(jnp.float32)
    wa1 = sa1_w.astype(jnp.bfloat16)                   # (C, C)
    wa2 = sa2_w.astype(jnp.bfloat16)                   # (3C, C)
    w2 = mlp2_w.astype(jnp.bfloat16)                   # (C, C)
    b2 = mlp2_b.reshape(C, 1).astype(jnp.float32)

    Bt = _pick_bt(B, C, N)
    grid = (B // Bt,)

    param_bytes = (w1.size * 2 + b1.size * 4 + wa1.size * 2 + wa2.size * 2
                   + w2.size * 2 + b2.size * 4)

    # VMEM budget: double-buffered bf16 in/out blocks + params + live f32
    # intermediates (y, shifted quarters, combine) for the batch in flight,
    # clamped to ~85% of this generation's physical VMEM.
    blk_io = 2 * (2 * Bt * C * N * 2)
    live = 10 * C * N * 4
    needed = int((blk_io + 2 * param_bytes + live) * 1.3) + (4 << 20)
    try:
        vmem_cap = int(pltpu.get_tpu_info().vmem_capacity_bytes)
    except Exception:
        vmem_cap = 64 << 20
    vmem_limit = min(max(needed, 32 << 20), int(vmem_cap * 0.85))

    # Advisory cost estimate so XLA schedules surrounding ops sensibly.
    flops_per_batch = (2 * (3 * C) * C * N      # mlp1
                       + 2 * C * C * N          # mlp2
                       + 2 * C * C + 2 * (3 * C) * C   # split-attn matvecs
                       + 12 * C * N)            # shifts / sum / combine
    cost = pl.CostEstimate(
        flops=int(B * flops_per_batch),
        transcendentals=int(B * 4 * C),          # erf + 3 exp per channel
        bytes_accessed=int(x.size * 2 + B * C * N * 2 + param_bytes))

    kernel = partial(_s2_kernel, W=W, H=H, C=C, Bt=Bt)
    out = pl.pallas_call(
        kernel,
        out_shape=jax.ShapeDtypeStruct((B, C, N), jnp.bfloat16),
        grid=grid,
        in_specs=[
            pl.BlockSpec((Bt, C, N), lambda i: (i, 0, 0)),   # x (bf16)
            pl.BlockSpec((3 * C, C), lambda i: (0, 0)),      # mlp1 weight (fused)
            pl.BlockSpec((3 * C, 1), lambda i: (0, 0)),      # mlp1 bias
            pl.BlockSpec((C, C), lambda i: (0, 0)),          # split-attn mlp1 w
            pl.BlockSpec((3 * C, C), lambda i: (0, 0)),      # split-attn mlp2 w (fused)
            pl.BlockSpec((C, C), lambda i: (0, 0)),          # mlp2 weight
            pl.BlockSpec((C, 1), lambda i: (0, 0)),          # mlp2 bias
        ],
        out_specs=pl.BlockSpec((Bt, C, N), lambda i: (i, 0, 0)),
        compiler_params=pltpu.CompilerParams(
            dimension_semantics=("parallel",),
            vmem_limit_bytes=vmem_limit),
        cost_estimate=cost,
    )(x, w1, b1, wa1, wa2, w2, b2)

    # (B, C, N) is already NCHW-flattened: pure reshape back, no transpose.
    out = out.reshape(B, C, W, H)
    if out.dtype != out_dtype:
        out = out.astype(out_dtype)
    return out


# ------------------------- pure-JAX reference ------------------------------
def _spatial_shift1_ref(x):
    _, _, _, C = x.shape
    q = C // 4
    g0 = jnp.concatenate([x[:, :1, :, :q], x[:, :-1, :, :q]], axis=1)
    g1 = jnp.concatenate([x[:, 1:, :, q:2 * q], x[:, -1:, :, q:2 * q]], axis=1)
    g2 = jnp.concatenate([x[:, :, :1, 2 * q:3 * q], x[:, :, :-1, 2 * q:3 * q]], axis=2)
    g3 = jnp.concatenate([x[:, :, 1:, 3 * q:], x[:, :, -1:, 3 * q:]], axis=2)
    return jnp.concatenate([g0, g1, g2, g3], axis=-1)


def _spatial_shift2_ref(x):
    _, _, _, C = x.shape
    q = C // 4
    g0 = jnp.concatenate([x[:, :, :1, :q], x[:, :, :-1, :q]], axis=2)
    g1 = jnp.concatenate([x[:, :, 1:, q:2 * q], x[:, :, -1:, q:2 * q]], axis=2)
    g2 = jnp.concatenate([x[:, :1, :, 2 * q:3 * q], x[:, :-1, :, 2 * q:3 * q]], axis=1)
    g3 = jnp.concatenate([x[:, 1:, :, 3 * q:], x[:, -1:, :, 3 * q:]], axis=1)
    return jnp.concatenate([g0, g1, g2, g3], axis=-1)


def s2_attention_ref(x_nchw, params):
    mlp1_w, mlp1_b, sa1_w, sa2_w, mlp2_w, mlp2_b = params
    B, C, W, H = x_nchw.shape
    x = jnp.transpose(x_nchw, (0, 2, 3, 1))                 # (B, W, H, C)
    y = x @ mlp1_w.T + mlp1_b                               # (B, W, H, 3C)
    x1 = _spatial_shift1_ref(y[..., :C])
    x2 = _spatial_shift2_ref(y[..., C:2 * C])
    x3 = y[..., 2 * C:]
    x_all = jnp.stack([x1, x2, x3], 1).reshape(B, 3, W * H, C)
    a = x_all.sum(1).sum(1)                                 # (B, C)
    g = _gelu_exact(a @ sa1_w.T)
    hat = (g @ sa2_w.T).reshape(B, 3, C)
    bar = jax.nn.softmax(hat, axis=1)
    out = (bar[:, :, None, :] * x_all).sum(1).reshape(B, W, H, C)
    out = out @ mlp2_w.T + mlp2_b
    return jnp.transpose(out, (0, 3, 1, 2))


# ---------------------------------------------------------------------------
if __name__ == "__main__":
    # Small but hardware-friendly shapes: N = W*H = 128 lanes, C = 128 (q = 32),
    # W != H to exercise the asymmetric shift handling; B = 2 exercises the
    # multi-batch block packing (Bt = 2, one grid step).
    B, C, W, H = 2, 128, 16, 8
    key = jax.random.PRNGKey(0)
    kx, k1, k2, k3, k4, k5, k6 = jax.random.split(key, 7)

    x = jax.random.normal(kx, (B, C, W, H), jnp.float32)

    # PyTorch-style parameter shapes (deterministic synthetic init):
    mlp1_w = jax.random.normal(k1, (3 * C, C), jnp.float32) * 0.05   # Linear(C, 3C).weight
    mlp1_b = jax.random.normal(k2, (3 * C,), jnp.float32) * 0.05     # Linear(C, 3C).bias
    sa1_w = jax.random.normal(k3, (C, C), jnp.float32) * 0.05        # SplitAttention.mlp1.weight
    sa2_w = jax.random.normal(k4, (3 * C, C), jnp.float32) * 0.05    # SplitAttention.mlp2.weight
    mlp2_w = jax.random.normal(k5, (C, C), jnp.float32) * 0.05       # Linear(C, C).weight
    mlp2_b = jax.random.normal(k6, (C,), jnp.float32) * 0.05         # Linear(C, C).bias
    params = (mlp1_w, mlp1_b, sa1_w, sa2_w, mlp2_w, mlp2_b)

    out = jax.block_until_ready(s2_attention_pallas(x, params))
    ref = jax.block_until_ready(s2_attention_ref(x, params))

    assert out.shape == (B, C, W, H), out.shape
    # Activations, weights and the kernel output are bf16 (f32 MXU accumulation),
    # so compare against the f32 reference with a bf16-appropriate tolerance;
    # a logic error (wrong shift direction / quarter / branch weight) would be
    # O(0.1) and still be caught.
    out_f32 = out.astype(jnp.float32)
    if not jnp.allclose(out_f32, ref, rtol=4e-2, atol=4e-2):
        raise AssertionError(
            f"mismatch: max abs err {float(jnp.max(jnp.abs(out_f32 - ref)))}")
    print("KERNEL_OK")
</pallas_src>

<mosaic_0001>
module attributes {stable_mosaic.version = 11 : i64} {
  func.func @_s2_kernel(%arg0: i32, %arg1: memref<2x128x128xbf16, #tpu.memory_space<vmem>>, %arg2: memref<384x128xbf16, #tpu.memory_space<vmem>>, %arg3: memref<384x1xf32, #tpu.memory_space<vmem>>, %arg4: memref<128x128xbf16, #tpu.memory_space<vmem>>, %arg5: memref<384x128xbf16, #tpu.memory_space<vmem>>, %arg6: memref<128x128xbf16, #tpu.memory_space<vmem>>, %arg7: memref<128x1xf32, #tpu.memory_space<vmem>>, %arg8: memref<2x128x128xbf16, #tpu.memory_space<vmem>>) attributes {dimension_semantics = [#tpu.dimension_semantics<parallel>], iteration_bounds = array<i64: 1>, scalar_prefetch = 0 : i64, scratch_operands = 0 : i64, tpu.core_type = #tpu.core_type<tc>, window_params = [{transform_indices = @transform_0, window_bounds = array<i64: 2, 128, 128>}, {pipeline_mode = #tpu.pipeline_mode<synchronous>, transform_indices = @transform_1, window_bounds = array<i64: 384, 128>}, {pipeline_mode = #tpu.pipeline_mode<synchronous>, transform_indices = @transform_2, window_bounds = array<i64: 384, 1>}, {pipeline_mode = #tpu.pipeline_mode<synchronous>, transform_indices = @transform_3, window_bounds = array<i64: 128, 128>}, {pipeline_mode = #tpu.pipeline_mode<synchronous>, transform_indices = @transform_4, window_bounds = array<i64: 384, 128>}, {pipeline_mode = #tpu.pipeline_mode<synchronous>, transform_indices = @transform_5, window_bounds = array<i64: 128, 128>}, {pipeline_mode = #tpu.pipeline_mode<synchronous>, transform_indices = @transform_6, window_bounds = array<i64: 128, 1>}, {transform_indices = @transform_7, window_bounds = array<i64: 2, 128, 128>}]} {
    %0 = tpu.iota {dimensions = array<i32: 1>} : vector<1x128xi32>
    %c8_i32 = arith.constant 8 : i32
    %c0_i32 = arith.constant 0 : i32
    %1 = arith.cmpi eq, %c8_i32, %c0_i32 : i32
    %c1_i32 = arith.constant 1 : i32
    %2 = arith.select %1, %c1_i32, %c8_i32 : i32
    %3 = vector.broadcast %2 : i32 to vector<1x128xi32>
    %4 = arith.remsi %0, %3 : vector<1x128xi32>
    %c0_i32_0 = arith.constant 0 : i32
    %5 = vector.broadcast %c0_i32_0 : i32 to vector<1x128xi32>
    %6 = arith.cmpi ne, %4, %5 : vector<1x128xi32>
    %c0_i32_1 = arith.constant 0 : i32
    %7 = vector.broadcast %c0_i32_1 : i32 to vector<1x128xi32>
    %8 = arith.cmpi slt, %4, %7 : vector<1x128xi32>
    %c0_i32_2 = arith.constant 0 : i32
    %9 = arith.cmpi slt, %2, %c0_i32_2 : i32
    %10 = vector.broadcast %9 : i1 to vector<1x128xi1>
    %11 = vector.broadcast %10 : vector<1x128xi1> to vector<1x128xi1>
    %12 = arith.xori %8, %11 : vector<1x128xi1>
    %13 = arith.andi %12, %6 : vector<1x128xi1>
    %14 = vector.broadcast %2 : i32 to vector<1x128xi32>
    %15 = arith.addi %4, %14 : vector<1x128xi32>
    %16 = arith.select %13, %15, %4 : vector<1x128xi1>, vector<1x128xi32>
    %c8_i32_3 = arith.constant 8 : i32
    %17 = vector.broadcast %c8_i32_3 : i32 to vector<1x128xi32>
    %18 = arith.cmpi slt, %0, %17 : vector<1x128xi32>
    %c120_i32 = arith.constant 120 : i32
    %19 = vector.broadcast %c120_i32 : i32 to vector<1x128xi32>
    %20 = arith.cmpi sge, %0, %19 : vector<1x128xi32>
    %c0_i32_4 = arith.constant 0 : i32
    %21 = vector.broadcast %c0_i32_4 : i32 to vector<1x128xi32>
    %22 = arith.cmpi eq, %16, %21 : vector<1x128xi32>
    %c7_i32 = arith.constant 7 : i32
    %23 = vector.broadcast %c7_i32 : i32 to vector<1x128xi32>
    %24 = arith.cmpi eq, %16, %23 : vector<1x128xi32>
    %c0 = arith.constant 0 : index
    %c0_5 = arith.constant 0 : index
    %c0_6 = arith.constant 0 : index
    %25 = vector.load %arg1[%c0, %c0_5, %c0_6] : memref<2x128x128xbf16, #tpu.memory_space<vmem>>, vector<1x128x128xbf16>
    %26 = vector.shape_cast %25 : vector<1x128x128xbf16> to vector<128x128xbf16>
    %c0_7 = arith.constant 0 : index
    %c0_8 = arith.constant 0 : index
    %27 = vector.load %arg2[%c0_7, %c0_8] : memref<384x128xbf16, #tpu.memory_space<vmem>>, vector<384x128xbf16>
    %cst = arith.constant dense<0.000000e+00> : vector<384x128xf32>
    %28 = tpu.matmul %27, %26, %cst {dimension_numbers = #tpu.dot_dimension_numbers<[1], [0], [0], [1], [0, 0, 1, 1], [], []>} : vector<384x128xbf16>, vector<128x128xbf16>, vector<384x128xf32> -> vector<384x128xf32>
    %c0_9 = arith.constant 0 : index
    %c0_10 = arith.constant 0 : index
    %29 = vector.load %arg3[%c0_9, %c0_10] : memref<384x1xf32, #tpu.memory_space<vmem>>, vector<384x1xf32>
    %30 = vector.broadcast %29 : vector<384x1xf32> to vector<384x128xf32>
    %31 = arith.addf %28, %30 : vector<384x128xf32>
    %32 = vector.extract_strided_slice %31 {offsets = [0, 0], sizes = [32, 128], strides = [1, 1]} : vector<384x128xf32> to vector<32x128xf32>
    %33 = vector.extract_strided_slice %31 {offsets = [128, 0], sizes = [32, 128], strides = [1, 1]} : vector<384x128xf32> to vector<32x128xf32>
    %34 = vector.extract_strided_slice %31 {offsets = [256, 0], sizes = [32, 128], strides = [1, 1]} : vector<384x128xf32> to vector<32x128xf32>
    %c8_i32_11 = arith.constant 8 : i32
    %35 = tpu.dynamic_rotate %32 by %c8_i32_11 dim 1 : vector<32x128xf32>, i32 -> vector<32x128xf32>
    %36 = vector.shape_cast %18 : vector<1x128xi1> to vector<1x128xi1>
    %37 = vector.broadcast %36 : vector<1x128xi1> to vector<32x128xi1>
    %38 = arith.select %37, %32, %35 : vector<32x128xi1>, vector<32x128xf32>
    %c1_i32_12 = arith.constant 1 : i32
    %39 = tpu.dynamic_rotate %33 by %c1_i32_12 dim 1 : vector<32x128xf32>, i32 -> vector<32x128xf32>
    %40 = vector.shape_cast %22 : vector<1x128xi1> to vector<1x128xi1>
    %41 = vector.broadcast %40 : vector<1x128xi1> to vector<32x128xi1>
    %42 = arith.select %41, %33, %39 : vector<32x128xi1>, vector<32x128xf32>
    %43 = arith.addf %38, %42 : vector<32x128xf32>
    %44 = arith.addf %43, %34 : vector<32x128xf32>
    %cst_13 = arith.constant dense<0.000000e+00> : vector<32xf32>
    %45 = vector.multi_reduction <add>, %44, %cst_13 [1] : vector<32x128xf32> to vector<32xf32>
    %46 = vector.shape_cast %45 : vector<32xf32> to vector<32x1xf32>
    %47 = vector.extract_strided_slice %31 {offsets = [32, 0], sizes = [32, 128], strides = [1, 1]} : vector<384x128xf32> to vector<32x128xf32>
    %48 = vector.extract_strided_slice %31 {offsets = [160, 0], sizes = [32, 128], strides = [1, 1]} : vector<384x128xf32> to vector<32x128xf32>
    %49 = vector.extract_strided_slice %31 {offsets = [288, 0], sizes = [32, 128], strides = [1, 1]} : vector<384x128xf32> to vector<32x128xf32>
    %c120_i32_14 = arith.constant 120 : i32
    %50 = tpu.dynamic_rotate %47 by %c120_i32_14 dim 1 : vector<32x128xf32>, i32 -> vector<32x128xf32>
    %51 = vector.shape_cast %20 : vector<1x128xi1> to vector<1x128xi1>
    %52 = vector.broadcast %51 : vector<1x128xi1> to vector<32x128xi1>
    %53 = arith.select %52, %47, %50 : vector<32x128xi1>, vector<32x128xf32>
    %c127_i32 = arith.constant 127 : i32
    %54 = tpu.dynamic_rotate %48 by %c127_i32 dim 1 : vector<32x128xf32>, i32 -> vector<32x128xf32>
    %55 = vector.shape_cast %24 : vector<1x128xi1> to vector<1x128xi1>
    %56 = vector.broadcast %55 : vector<1x128xi1> to vector<32x128xi1>
    %57 = arith.select %56, %48, %54 : vector<32x128xi1>, vector<32x128xf32>
    %58 = arith.addf %53, %57 : vector<32x128xf32>
    %59 = arith.addf %58, %49 : vector<32x128xf32>
    %cst_15 = arith.constant dense<0.000000e+00> : vector<32xf32>
    %60 = vector.multi_reduction <add>, %59, %cst_15 [1] : vector<32x128xf32> to vector<32xf32>
    %61 = vector.shape_cast %60 : vector<32xf32> to vector<32x1xf32>
    %62 = vector.extract_strided_slice %31 {offsets = [64, 0], sizes = [32, 128], strides = [1, 1]} : vector<384x128xf32> to vector<32x128xf32>
    %63 = vector.extract_strided_slice %31 {offsets = [192, 0], sizes = [32, 128], strides = [1, 1]} : vector<384x128xf32> to vector<32x128xf32>
    %64 = vector.extract_strided_slice %31 {offsets = [320, 0], sizes = [32, 128], strides = [1, 1]} : vector<384x128xf32> to vector<32x128xf32>
    %c1_i32_16 = arith.constant 1 : i32
    %65 = tpu.dynamic_rotate %62 by %c1_i32_16 dim 1 : vector<32x128xf32>, i32 -> vector<32x128xf32>
    %66 = vector.shape_cast %22 : vector<1x128xi1> to vector<1x128xi1>
    %67 = vector.broadcast %66 : vector<1x128xi1> to vector<32x128xi1>
    %68 = arith.select %67, %62, %65 : vector<32x128xi1>, vector<32x128xf32>
    %c8_i32_17 = arith.constant 8 : i32
    %69 = tpu.dynamic_rotate %63 by %c8_i32_17 dim 1 : vector<32x128xf32>, i32 -> vector<32x128xf32>
    %70 = vector.shape_cast %18 : vector<1x128xi1> to vector<1x128xi1>
    %71 = vector.broadcast %70 : vector<1x128xi1> to vector<32x128xi1>
    %72 = arith.select %71, %63, %69 : vector<32x128xi1>, vector<32x128xf32>
    %73 = arith.addf %68, %72 : vector<32x128xf32>
    %74 = arith.addf %73, %64 : vector<32x128xf32>
    %cst_18 = arith.constant dense<0.000000e+00> : vector<32xf32>
    %75 = vector.multi_reduction <add>, %74, %cst_18 [1] : vector<32x128xf32> to vector<32xf32>
    %76 = vector.shape_cast %75 : vector<32xf32> to vector<32x1xf32>
    %77 = vector.extract_strided_slice %31 {offsets = [96, 0], sizes = [32, 128], strides = [1, 1]} : vector<384x128xf32> to vector<32x128xf32>
    %78 = vector.extract_strided_slice %31 {offsets = [224, 0], sizes = [32, 128], strides = [1, 1]} : vector<384x128xf32> to vector<32x128xf32>
    %79 = vector.extract_strided_slice %31 {offsets = [352, 0], sizes = [32, 128], strides = [1, 1]} : vector<384x128xf32> to vector<32x128xf32>
    %c127_i32_19 = arith.constant 127 : i32
    %80 = tpu.dynamic_rotate %77 by %c127_i32_19 dim 1 : vector<32x128xf32>, i32 -> vector<32x128xf32>
    %81 = vector.shape_cast %24 : vector<1x128xi1> to vector<1x128xi1>
    %82 = vector.broadcast %81 : vector<1x128xi1> to vector<32x128xi1>
    %83 = arith.select %82, %77, %80 : vector<32x128xi1>, vector<32x128xf32>
    %c120_i32_20 = arith.constant 120 : i32
    %84 = tpu.dynamic_rotate %78 by %c120_i32_20 dim 1 : vector<32x128xf32>, i32 -> vector<32x128xf32>
    %85 = vector.shape_cast %20 : vector<1x128xi1> to vector<1x128xi1>
    %86 = vector.broadcast %85 : vector<1x128xi1> to vector<32x128xi1>
    %87 = arith.select %86, %78, %84 : vector<32x128xi1>, vector<32x128xf32>
    %88 = arith.addf %83, %87 : vector<32x128xf32>
    %89 = arith.addf %88, %79 : vector<32x128xf32>
    %cst_21 = arith.constant dense<0.000000e+00> : vector<32xf32>
    %90 = vector.multi_reduction <add>, %89, %cst_21 [1] : vector<32x128xf32> to vector<32xf32>
    %91 = vector.shape_cast %90 : vector<32xf32> to vector<32x1xf32>
    %92 = tpu.concatenate %46, %61, %76, %91 in 0 : vector<32x1xf32>, vector<32x1xf32>, vector<32x1xf32>, vector<32x1xf32> -> vector<128x1xf32>
    %c0_22 = arith.constant 0 : index
    %c0_23 = arith.constant 0 : index
    %93 = vector.load %arg4[%c0_22, %c0_23] : memref<128x128xbf16, #tpu.memory_space<vmem>>, vector<128x128xbf16>
    %94 = arith.truncf %92 : vector<128x1xf32> to vector<128x1xbf16>
    %cst_24 = arith.constant dense<0.000000e+00> : vector<128x1xf32>
    %95 = tpu.matmul %93, %94, %cst_24 {dimension_numbers = #tpu.dot_dimension_numbers<[1], [0], [0], [1], [0, 0, 1, 1], [], []>} : vector<128x128xbf16>, vector<128x1xbf16>, vector<128x1xf32> -> vector<128x1xf32>
    %cst_25 = arith.constant 5.000000e-01 : f32
    %96 = vector.broadcast %cst_25 : f32 to vector<128x1xf32>
    %97 = arith.mulf %96, %95 : vector<128x1xf32>
    %cst_26 = arith.constant 0.707106769 : f32
    %98 = vector.broadcast %cst_26 : f32 to vector<128x1xf32>
    %99 = arith.mulf %95, %98 : vector<128x1xf32>
    %100 = math.erf %99 : vector<128x1xf32>
    %cst_27 = arith.constant 1.000000e+00 : f32
    %101 = vector.broadcast %cst_27 : f32 to vector<128x1xf32>
    %102 = arith.addf %101, %100 : vector<128x1xf32>
    %103 = arith.mulf %97, %102 : vector<128x1xf32>
    %c0_28 = arith.constant 0 : index
    %c0_29 = arith.constant 0 : index
    %104 = vector.load %arg5[%c0_28, %c0_29] : memref<384x128xbf16, #tpu.memory_space<vmem>>, vector<384x128xbf16>
    %105 = arith.truncf %103 : vector<128x1xf32> to vector<128x1xbf16>
    %cst_30 = arith.constant dense<0.000000e+00> : vector<384x1xf32>
    %106 = tpu.matmul %104, %105, %cst_30 {dimension_numbers = #tpu.dot_dimension_numbers<[1], [0], [0], [1], [0, 0, 1, 1], [], []>} : vector<384x128xbf16>, vector<128x1xbf16>, vector<384x1xf32> -> vector<384x1xf32>
    %107 = vector.extract_strided_slice %106 {offsets = [0, 0], sizes = [128, 1], strides = [1, 1]} : vector<384x1xf32> to vector<128x1xf32>
    %108 = vector.extract_strided_slice %106 {offsets = [128, 0], sizes = [128, 1], strides = [1, 1]} : vector<384x1xf32> to vector<128x1xf32>
    %109 = vector.extract_strided_slice %106 {offsets = [256, 0], sizes = [128, 1], strides = [1, 1]} : vector<384x1xf32> to vector<128x1xf32>
    %110 = arith.maximumf %107, %108 : vector<128x1xf32>
    %111 = arith.maximumf %110, %109 : vector<128x1xf32>
    %112 = arith.subf %107, %111 : vector<128x1xf32>
    %113 = math.exp %112 : vector<128x1xf32>
    %114 = arith.subf %108, %111 : vector<128x1xf32>
    %115 = math.exp %114 : vector<128x1xf32>
    %116 = arith.subf %109, %111 : vector<128x1xf32>
    %117 = math.exp %116 : vector<128x1xf32>
    %118 = arith.addf %113, %115 : vector<128x1xf32>
    %119 = arith.addf %118, %117 : vector<128x1xf32>
    %cst_31 = arith.constant 1.000000e+00 : f32
    %120 = vector.broadcast %cst_31 : f32 to vector<128x1xf32>
    %121 = arith.divf %120, %119 : vector<128x1xf32>
    %122 = arith.mulf %113, %121 : vector<128x1xf32>
    %123 = arith.mulf %115, %121 : vector<128x1xf32>
    %124 = arith.mulf %117, %121 : vector<128x1xf32>
    %125 = vector.extract_strided_slice %122 {offsets = [0, 0], sizes = [32, 1], strides = [1, 1]} : vector<128x1xf32> to vector<32x1xf32>
    %126 = vector.broadcast %125 : vector<32x1xf32> to vector<32x128xf32>
    %127 = arith.mulf %126, %38 : vector<32x128xf32>
    %128 = vector.extract_strided_slice %123 {offsets = [0, 0], sizes = [32, 1], strides = [1, 1]} : vector<128x1xf32> to vector<32x1xf32>
    %129 = vector.broadcast %128 : vector<32x1xf32> to vector<32x128xf32>
    %130 = arith.mulf %129, %42 : vector<32x128xf32>
    %131 = arith.addf %127, %130 : vector<32x128xf32>
    %132 = vector.extract_strided_slice %124 {offsets = [0, 0], sizes = [32, 1], strides = [1, 1]} : vector<128x1xf32> to vector<32x1xf32>
    %133 = vector.broadcast %132 : vector<32x1xf32> to vector<32x128xf32>
    %134 = arith.mulf %133, %34 : vector<32x128xf32>
    %135 = arith.addf %131, %134 : vector<32x128xf32>
    %136 = arith.truncf %135 : vector<32x128xf32> to vector<32x128xbf16>
    %137 = vector.extract_strided_slice %122 {offsets = [32, 0], sizes = [32, 1], strides = [1, 1]} : vector<128x1xf32> to vector<32x1xf32>
    %138 = vector.broadcast %137 : vector<32x1xf32> to vector<32x128xf32>
    %139 = arith.mulf %138, %53 : vector<32x128xf32>
    %140 = vector.extract_strided_slice %123 {offsets = [32, 0], sizes = [32, 1], strides = [1, 1]} : vector<128x1xf32> to vector<32x1xf32>
    %141 = vector.broadcast %140 : vector<32x1xf32> to vector<32x128xf32>
    %142 = arith.mulf %141, %57 : vector<32x128xf32>
    %143 = arith.addf %139, %142 : vector<32x128xf32>
    %144 = vector.extract_strided_slice %124 {offsets = [32, 0], sizes = [32, 1], strides = [1, 1]} : vector<128x1xf32> to vector<32x1xf32>
    %145 = vector.broadcast %144 : vector<32x1xf32> to vector<32x128xf32>
    %146 = arith.mulf %145, %49 : vector<32x128xf32>
    %147 = arith.addf %143, %146 : vector<32x128xf32>
    %148 = arith.truncf %147 : vector<32x128xf32> to vector<32x128xbf16>
    %149 = vector.extract_strided_slice %122 {offsets = [64, 0], sizes = [32, 1], strides = [1, 1]} : vector<128x1xf32> to vector<32x1xf32>
    %150 = vector.broadcast %149 : vector<32x1xf32> to vector<32x128xf32>
    %151 = arith.mulf %150, %68 : vector<32x128xf32>
    %152 = vector.extract_strided_slice %123 {offsets = [64, 0], sizes = [32, 1], strides = [1, 1]} : vector<128x1xf32> to vector<32x1xf32>
    %153 = vector.broadcast %152 : vector<32x1xf32> to vector<32x128xf32>
    %154 = arith.mulf %153, %72 : vector<32x128xf32>
    %155 = arith.addf %151, %154 : vector<32x128xf32>
    %156 = vector.extract_strided_slice %124 {offsets = [64, 0], sizes = [32, 1], strides = [1, 1]} : vector<128x1xf32> to vector<32x1xf32>
    %157 = vector.broadcast %156 : vector<32x1xf32> to vector<32x128xf32>
    %158 = arith.mulf %157, %64 : vector<32x128xf32>
    %159 = arith.addf %155, %158 : vector<32x128xf32>
    %160 = arith.truncf %159 : vector<32x128xf32> to vector<32x128xbf16>
    %161 = vector.extract_strided_slice %122 {offsets = [96, 0], sizes = [32, 1], strides = [1, 1]} : vector<128x1xf32> to vector<32x1xf32>
    %162 = vector.broadcast %161 : vector<32x1xf32> to vector<32x128xf32>
    %163 = arith.mulf %162, %83 : vector<32x128xf32>
    %164 = vector.extract_strided_slice %123 {offsets = [96, 0], sizes = [32, 1], strides = [1, 1]} : vector<128x1xf32> to vector<32x1xf32>
    %165 = vector.broadcast %164 : vector<32x1xf32> to vector<32x128xf32>
    %166 = arith.mulf %165, %87 : vector<32x128xf32>
    %167 = arith.addf %163, %166 : vector<32x128xf32>
    %168 = vector.extract_strided_slice %124 {offsets = [96, 0], sizes = [32, 1], strides = [1, 1]} : vector<128x1xf32> to vector<32x1xf32>
    %169 = vector.broadcast %168 : vector<32x1xf32> to vector<32x128xf32>
    %170 = arith.mulf %169, %79 : vector<32x128xf32>
    %171 = arith.addf %167, %170 : vector<32x128xf32>
    %172 = arith.truncf %171 : vector<32x128xf32> to vector<32x128xbf16>
    %173 = tpu.concatenate %136, %148, %160, %172 in 0 : vector<32x128xbf16>, vector<32x128xbf16>, vector<32x128xbf16>, vector<32x128xbf16> -> vector<128x128xbf16>
    %c0_32 = arith.constant 0 : index
    %c0_33 = arith.constant 0 : index
    %174 = vector.load %arg6[%c0_32, %c0_33] : memref<128x128xbf16, #tpu.memory_space<vmem>>, vector<128x128xbf16>
    %cst_34 = arith.constant dense<0.000000e+00> : vector<128x128xf32>
    %175 = tpu.matmul %174, %173, %cst_34 {dimension_numbers = #tpu.dot_dimension_numbers<[1], [0], [0], [1], [0, 0, 1, 1], [], []>} : vector<128x128xbf16>, vector<128x128xbf16>, vector<128x128xf32> -> vector<128x128xf32>
    %c0_35 = arith.constant 0 : index
    %c0_36 = arith.constant 0 : index
    %176 = vector.load %arg7[%c0_35, %c0_36] : memref<128x1xf32, #tpu.memory_space<vmem>>, vector<128x1xf32>
    %177 = vector.broadcast %176 : vector<128x1xf32> to vector<128x128xf32>
    %178 = arith.addf %175, %177 : vector<128x128xf32>
    %179 = arith.truncf %178 : vector<128x128xf32> to vector<128x128xbf16>
    %c0_37 = arith.constant 0 : index
    %c0_38 = arith.constant 0 : index
    %c0_39 = arith.constant 0 : index
    %180 = vector.load %arg8[%c0_37, %c0_38, %c0_39] : memref<2x128x128xbf16, #tpu.memory_space<vmem>>, vector<1x128x128xbf16>
    %181 = vector.shape_cast %180 : vector<1x128x128xbf16> to vector<128x128xbf16>
    %182 = vector.shape_cast %179 : vector<128x128xbf16> to vector<1x128x128xbf16>
    tpu.vector_store %arg8[%c0_37, %c0_38, %c0_39], %182 {strides = array<i32>} : memref<2x128x128xbf16, #tpu.memory_space<vmem>>, vector<1x128x128xbf16>,
    %c1 = arith.constant 1 : index
    %c0_40 = arith.constant 0 : index
    %c0_41 = arith.constant 0 : index
    %183 = vector.load %arg1[%c1, %c0_40, %c0_41] : memref<2x128x128xbf16, #tpu.memory_space<vmem>>, vector<1x128x128xbf16>
    %184 = vector.shape_cast %183 : vector<1x128x128xbf16> to vector<128x128xbf16>
    %c0_42 = arith.constant 0 : index
    %c0_43 = arith.constant 0 : index
    %185 = vector.load %arg2[%c0_42, %c0_43] : memref<384x128xbf16, #tpu.memory_space<vmem>>, vector<384x128xbf16>
    %cst_44 = arith.constant dense<0.000000e+00> : vector<384x128xf32>
    %186 = tpu.matmul %185, %184, %cst_44 {dimension_numbers = #tpu.dot_dimension_numbers<[1], [0], [0], [1], [0, 0, 1, 1], [], []>} : vector<384x128xbf16>, vector<128x128xbf16>, vector<384x128xf32> -> vector<384x128xf32>
    %c0_45 = arith.constant 0 : index
    %c0_46 = arith.constant 0 : index
    %187 = vector.load %arg3[%c0_45, %c0_46] : memref<384x1xf32, #tpu.memory_space<vmem>>, vector<384x1xf32>
    %188 = vector.broadcast %187 : vector<384x1xf32> to vector<384x128xf32>
    %189 = arith.addf %186, %188 : vector<384x128xf32>
    %190 = vector.extract_strided_slice %189 {offsets = [0, 0], sizes = [32, 128], strides = [1, 1]} : vector<384x128xf32> to vector<32x128xf32>
    %191 = vector.extract_strided_slice %189 {offsets = [128, 0], sizes = [32, 128], strides = [1, 1]} : vector<384x128xf32> to vector<32x128xf32>
    %192 = vector.extract_strided_slice %189 {offsets = [256, 0], sizes = [32, 128], strides = [1, 1]} : vector<384x128xf32> to vector<32x128xf32>
    %c8_i32_47 = arith.constant 8 : i32
    %193 = tpu.dynamic_rotate %190 by %c8_i32_47 dim 1 : vector<32x128xf32>, i32 -> vector<32x128xf32>
    %194 = vector.shape_cast %18 : vector<1x128xi1> to vector<1x128xi1>
    %195 = vector.broadcast %194 : vector<1x128xi1> to vector<32x128xi1>
    %196 = arith.select %195, %190, %193 : vector<32x128xi1>, vector<32x128xf32>
    %c1_i32_48 = arith.constant 1 : i32
    %197 = tpu.dynamic_rotate %191 by %c1_i32_48 dim 1 : vector<32x128xf32>, i32 -> vector<32x128xf32>
    %198 = vector.shape_cast %22 : vector<1x128xi1> to vector<1x128xi1>
    %199 = vector.broadcast %198 : vector<1x128xi1> to vector<32x128xi1>
    %200 = arith.select %199, %191, %197 : vector<32x128xi1>, vector<32x128xf32>
    %201 = arith.addf %196, %200 : vector<32x128xf32>
    %202 = arith.addf %201, %192 : vector<32x128xf32>
    %cst_49 = arith.constant dense<0.000000e+00> : vector<32xf32>
    %203 = vector.multi_reduction <add>, %202, %cst_49 [1] : vector<32x128xf32> to vector<32xf32>
    %204 = vector.shape_cast %203 : vector<32xf32> to vector<32x1xf32>
    %205 = vector.extract_strided_slice %189 {offsets = [32, 0], sizes = [32, 128], strides = [1, 1]} : vector<384x128xf32> to vector<32x128xf32>
    %206 = vector.extract_strided_slice %189 {offsets = [160, 0], sizes = [32, 128], strides = [1, 1]} : vector<384x128xf32> to vector<32x128xf32>
    %207 = vector.extract_strided_slice %189 {offsets = [288, 0], sizes = [32, 128], strides = [1, 1]} : vector<384x128xf32> to vector<32x128xf32>
    %c120_i32_50 = arith.constant 120 : i32
    %208 = tpu.dynamic_rotate %205 by %c120_i32_50 dim 1 : vector<32x128xf32>, i32 -> vector<32x128xf32>
    %209 = vector.shape_cast %20 : vector<1x128xi1> to vector<1x128xi1>
    %210 = vector.broadcast %209 : vector<1x128xi1> to vector<32x128xi1>
    %211 = arith.select %210, %205, %208 : vector<32x128xi1>, vector<32x128xf32>
    %c127_i32_51 = arith.constant 127 : i32
    %212 = tpu.dynamic_rotate %206 by %c127_i32_51 dim 1 : vector<32x128xf32>, i32 -> vector<32x128xf32>
    %213 = vector.shape_cast %24 : vector<1x128xi1> to vector<1x128xi1>
    %214 = vector.broadcast %213 : vector<1x128xi1> to vector<32x128xi1>
    %215 = arith.select %214, %206, %212 : vector<32x128xi1>, vector<32x128xf32>
    %216 = arith.addf %211, %215 : vector<32x128xf32>
    %217 = arith.addf %216, %207 : vector<32x128xf32>
    %cst_52 = arith.constant dense<0.000000e+00> : vector<32xf32>
    %218 = vector.multi_reduction <add>, %217, %cst_52 [1] : vector<32x128xf32> to vector<32xf32>
    %219 = vector.shape_cast %218 : vector<32xf32> to vector<32x1xf32>
    %220 = vector.extract_strided_slice %189 {offsets = [64, 0], sizes = [32, 128], strides = [1, 1]} : vector<384x128xf32> to vector<32x128xf32>
    %221 = vector.extract_strided_slice %189 {offsets = [192, 0], sizes = [32, 128], strides = [1, 1]} : vector<384x128xf32> to vector<32x128xf32>
    %222 = vector.extract_strided_slice %189 {offsets = [320, 0], sizes = [32, 128], strides = [1, 1]} : vector<384x128xf32> to vector<32x128xf32>
    %c1_i32_53 = arith.constant 1 : i32
    %223 = tpu.dynamic_rotate %220 by %c1_i32_53 dim 1 : vector<32x128xf32>, i32 -> vector<32x128xf32>
    %224 = vector.shape_cast %22 : vector<1x128xi1> to vector<1x128xi1>
    %225 = vector.broadcast %224 : vector<1x128xi1> to vector<32x128xi1>
    %226 = arith.select %225, %220, %223 : vector<32x128xi1>, vector<32x128xf32>
    %c8_i32_54 = arith.constant 8 : i32
    %227 = tpu.dynamic_rotate %221 by %c8_i32_54 dim 1 : vector<32x128xf32>, i32 -> vector<32x128xf32>
    %228 = vector.shape_cast %18 : vector<1x128xi1> to vector<1x128xi1>
    %229 = vector.broadcast %228 : vector<1x128xi1> to vector<32x128xi1>
    %230 = arith.select %229, %221, %227 : vector<32x128xi1>, vector<32x128xf32>
    %231 = arith.addf %226, %230 : vector<32x128xf32>
    %232 = arith.addf %231, %222 : vector<32x128xf32>
    %cst_55 = arith.constant dense<0.000000e+00> : vector<32xf32>
    %233 = vector.multi_reduction <add>, %232, %cst_55 [1] : vector<32x128xf32> to vector<32xf32>
    %234 = vector.shape_cast %233 : vector<32xf32> to vector<32x1xf32>
    %235 = vector.extract_strided_slice %189 {offsets = [96, 0], sizes = [32, 128], strides = [1, 1]} : vector<384x128xf32> to vector<32x128xf32>
    %236 = vector.extract_strided_slice %189 {offsets = [224, 0], sizes = [32, 128], strides = [1, 1]} : vector<384x128xf32> to vector<32x128xf32>
    %237 = vector.extract_strided_slice %189 {offsets = [352, 0], sizes = [32, 128], strides = [1, 1]} : vector<384x128xf32> to vector<32x128xf32>
    %c127_i32_56 = arith.constant 127 : i32
    %238 = tpu.dynamic_rotate %235 by %c127_i32_56 dim 1 : vector<32x128xf32>, i32 -> vector<32x128xf32>
    %239 = vector.shape_cast %24 : vector<1x128xi1> to vector<1x128xi1>
    %240 = vector.broadcast %239 : vector<1x128xi1> to vector<32x128xi1>
    %241 = arith.select %240, %235, %238 : vector<32x128xi1>, vector<32x128xf32>
    %c120_i32_57 = arith.constant 120 : i32
    %242 = tpu.dynamic_rotate %236 by %c120_i32_57 dim 1 : vector<32x128xf32>, i32 -> vector<32x128xf32>
    %243 = vector.shape_cast %20 : vector<1x128xi1> to vector<1x128xi1>
    %244 = vector.broadcast %243 : vector<1x128xi1> to vector<32x128xi1>
    %245 = arith.select %244, %236, %242 : vector<32x128xi1>, vector<32x128xf32>
    %246 = arith.addf %241, %245 : vector<32x128xf32>
    %247 = arith.addf %246, %237 : vector<32x128xf32>
    %cst_58 = arith.constant dense<0.000000e+00> : vector<32xf32>
    %248 = vector.multi_reduction <add>, %247, %cst_58 [1] : vector<32x128xf32> to vector<32xf32>
    %249 = vector.shape_cast %248 : vector<32xf32> to vector<32x1xf32>
    %250 = tpu.concatenate %204, %219, %234, %249 in 0 : vector<32x1xf32>, vector<32x1xf32>, vector<32x1xf32>, vector<32x1xf32> -> vector<128x1xf32>
    %c0_59 = arith.constant 0 : index
    %c0_60 = arith.constant 0 : index
    %251 = vector.load %arg4[%c0_59, %c0_60] : memref<128x128xbf16, #tpu.memory_space<vmem>>, vector<128x128xbf16>
    %252 = arith.truncf %250 : vector<128x1xf32> to vector<128x1xbf16>
    %cst_61 = arith.constant dense<0.000000e+00> : vector<128x1xf32>
    %253 = tpu.matmul %251, %252, %cst_61 {dimension_numbers = #tpu.dot_dimension_numbers<[1], [0], [0], [1], [0, 0, 1, 1], [], []>} : vector<128x128xbf16>, vector<128x1xbf16>, vector<128x1xf32> -> vector<128x1xf32>
    %cst_62 = arith.constant 5.000000e-01 : f32
    %254 = vector.broadcast %cst_62 : f32 to vector<128x1xf32>
    %255 = arith.mulf %254, %253 : vector<128x1xf32>
    %cst_63 = arith.constant 0.707106769 : f32
    %256 = vector.broadcast %cst_63 : f32 to vector<128x1xf32>
    %257 = arith.mulf %253, %256 : vector<128x1xf32>
    %258 = math.erf %257 : vector<128x1xf32>
    %cst_64 = arith.constant 1.000000e+00 : f32
    %259 = vector.broadcast %cst_64 : f32 to vector<128x1xf32>
    %260 = arith.addf %259, %258 : vector<128x1xf32>
    %261 = arith.mulf %255, %260 : vector<128x1xf32>
    %c0_65 = arith.constant 0 : index
    %c0_66 = arith.constant 0 : index
    %262 = vector.load %arg5[%c0_65, %c0_66] : memref<384x128xbf16, #tpu.memory_space<vmem>>, vector<384x128xbf16>
    %263 = arith.truncf %261 : vector<128x1xf32> to vector<128x1xbf16>
    %cst_67 = arith.constant dense<0.000000e+00> : vector<384x1xf32>
    %264 = tpu.matmul %262, %263, %cst_67 {dimension_numbers = #tpu.dot_dimension_numbers<[1], [0], [0], [1], [0, 0, 1, 1], [], []>} : vector<384x128xbf16>, vector<128x1xbf16>, vector<384x1xf32> -> vector<384x1xf32>
    %265 = vector.extract_strided_slice %264 {offsets = [0, 0], sizes = [128, 1], strides = [1, 1]} : vector<384x1xf32> to vector<128x1xf32>
    %266 = vector.extract_strided_slice %264 {offsets = [128, 0], sizes = [128, 1], strides = [1, 1]} : vector<384x1xf32> to vector<128x1xf32>
    %267 = vector.extract_strided_slice %264 {offsets = [256, 0], sizes = [128, 1], strides = [1, 1]} : vector<384x1xf32> to vector<128x1xf32>
    %268 = arith.maximumf %265, %266 : vector<128x1xf32>
    %269 = arith.maximumf %268, %267 : vector<128x1xf32>
    %270 = arith.subf %265, %269 : vector<128x1xf32>
    %271 = math.exp %270 : vector<128x1xf32>
    %272 = arith.subf %266, %269 : vector<128x1xf32>
    %273 = math.exp %272 : vector<128x1xf32>
    %274 = arith.subf %267, %269 : vector<128x1xf32>
    %275 = math.exp %274 : vector<128x1xf32>
    %276 = arith.addf %271, %273 : vector<128x1xf32>
    %277 = arith.addf %276, %275 : vector<128x1xf32>
    %cst_68 = arith.constant 1.000000e+00 : f32
    %278 = vector.broadcast %cst_68 : f32 to vector<128x1xf32>
    %279 = arith.divf %278, %277 : vector<128x1xf32>
    %280 = arith.mulf %271, %279 : vector<128x1xf32>
    %281 = arith.mulf %273, %279 : vector<128x1xf32>
    %282 = arith.mulf %275, %279 : vector<128x1xf32>
    %283 = vector.extract_strided_slice %280 {offsets = [0, 0], sizes = [32, 1], strides = [1, 1]} : vector<128x1xf32> to vector<32x1xf32>
    %284 = vector.broadcast %283 : vector<32x1xf32> to vector<32x128xf32>
    %285 = arith.mulf %284, %196 : vector<32x128xf32>
    %286 = vector.extract_strided_slice %281 {offsets = [0, 0], sizes = [32, 1], strides = [1, 1]} : vector<128x1xf32> to vector<32x1xf32>
    %287 = vector.broadcast %286 : vector<32x1xf32> to vector<32x128xf32>
    %288 = arith.mulf %287, %200 : vector<32x128xf32>
    %289 = arith.addf %285, %288 : vector<32x128xf32>
    %290 = vector.extract_strided_slice %282 {offsets = [0, 0], sizes = [32, 1], strides = [1, 1]} : vector<128x1xf32> to vector<32x1xf32>
    %291 = vector.broadcast %290 : vector<32x1xf32> to vector<32x128xf32>
    %292 = arith.mulf %291, %192 : vector<32x128xf32>
    %293 = arith.addf %289, %292 : vector<32x128xf32>
    %294 = arith.truncf %293 : vector<32x128xf32> to vector<32x128xbf16>
    %295 = vector.extract_strided_slice %280 {offsets = [32, 0], sizes = [32, 1], strides = [1, 1]} : vector<128x1xf32> to vector<32x1xf32>
    %296 = vector.broadcast %295 : vector<32x1xf32> to vector<32x128xf32>
    %297 = arith.mulf %296, %211 : vector<32x128xf32>
    %298 = vector.extract_strided_slice %281 {offsets = [32, 0], sizes = [32, 1], strides = [1, 1]} : vector<128x1xf32> to vector<32x1xf32>
    %299 = vector.broadcast %298 : vector<32x1xf32> to vector<32x128xf32>
    %300 = arith.mulf %299, %215 : vector<32x128xf32>
    %301 = arith.addf %297, %300 : vector<32x128xf32>
    %302 = vector.extract_strided_slice %282 {offsets = [32, 0], sizes = [32, 1], strides = [1, 1]} : vector<128x1xf32> to vector<32x1xf32>
    %303 = vector.broadcast %302 : vector<32x1xf32> to vector<32x128xf32>
    %304 = arith.mulf %303, %207 : vector<32x128xf32>
    %305 = arith.addf %301, %304 : vector<32x128xf32>
    %306 = arith.truncf %305 : vector<32x128xf32> to vector<32x128xbf16>
    %307 = vector.extract_strided_slice %280 {offsets = [64, 0], sizes = [32, 1], strides = [1, 1]} : vector<128x1xf32> to vector<32x1xf32>
    %308 = vector.broadcast %307 : vector<32x1xf32> to vector<32x128xf32>
    %309 = arith.mulf %308, %226 : vector<32x128xf32>
    %310 = vector.extract_strided_slice %281 {offsets = [64, 0], sizes = [32, 1], strides = [1, 1]} : vector<128x1xf32> to vector<32x1xf32>
    %311 = vector.broadcast %310 : vector<32x1xf32> to vector<32x128xf32>
    %312 = arith.mulf %311, %230 : vector<32x128xf32>
    %313 = arith.addf %309, %312 : vector<32x128xf32>
    %314 = vector.extract_strided_slice %282 {offsets = [64, 0], sizes = [32, 1], strides = [1, 1]} : vector<128x1xf32> to vector<32x1xf32>
    %315 = vector.broadcast %314 : vector<32x1xf32> to vector<32x128xf32>
    %316 = arith.mulf %315, %222 : vector<32x128xf32>
    %317 = arith.addf %313, %316 : vector<32x128xf32>
    %318 = arith.truncf %317 : vector<32x128xf32> to vector<32x128xbf16>
    %319 = vector.extract_strided_slice %280 {offsets = [96, 0], sizes = [32, 1], strides = [1, 1]} : vector<128x1xf32> to vector<32x1xf32>
    %320 = vector.broadcast %319 : vector<32x1xf32> to vector<32x128xf32>
    %321 = arith.mulf %320, %241 : vector<32x128xf32>
    %322 = vector.extract_strided_slice %281 {offsets = [96, 0], sizes = [32, 1], strides = [1, 1]} : vector<128x1xf32> to vector<32x1xf32>
    %323 = vector.broadcast %322 : vector<32x1xf32> to vector<32x128xf32>
    %324 = arith.mulf %323, %245 : vector<32x128xf32>
    %325 = arith.addf %321, %324 : vector<32x128xf32>
    %326 = vector.extract_strided_slice %282 {offsets = [96, 0], sizes = [32, 1], strides = [1, 1]} : vector<128x1xf32> to vector<32x1xf32>
    %327 = vector.broadcast %326 : vector<32x1xf32> to vector<32x128xf32>
    %328 = arith.mulf %327, %237 : vector<32x128xf32>
    %329 = arith.addf %325, %328 : vector<32x128xf32>
    %330 = arith.truncf %329 : vector<32x128xf32> to vector<32x128xbf16>
    %331 = tpu.concatenate %294, %306, %318, %330 in 0 : vector<32x128xbf16>, vector<32x128xbf16>, vector<32x128xbf16>, vector<32x128xbf16> -> vector<128x128xbf16>
    %c0_69 = arith.constant 0 : index
    %c0_70 = arith.constant 0 : index
    %332 = vector.load %arg6[%c0_69, %c0_70] : memref<128x128xbf16, #tpu.memory_space<vmem>>, vector<128x128xbf16>
    %cst_71 = arith.constant dense<0.000000e+00> : vector<128x128xf32>
    %333 = tpu.matmul %332, %331, %cst_71 {dimension_numbers = #tpu.dot_dimension_numbers<[1], [0], [0], [1], [0, 0, 1, 1], [], []>} : vector<128x128xbf16>, vector<128x128xbf16>, vector<128x128xf32> -> vector<128x128xf32>
    %c0_72 = arith.constant 0 : index
    %c0_73 = arith.constant 0 : index
    %334 = vector.load %arg7[%c0_72, %c0_73] : memref<128x1xf32, #tpu.memory_space<vmem>>, vector<128x1xf32>
    %335 = vector.broadcast %334 : vector<128x1xf32> to vector<128x128xf32>
    %336 = arith.addf %333, %335 : vector<128x128xf32>
    %337 = arith.truncf %336 : vector<128x128xf32> to vector<128x128xbf16>
    %c1_74 = arith.constant 1 : index
    %c0_75 = arith.constant 0 : index
    %c0_76 = arith.constant 0 : index
    %338 = vector.load %arg8[%c1_74, %c0_75, %c0_76] : memref<2x128x128xbf16, #tpu.memory_space<vmem>>, vector<1x128x128xbf16>
    %339 = vector.shape_cast %338 : vector<1x128x128xbf16> to vector<128x128xbf16>
    %340 = vector.shape_cast %337 : vector<128x128xbf16> to vector<1x128x128xbf16>
    tpu.vector_store %arg8[%c1_74, %c0_75, %c0_76], %340 {strides = array<i32>} : memref<2x128x128xbf16, #tpu.memory_space<vmem>>, vector<1x128x128xbf16>,
    return
  }
  func.func @transform_0(%arg0: i32) -> (i32, i32, i32) {
    %c0_i32 = arith.constant 0 : i32
    %c0_i32_0 = arith.constant 0 : i32
    %c0_i32_1 = arith.constant 0 : i32
    return %arg0, %c0_i32, %c0_i32_0 : i32, i32, i32
  }
  func.func @transform_1(%arg0: i32) -> (i32, i32) {
    %c0_i32 = arith.constant 0 : i32
    %c0_i32_0 = arith.constant 0 : i32
    %c0_i32_1 = arith.constant 0 : i32
    return %c0_i32, %c0_i32_0 : i32, i32
  }
  func.func @transform_2(%arg0: i32) -> (i32, i32) {
    %c0_i32 = arith.constant 0 : i32
    %c0_i32_0 = arith.constant 0 : i32
    %c0_i32_1 = arith.constant 0 : i32
    return %c0_i32, %c0_i32_0 : i32, i32
  }
  func.func @transform_3(%arg0: i32) -> (i32, i32) {
    %c0_i32 = arith.constant 0 : i32
    %c0_i32_0 = arith.constant 0 : i32
    %c0_i32_1 = arith.constant 0 : i32
    return %c0_i32, %c0_i32_0 : i32, i32
  }
  func.func @transform_4(%arg0: i32) -> (i32, i32) {
    %c0_i32 = arith.constant 0 : i32
    %c0_i32_0 = arith.constant 0 : i32
    %c0_i32_1 = arith.constant 0 : i32
    return %c0_i32, %c0_i32_0 : i32, i32
  }
  func.func @transform_5(%arg0: i32) -> (i32, i32) {
    %c0_i32 = arith.constant 0 : i32
    %c0_i32_0 = arith.constant 0 : i32
    %c0_i32_1 = arith.constant 0 : i32
    return %c0_i32, %c0_i32_0 : i32, i32
  }
  func.func @transform_6(%arg0: i32) -> (i32, i32) {
    %c0_i32 = arith.constant 0 : i32
    %c0_i32_0 = arith.constant 0 : i32
    %c0_i32_1 = arith.constant 0 : i32
    return %c0_i32, %c0_i32_0 : i32, i32
  }
  func.func @transform_7(%arg0: i32) -> (i32, i32, i32) {
    %c0_i32 = arith.constant 0 : i32
    %c0_i32_0 = arith.constant 0 : i32
    %c0_i32_1 = arith.constant 0 : i32
    return %arg0, %c0_i32, %c0_i32_0 : i32, i32, i32
  }
}

</mosaic_0001>

<llo_original>
// kernel: tpu_custom_call.1
$region0: #{tpu_custom_call.1}
  #allocation0 [shape = 'u32[]', space=smem, size = 0x4, offset = 0x4, fixed_abs, tag = 'smem constant byte address 0x4 - core index']
  #allocation1 [shape = 'u32[144,128]{1,0:T(1,128)}', space=vmem, size = 0x12000, scoped, tag = 'internal scratch']
  %s0 = inlined_call_operand.vmem [shape: bf16[2,128,128], index: 0, kind: input, shape index: {}]
  %s1 = inlined_call_operand.vmem [shape: bf16[384,128], index: 1, kind: input, shape index: {}]
  %s2 = inlined_call_operand.vmem [shape: f32[384,1], index: 2, kind: input, shape index: {}]
  %s3 = inlined_call_operand.hbm [shape: bf16[128,128], index: 3, kind: input, shape index: {}]
  %s4 = inlined_call_operand.vmem [shape: bf16[384,128], index: 4, kind: input, shape index: {}]
  %s5 = inlined_call_operand.hbm [shape: bf16[128,128], index: 5, kind: input, shape index: {}]
  %s6 = inlined_call_operand.vmem [shape: f32[128,1], index: 6, kind: input, shape index: {}]
  %s7 = inlined_call_operand.hbm [shape: bf16[2,128,128], index: 7, kind: output, shape index: {}]
  %s8 = sld [smem:[#allocation0]]
  $region46: #{tpu_custom_call.1} parent=0
    _
  %s10 = ssub.s32 1, %s8
  %s11 = scalar_select 0, %s10, %s8
  $region1: #{tpu_custom_call.1} parent=0
    #allocation2 [shape = 'u8[32768]{0}', space=vmem, size = 0x8000, scoped, tag = 'input window, operand 3, single buffered']
    #allocation3 [shape = 's32[1]{0}', space=sflag, size = 0x4, scoped, tag = 'scoped memory for tpu_custom_call.1']
    #allocation4 [shape = 's32[1]{0}', space=sflag, size = 0x4, scoped, tag = 'scoped memory for tpu_custom_call.1']
    #allocation5 [shape = 'u8[32768]{0}', space=vmem, size = 0x8000, scoped, tag = 'input window, operand 5, single buffered']
    #allocation6 [shape = 's32[1]{0}', space=sflag, size = 0x4, scoped, tag = 'scoped memory for tpu_custom_call.1']
    #allocation7 [shape = 'u8[65536]{0}', space=vmem, size = 0x10000, scoped, tag = 'output window, operand 0, single buffered']
    %12 = vsyncpa [#allocation3], 0
    %13 = vsyncpa [#allocation6], 0
    %14 = vsyncpa [#allocation4], 0
    // Predicated region
    $region2: #{tpu_custom_call.1} parent=1 // pred_check
      _
    $region3: #{tpu_custom_call.1} parent=1 // pred_check_branch
      %16 = sbr.rel (0) target = $region5
    $region4: #{tpu_custom_call.1} parent=1 // pred_region
      _
    $region5: #{tpu_custom_call.1} parent=1 // pred_fallthru
      _
    // Predicated region
    $region6: #{tpu_custom_call.1} parent=1 // pred_check
      _
    $region7: #{tpu_custom_call.1} parent=1 // pred_check_branch
      %18 = sbr.rel (0) target = $region9
    $region8: #{tpu_custom_call.1} parent=1 // pred_region
      _
    $region9: #{tpu_custom_call.1} parent=1 // pred_fallthru
      _
    // Predicated region
    $region10: #{tpu_custom_call.1} parent=1 // pred_check
      _
    $region11: #{tpu_custom_call.1} parent=1 // pred_check_branch
      %20 = sbr.rel (0) target = $region13
    $region12: #{tpu_custom_call.1} parent=1 // pred_region
      _
    $region13: #{tpu_custom_call.1} parent=1 // pred_fallthru
      _
    // Predicated region
    $region14: #{tpu_custom_call.1} parent=1 // pred_check
      _
    $region15: #{tpu_custom_call.1} parent=1 // pred_check_branch
      %22 = sbr.rel (0) target = $region17
    $region16: #{tpu_custom_call.1} parent=1 // pred_region
      %s24 = ssub.s32 1024, 1024
      %25 = vsyncadd [#allocation3], %s24
      %s26 = sshll.u32 [#allocation2], 4
      %s27 = int_to_ptr.vmem [resolvable:$true] %s26
      %32 = dma.hbm_to_vmem [thread:$0]  %s3, 1024, %s27, [#allocation3], 64, 64, 4
    $region17: #{tpu_custom_call.1} parent=1 // pred_fallthru
      _
    // Predicated region
    $region18: #{tpu_custom_call.1} parent=1 // pred_check
      _
    $region19: #{tpu_custom_call.1} parent=1 // pred_check_branch
      %34 = sbr.rel (0) target = $region21
    $region20: #{tpu_custom_call.1} parent=1 // pred_region
      _
    $region21: #{tpu_custom_call.1} parent=1 // pred_fallthru
      _
    // Predicated region
    $region22: #{tpu_custom_call.1} parent=1 // pred_check
      _
    $region23: #{tpu_custom_call.1} parent=1 // pred_check_branch
      %36 = sbr.rel (0) target = $region25
    $region24: #{tpu_custom_call.1} parent=1 // pred_region
      %s38 = ssub.s32 1024, 1024
      %39 = vsyncadd [#allocation6], %s38
      %s40 = sshll.u32 [#allocation5], 4
      %s41 = int_to_ptr.vmem [resolvable:$true] %s40
      %46 = dma.hbm_to_vmem [thread:$0]  %s5, 1024, %s41, [#allocation6], 64, 64, 4
    $region25: #{tpu_custom_call.1} parent=1 // pred_fallthru
      _
    // Predicated region
    $region26: #{tpu_custom_call.1} parent=1 // pred_check
      _
    $region27: #{tpu_custom_call.1} parent=1 // pred_check_branch
      %48 = sbr.rel (0) target = $region29
    $region28: #{tpu_custom_call.1} parent=1 // pred_region
      _
    $region29: #{tpu_custom_call.1} parent=1 // pred_fallthru
      _
    // Predicated region
    $region30: #{tpu_custom_call.1} parent=1 // pred_check
      _
    $region31: #{tpu_custom_call.1} parent=1 // pred_check_branch
      %50 = sbr.rel (0) target = $region33
    $region32: #{tpu_custom_call.1} parent=1 // pred_region
      %51 = dma.done [#allocation3], 1024
    $region33: #{tpu_custom_call.1} parent=1 // pred_fallthru
      _
    // Predicated region
    $region34: #{tpu_custom_call.1} parent=1 // pred_check
      _
    $region35: #{tpu_custom_call.1} parent=1 // pred_check_branch
      %53 = sbr.rel (0) target = $region37
    $region36: #{tpu_custom_call.1} parent=1 // pred_region
      %54 = dma.done [#allocation6], 1024
    $region37: #{tpu_custom_call.1} parent=1 // pred_fallthru
      _
    %v56 = vlaneseq
    %v57 = vand.u32 %v56, 127
    %vm58 = vcmp.lt.s32.totalorder %v57, 0
    %v59 = vsub.s32 0, %v57
    %v60 = vsel %vm58, %v59, %v57
    %v61 = vshrl.u32 %v60, 3
    %v62 = vand.u32 %v60, 7
    %v63 = vsub.s32 0, %v62
    %v64 = vsel %vm58, %v63, %v62
    %vm65 = vcmp.ne.s32.totalorder %v64, 0
    %vm66 = vcmp.lt.s32.totalorder %v64, 0
    %vm67 = vmand %vm66, %vm65
    %v68 = vadd.s32 %v64, 8
    %v69 = vsel %vm67, %v68, %v64
    %vm70 = vcmp.lt.s32.totalorder %v57, 8
    %vm71 = vcmp.ge.s32.totalorder %v57, 120
    %vm72 = vcmp.eq.s32.totalorder %v69, 0
    %vm73 = vcmp.eq.s32.totalorder %v69, 7
    %v74 = vld [vmem:[%s0] sm:$0xf]
    %v75 = vld [vmem:[%s0 + $0x4] sm:$0xf]
    %v76 = vld [vmem:[%s0 + $0x8] sm:$0xf]
    %v77 = vld [vmem:[%s0 + $0xc] sm:$0xf]
    %v78 = vld [vmem:[%s0 + $0x10] sm:$0xf]
    %v79 = vld [vmem:[%s0 + $0x14] sm:$0xf]
    %v80 = vld [vmem:[%s0 + $0x18] sm:$0xf]
    %v81 = vld [vmem:[%s0 + $0x1c] sm:$0xf]
    %v82 = vld [vmem:[%s0 + $0x20] sm:$0xf]
    %v83 = vld [vmem:[%s0 + $0x24] sm:$0xf]
    %v84 = vld [vmem:[%s0 + $0x28] sm:$0xf]
    %v85 = vld [vmem:[%s0 + $0x2c] sm:$0xf]
    %v86 = vld [vmem:[%s0 + $0x30] sm:$0xf]
    %v87 = vld [vmem:[%s0 + $0x34] sm:$0xf]
    %v88 = vld [vmem:[%s0 + $0x38] sm:$0xf]
    %v89 = vld [vmem:[%s0 + $0x3c] sm:$0xf]
    %v90 = vld [vmem:[%s1] sm:$0xf]
    %v91 = vld [vmem:[%s1 + $0x4] sm:$0xf]
    %v92 = vld [vmem:[%s1 + $0x8] sm:$0xf]
    %v93 = vld [vmem:[%s1 + $0xc] sm:$0xf]
    %v94 = vld [vmem:[%s1 + $0x10] sm:$0xf]
    %v95 = vld [vmem:[%s1 + $0x14] sm:$0xf]
    %v96 = vld [vmem:[%s1 + $0x18] sm:$0xf]
    %v97 = vld [vmem:[%s1 + $0x1c] sm:$0xf]
    %v98 = vld [vmem:[%s1 + $0x20] sm:$0xf]
    %v99 = vld [vmem:[%s1 + $0x24] sm:$0xf]
    %v100 = vld [vmem:[%s1 + $0x28] sm:$0xf]
    %v101 = vld [vmem:[%s1 + $0x2c] sm:$0xf]
    %v102 = vld [vmem:[%s1 + $0x30] sm:$0xf]
    %v103 = vld [vmem:[%s1 + $0x34] sm:$0xf]
    %v104 = vld [vmem:[%s1 + $0x38] sm:$0xf]
    %v105 = vld [vmem:[%s1 + $0x3c] sm:$0xf]
    %v106 = vld [vmem:[%s1 + $0x40] sm:$0xf]
    %v107 = vld [vmem:[%s1 + $0x44] sm:$0xf]
    %v108 = vld [vmem:[%s1 + $0x48] sm:$0xf]
    %v109 = vld [vmem:[%s1 + $0x4c] sm:$0xf]
    %v110 = vld [vmem:[%s1 + $0x50] sm:$0xf]
    %v111 = vld [vmem:[%s1 + $0x54] sm:$0xf]
    %v112 = vld [vmem:[%s1 + $0x58] sm:$0xf]
    %v113 = vld [vmem:[%s1 + $0x5c] sm:$0xf]
    %v114 = vld [vmem:[%s1 + $0x60] sm:$0xf]
    %v115 = vld [vmem:[%s1 + $0x64] sm:$0xf]
    %v116 = vld [vmem:[%s1 + $0x68] sm:$0xf]
    %v117 = vld [vmem:[%s1 + $0x6c] sm:$0xf]
    %v118 = vld [vmem:[%s1 + $0x70] sm:$0xf]
    %v119 = vld [vmem:[%s1 + $0x74] sm:$0xf]
    %v120 = vld [vmem:[%s1 + $0x78] sm:$0xf]
    %v121 = vld [vmem:[%s1 + $0x7c] sm:$0xf]
    %v122 = vld [vmem:[%s1 + $0x80] sm:$0xf]
    %v123 = vld [vmem:[%s1 + $0x84] sm:$0xf]
    %v124 = vld [vmem:[%s1 + $0x88] sm:$0xf]
    %v125 = vld [vmem:[%s1 + $0x8c] sm:$0xf]
    %v126 = vld [vmem:[%s1 + $0x90] sm:$0xf]
    %v127 = vld [vmem:[%s1 + $0x94] sm:$0xf]
    %v128 = vld [vmem:[%s1 + $0x98] sm:$0xf]
    %v129 = vld [vmem:[%s1 + $0x9c] sm:$0xf]
    %v130 = vld [vmem:[%s1 + $0xa0] sm:$0xf]
    %v131 = vld [vmem:[%s1 + $0xa4] sm:$0xf]
    %v132 = vld [vmem:[%s1 + $0xa8] sm:$0xf]
    %v133 = vld [vmem:[%s1 + $0xac] sm:$0xf]
    %v134 = vld [vmem:[%s1 + $0xb0] sm:$0xf]
    %v135 = vld [vmem:[%s1 + $0xb4] sm:$0xf]
    %v136 = vld [vmem:[%s1 + $0xb8] sm:$0xf]
    %v137 = vld [vmem:[%s1 + $0xbc] sm:$0xf]
    %v138 = vld [vmem:[%s2] sm:$0xff]
    %v139 = vld [vmem:[%s2 + $0x8] sm:$0xff]
    %v140 = vld [vmem:[%s2 + $0x10] sm:$0xff]
    %v141 = vld [vmem:[%s2 + $0x18] sm:$0xff]
    %v142 = vld [vmem:[%s2 + $0x20] sm:$0xff]
    %v143 = vld [vmem:[%s2 + $0x28] sm:$0xff]
    %v144 = vld [vmem:[%s2 + $0x30] sm:$0xff]
    %v145 = vld [vmem:[%s2 + $0x38] sm:$0xff]
    %v146 = vld [vmem:[%s2 + $0x40] sm:$0xff]
    %v147 = vld [vmem:[%s2 + $0x48] sm:$0xff]
    %v148 = vld [vmem:[%s2 + $0x50] sm:$0xff]
    %v149 = vld [vmem:[%s2 + $0x58] sm:$0xff]
    %v150 = vld [vmem:[%s2 + $0x60] sm:$0xff]
    %v151 = vld [vmem:[%s2 + $0x68] sm:$0xff]
    %v152 = vld [vmem:[%s2 + $0x70] sm:$0xff]
    %v153 = vld [vmem:[%s2 + $0x78] sm:$0xff]
    %v154 = vld [vmem:[%s2 + $0x80] sm:$0xff]
    %v155 = vld [vmem:[%s2 + $0x88] sm:$0xff]
    %v156 = vld [vmem:[%s2 + $0x90] sm:$0xff]
    %v157 = vld [vmem:[%s2 + $0x98] sm:$0xff]
    %v158 = vld [vmem:[%s2 + $0xa0] sm:$0xff]
    %v159 = vld [vmem:[%s2 + $0xa8] sm:$0xff]
    %v160 = vld [vmem:[%s2 + $0xb0] sm:$0xff]
    %v161 = vld [vmem:[%s2 + $0xb8] sm:$0xff]
    %v162 = vld [vmem:[%s2 + $0xc0] sm:$0xff]
    %v163 = vld [vmem:[%s2 + $0xc8] sm:$0xff]
    %v164 = vld [vmem:[%s2 + $0xd0] sm:$0xff]
    %v165 = vld [vmem:[%s2 + $0xd8] sm:$0xff]
    %v166 = vld [vmem:[%s2 + $0xe0] sm:$0xff]
    %v167 = vld [vmem:[%s2 + $0xe8] sm:$0xff]
    %v168 = vld [vmem:[%s2 + $0xf0] sm:$0xff]
    %v169 = vld [vmem:[%s2 + $0xf8] sm:$0xff]
    %v170 = vld [vmem:[%s2 + $0x100] sm:$0xff]
    %v171 = vld [vmem:[%s2 + $0x108] sm:$0xff]
    %v172 = vld [vmem:[%s2 + $0x110] sm:$0xff]
    %v173 = vld [vmem:[%s2 + $0x118] sm:$0xff]
    %v174 = vld [vmem:[%s2 + $0x120] sm:$0xff]
    %v175 = vld [vmem:[%s2 + $0x128] sm:$0xff]
    %v176 = vld [vmem:[%s2 + $0x130] sm:$0xff]
    %v177 = vld [vmem:[%s2 + $0x138] sm:$0xff]
    %v178 = vld [vmem:[%s2 + $0x140] sm:$0xff]
    %v179 = vld [vmem:[%s2 + $0x148] sm:$0xff]
    %v180 = vld [vmem:[%s2 + $0x150] sm:$0xff]
    %v181 = vld [vmem:[%s2 + $0x158] sm:$0xff]
    %v182 = vld [vmem:[%s2 + $0x160] sm:$0xff]
    %v183 = vld [vmem:[%s2 + $0x168] sm:$0xff]
    %v184 = vld [vmem:[%s2 + $0x170] sm:$0xff]
    %v185 = vld [vmem:[%s2 + $0x178] sm:$0xff]
    %187 = vset.pattern.permute.xlu0 0
    %188 = vperm.xlu0 %187, %v138
    %v189 = vpop.permute.xlu0 %188
    %192 = vset.pattern.permute.xlu0 0
    %193 = vperm.xlu0 %192, %v139
    %v194 = vpop.permute.xlu0 %193
    %197 = vset.pattern.permute.xlu0 0
    %198 = vperm.xlu0 %197, %v140
    %v199 = vpop.permute.xlu0 %198
    %202 = vset.pattern.permute.xlu0 0
    %203 = vperm.xlu0 %202, %v141
    %v204 = vpop.permute.xlu0 %203
    %207 = vset.pattern.permute.xlu0 0
    %208 = vperm.xlu0 %207, %v142
    %v209 = vpop.permute.xlu0 %208
    %212 = vset.pattern.permute.xlu0 0
    %213 = vperm.xlu0 %212, %v143
    %v214 = vpop.permute.xlu0 %213
    %217 = vset.pattern.permute.xlu0 0
    %218 = vperm.xlu0 %217, %v144
    %v219 = vpop.permute.xlu0 %218
    %222 = vset.pattern.permute.xlu0 0
    %223 = vperm.xlu0 %222, %v145
    %v224 = vpop.permute.xlu0 %223
    %227 = vset.pattern.permute.xlu0 0
    %228 = vperm.xlu0 %227, %v146
    %v229 = vpop.permute.xlu0 %228
    %232 = vset.pattern.permute.xlu0 0
    %233 = vperm.xlu0 %232, %v147
    %v234 = vpop.permute.xlu0 %233
    %237 = vset.pattern.permute.xlu0 0
    %238 = vperm.xlu0 %237, %v148
    %v239 = vpop.permute.xlu0 %238
    %242 = vset.pattern.permute.xlu0 0
    %243 = vperm.xlu0 %242, %v149
    %v244 = vpop.permute.xlu0 %243
    %247 = vset.pattern.permute.xlu0 0
    %248 = vperm.xlu0 %247, %v150
    %v249 = vpop.permute.xlu0 %248
    %252 = vset.pattern.permute.xlu0 0
    %253 = vperm.xlu0 %252, %v151
    %v254 = vpop.permute.xlu0 %253
    %257 = vset.pattern.permute.xlu0 0
    %258 = vperm.xlu0 %257, %v152
    %v259 = vpop.permute.xlu0 %258
    %262 = vset.pattern.permute.xlu0 0
    %263 = vperm.xlu0 %262, %v153
    %v264 = vpop.permute.xlu0 %263
    %267 = vset.pattern.permute.xlu0 0
    %268 = vperm.xlu0 %267, %v154
    %v269 = vpop.permute.xlu0 %268
    %272 = vset.pattern.permute.xlu0 0
    %273 = vperm.xlu0 %272, %v155
    %v274 = vpop.permute.xlu0 %273
    %277 = vset.pattern.permute.xlu0 0
    %278 = vperm.xlu0 %277, %v156
    %v279 = vpop.permute.xlu0 %278
    %282 = vset.pattern.permute.xlu0 0
    %283 = vperm.xlu0 %282, %v157
    %v284 = vpop.permute.xlu0 %283
    %287 = vset.pattern.permute.xlu0 0
    %288 = vperm.xlu0 %287, %v158
    %v289 = vpop.permute.xlu0 %288
    %292 = vset.pattern.permute.xlu0 0
    %293 = vperm.xlu0 %292, %v159
    %v294 = vpop.permute.xlu0 %293
    %297 = vset.pattern.permute.xlu0 0
    %298 = vperm.xlu0 %297, %v160
    %v299 = vpop.permute.xlu0 %298
    %302 = vset.pattern.permute.xlu0 0
    %303 = vperm.xlu0 %302, %v161
    %v304 = vpop.permute.xlu0 %303
    %307 = vset.pattern.permute.xlu0 0
    %308 = vperm.xlu0 %307, %v162
    %v309 = vpop.permute.xlu0 %308
    %312 = vset.pattern.permute.xlu0 0
    %313 = vperm.xlu0 %312, %v163
    %v314 = vpop.permute.xlu0 %313
    %317 = vset.pattern.permute.xlu0 0
    %318 = vperm.xlu0 %317, %v164
    %v319 = vpop.permute.xlu0 %318
    %322 = vset.pattern.permute.xlu0 0
    %323 = vperm.xlu0 %322, %v165
    %v324 = vpop.permute.xlu0 %323
    %327 = vset.pattern.permute.xlu0 0
    %328 = vperm.xlu0 %327, %v166
    %v329 = vpop.permute.xlu0 %328
    %332 = vset.pattern.permute.xlu0 0
    %333 = vperm.xlu0 %332, %v167
    %v334 = vpop.permute.xlu0 %333
    %337 = vset.pattern.permute.xlu0 0
    %338 = vperm.xlu0 %337, %v168
    %v339 = vpop.permute.xlu0 %338
    %342 = vset.pattern.permute.xlu0 0
    %343 = vperm.xlu0 %342, %v169
    %v344 = vpop.permute.xlu0 %343
    %347 = vset.pattern.permute.xlu0 0
    %348 = vperm.xlu0 %347, %v170
    %v349 = vpop.permute.xlu0 %348
    %352 = vset.pattern.permute.xlu0 0
    %353 = vperm.xlu0 %352, %v171
    %v354 = vpop.permute.xlu0 %353
    %357 = vset.pattern.permute.xlu0 0
    %358 = vperm.xlu0 %357, %v172
    %v359 = vpop.permute.xlu0 %358
    %362 = vset.pattern.permute.xlu0 0
    %363 = vperm.xlu0 %362, %v173
    %v364 = vpop.permute.xlu0 %363
    %367 = vset.pattern.permute.xlu0 0
    %368 = vperm.xlu0 %367, %v174
    %v369 = vpop.permute.xlu0 %368
    %372 = vset.pattern.permute.xlu0 0
    %373 = vperm.xlu0 %372, %v175
    %v374 = vpop.permute.xlu0 %373
    %377 = vset.pattern.permute.xlu0 0
    %378 = vperm.xlu0 %377, %v176
    %v379 = vpop.permute.xlu0 %378
    %382 = vset.pattern.permute.xlu0 0
    %383 = vperm.xlu0 %382, %v177
    %v384 = vpop.permute.xlu0 %383
    %387 = vset.pattern.permute.xlu0 0
    %388 = vperm.xlu0 %387, %v178
    %v389 = vpop.permute.xlu0 %388
    %392 = vset.pattern.permute.xlu0 0
    %393 = vperm.xlu0 %392, %v179
    %v394 = vpop.permute.xlu0 %393
    %397 = vset.pattern.permute.xlu0 0
    %398 = vperm.xlu0 %397, %v180
    %v399 = vpop.permute.xlu0 %398
    %402 = vset.pattern.permute.xlu0 0
    %403 = vperm.xlu0 %402, %v181
    %v404 = vpop.permute.xlu0 %403
    %407 = vset.pattern.permute.xlu0 0
    %408 = vperm.xlu0 %407, %v182
    %v409 = vpop.permute.xlu0 %408
    %412 = vset.pattern.permute.xlu0 0
    %413 = vperm.xlu0 %412, %v183
    %v414 = vpop.permute.xlu0 %413
    %417 = vset.pattern.permute.xlu0 0
    %418 = vperm.xlu0 %417, %v184
    %v419 = vpop.permute.xlu0 %418
    %422 = vset.pattern.permute.xlu0 0
    %423 = vperm.xlu0 %422, %v185
    %v424 = vpop.permute.xlu0 %423
    %v474 = vunpack.c.l.b16 %v90
    %v475 = vunpack.c.l.b16 %v91
    %v476 = vunpack.c.l.b16 %v92
    %v477 = vunpack.c.l.b16 %v93
    %v478 = vunpack.c.l.b16 %v94
    %v479 = vunpack.c.l.b16 %v95
    %v480 = vunpack.c.l.b16 %v96
    %v481 = vunpack.c.l.b16 %v97
    %v482 = vunpack.c.l.b16 %v98
    %v483 = vunpack.c.l.b16 %v99
    %v484 = vunpack.c.l.b16 %v100
    %v485 = vunpack.c.l.b16 %v101
    %v486 = vunpack.c.l.b16 %v102
    %v487 = vunpack.c.l.b16 %v103
    %v488 = vunpack.c.l.b16 %v104
    %v489 = vunpack.c.l.b16 %v105
    %v490 = vunpack.c.l.b16 %v106
    %v491 = vunpack.c.l.b16 %v107
    %v492 = vunpack.c.l.b16 %v108
    %v493 = vunpack.c.l.b16 %v109
    %v494 = vunpack.c.l.b16 %v110
    %v495 = vunpack.c.l.b16 %v111
    %v496 = vunpack.c.l.b16 %v112
    %v497 = vunpack.c.l.b16 %v113
    %v498 = vunpack.c.l.b16 %v114
    %v499 = vunpack.c.l.b16 %v115
    %v500 = vunpack.c.l.b16 %v116
    %v501 = vunpack.c.l.b16 %v117
    %v502 = vunpack.c.l.b16 %v118
    %v503 = vunpack.c.l.b16 %v119
    %v504 = vunpack.c.l.b16 %v120
    %v505 = vunpack.c.l.b16 %v121
    %v506 = vunpack.c.l.b16 %v122
    %v507 = vunpack.c.l.b16 %v123
    %v508 = vunpack.c.l.b16 %v124
    %v509 = vunpack.c.l.b16 %v125
    %v510 = vunpack.c.l.b16 %v126
    %v511 = vunpack.c.l.b16 %v127
    %v512 = vunpack.c.l.b16 %v128
    %v513 = vunpack.c.l.b16 %v129
    %v514 = vunpack.c.l.b16 %v130
    %v515 = vunpack.c.l.b16 %v131
    %v516 = vunpack.c.l.b16 %v132
    %v517 = vunpack.c.l.b16 %v133
    %v518 = vunpack.c.l.b16 %v134
    %v519 = vunpack.c.l.b16 %v135
    %v520 = vunpack.c.l.b16 %v136
    %v521 = vunpack.c.l.b16 %v137
    %v522 = vpack.c.b16 %v475, %v474
    %v523 = vpack.c.b16 %v477, %v476
    %v524 = vpack.c.b16 %v479, %v478
    %v525 = vpack.c.b16 %v481, %v480
    %v526 = vpack.c.b16 %v483, %v482
    %v527 = vpack.c.b16 %v485, %v484
    %v528 = vpack.c.b16 %v487, %v486
    %v529 = vpack.c.b16 %v489, %v488
    %v530 = vpack.c.b16 %v491, %v490
    %v531 = vpack.c.b16 %v493, %v492
    %v532 = vpack.c.b16 %v495, %v494
    %v533 = vpack.c.b16 %v497, %v496
    %v534 = vpack.c.b16 %v499, %v498
    %v535 = vpack.c.b16 %v501, %v500
    %v536 = vpack.c.b16 %v503, %v502
    %v537 = vpack.c.b16 %v505, %v504
    %v538 = vpack.c.b16 %v507, %v506
    %v539 = vpack.c.b16 %v509, %v508
    %v540 = vpack.c.b16 %v511, %v510
    %v541 = vpack.c.b16 %v513, %v512
    %v542 = vpack.c.b16 %v515, %v514
    %v543 = vpack.c.b16 %v517, %v516
    %v544 = vpack.c.b16 %v519, %v518
    %v545 = vpack.c.b16 %v521, %v520
    %v586 = vunpack.c.l.b16 %v74
    %v587 = vunpack.c.l.b16 %v75
    %v588 = vunpack.c.l.b16 %v76
    %v589 = vunpack.c.l.b16 %v77
    %v590 = vunpack.c.l.b16 %v78
    %v591 = vunpack.c.l.b16 %v79
    %v592 = vunpack.c.l.b16 %v80
    %v593 = vunpack.c.l.b16 %v81
    %v594 = vunpack.c.l.b16 %v82
    %v595 = vunpack.c.l.b16 %v83
    %v596 = vunpack.c.l.b16 %v84
    %v597 = vunpack.c.l.b16 %v85
    %v598 = vunpack.c.l.b16 %v86
    %v599 = vunpack.c.l.b16 %v87
    %v600 = vunpack.c.l.b16 %v88
    %v601 = vunpack.c.l.b16 %v89
    %v602 = vpack.c.b16 %v587, %v586
    %v603 = vpack.c.b16 %v589, %v588
    %v604 = vpack.c.b16 %v591, %v590
    %v605 = vpack.c.b16 %v593, %v592
    %v606 = vpack.c.b16 %v595, %v594
    %v607 = vpack.c.b16 %v597, %v596
    %v608 = vpack.c.b16 %v599, %v598
    %v609 = vpack.c.b16 %v601, %v600
    %618 = vmatprep.subr.bf16.mxu0 0
    %619 = vmatpush1.bf16.msra.mxu0 %v602
    %620 = vmatprep.subr.bf16.mxu0 0
    %621 = vmatpush1.bf16.msra.mxu0 %v603
    %622 = vmatprep.subr.bf16.mxu0 0
    %623 = vmatpush1.bf16.msra.mxu0 %v604
    %624 = vmatprep.subr.bf16.mxu0 0
    %625 = vmatpush1.bf16.msra.mxu0 %v605
    %626 = vmatprep.subr.bf16.mxu0 0
    %627 = vmatpush1.bf16.msra.mxu0 %v606
    %628 = vmatprep.subr.bf16.mxu0 0
    %629 = vmatpush1.bf16.msra.mxu0 %v607
    %630 = vmatprep.subr.bf16.mxu0 0
    %631 = vmatpush1.bf16.msra.mxu0 %v608
    %632 = vmatprep.subr.bf16.mxu0 0
    %633 = vmatpush1.bf16.msra.mxu0 %v609
    %634 = vmatprep.subr.bf16.mxu0 0
    %635 = vmatpush1.bf16.msra.mxu0 0
    %636 = vmatprep.subr.bf16.mxu0 0
    %637 = vmatpush1.bf16.msra.mxu0 0
    %638 = vmatprep.subr.bf16.mxu0 0
    %639 = vmatpush1.bf16.msra.mxu0 0
    %640 = vmatprep.subr.bf16.mxu0 0
    %641 = vmatpush1.bf16.msra.mxu0 0
    %642 = vmatprep.subr.bf16.mxu0 0
    %643 = vmatpush1.bf16.msra.mxu0 0
    %644 = vmatprep.subr.bf16.mxu0 0
    %645 = vmatpush1.bf16.msra.mxu0 0
    %646 = vmatprep.subr.bf16.mxu0 0
    %647 = vmatpush1.bf16.msra.mxu0 0
    %648 = vmatprep.subr.bf16.mxu0 0
    %649 = vmatpush1.bf16.msra.mxu0 0
    %650 = vmatprep.mubr.bf16.mxu0 0
    %651 = vmatmul.mubr.bf16.gmra.mrb[0].mxu0 %v522
    %v652 = vpop.f32.mrb[0].mxu0
    %v653 = vadd.f32 %v189, %v652
    %v654 = vpop.f32.mrb[0].mxu0
    %v655 = vpop.f32.mrb[0].mxu0
    %v656 = vadd.f32 %v194, %v655
    %v657 = vpop.f32.mrb[0].mxu0
    %658 = vmatprep.mubr.bf16.mxu0 0
    %659 = vmatmul.mubr.bf16.gmra.mrb[0].mxu0 %v523
    %v660 = vpop.f32.mrb[0].mxu0
    %v661 = vadd.f32 %v199, %v660
    %v662 = vpop.f32.mrb[0].mxu0
    %v663 = vpop.f32.mrb[0].mxu0
    %v664 = vadd.f32 %v204, %v663
    %v665 = vpop.f32.mrb[0].mxu0
    %666 = vmatprep.mubr.bf16.mxu0 0
    %667 = vmatmul.mubr.bf16.gmra.mrb[0].mxu0 %v524
    %v668 = vpop.f32.mrb[0].mxu0
    %v669 = vadd.f32 %v209, %v668
    %v670 = vpop.f32.mrb[0].mxu0
    %v671 = vpop.f32.mrb[0].mxu0
    %v672 = vadd.f32 %v214, %v671
    %v673 = vpop.f32.mrb[0].mxu0
    %674 = vmatprep.mubr.bf16.mxu0 0
    %675 = vmatmul.mubr.bf16.gmra.mrb[0].mxu0 %v525
    %v676 = vpop.f32.mrb[0].mxu0
    %v677 = vadd.f32 %v219, %v676
    %v678 = vpop.f32.mrb[0].mxu0
    %v679 = vpop.f32.mrb[0].mxu0
    %v680 = vadd.f32 %v224, %v679
    %v681 = vpop.f32.mrb[0].mxu0
    %682 = vmatprep.mubr.bf16.mxu0 0
    %683 = vmatmul.mubr.bf16.gmra.mrb[0].mxu0 %v526
    %v684 = vpop.f32.mrb[0].mxu0
    %v685 = vadd.f32 %v229, %v684
    %v686 = vpop.f32.mrb[0].mxu0
    %v687 = vpop.f32.mrb[0].mxu0
    %v688 = vadd.f32 %v234, %v687
    %v689 = vpop.f32.mrb[0].mxu0
    %690 = vmatprep.mubr.bf16.mxu0 0
    %691 = vmatmul.mubr.bf16.gmra.mrb[0].mxu0 %v527
    %v692 = vpop.f32.mrb[0].mxu0
    %v693 = vadd.f32 %v239, %v692
    %v694 = vpop.f32.mrb[0].mxu0
    %v695 = vpop.f32.mrb[0].mxu0
    %v696 = vadd.f32 %v244, %v695
    %v697 = vpop.f32.mrb[0].mxu0
    %698 = vmatprep.mubr.bf16.mxu0 0
    %699 = vmatmul.mubr.bf16.gmra.mrb[0].mxu0 %v528
    %v700 = vpop.f32.mrb[0].mxu0
    %v701 = vadd.f32 %v249, %v700
    %v702 = vpop.f32.mrb[0].mxu0
    %v703 = vpop.f32.mrb[0].mxu0
    %v704 = vadd.f32 %v254, %v703
    %v705 = vpop.f32.mrb[0].mxu0
    %706 = vmatprep.mubr.bf16.mxu0 0
    %707 = vmatmul.mubr.bf16.gmra.mrb[0].mxu0 %v529
    %v708 = vpop.f32.mrb[0].mxu0
    %v709 = vadd.f32 %v259, %v708
    %v710 = vpop.f32.mrb[0].mxu0
    %v711 = vpop.f32.mrb[0].mxu0
    %v712 = vadd.f32 %v264, %v711
    %v713 = vpop.f32.mrb[0].mxu0
    %714 = vmatprep.mubr.bf16.mxu0 0
    %715 = vmatmul.mubr.bf16.gmra.mrb[0].mxu0 %v530
    %v716 = vpop.f32.mrb[0].mxu0
    %v717 = vadd.f32 %v269, %v716
    %v718 = vpop.f32.mrb[0].mxu0
    %v719 = vpop.f32.mrb[0].mxu0
    %v720 = vadd.f32 %v274, %v719
    %v721 = vpop.f32.mrb[0].mxu0
    %722 = vmatprep.mubr.bf16.mxu0 0
    %723 = vmatmul.mubr.bf16.gmra.mrb[0].mxu0 %v531
    %v724 = vpop.f32.mrb[0].mxu0
    %v725 = vadd.f32 %v279, %v724
    %v726 = vpop.f32.mrb[0].mxu0
    %v727 = vpop.f32.mrb[0].mxu0
    %v728 = vadd.f32 %v284, %v727
    %v729 = vpop.f32.mrb[0].mxu0
    %730 = vmatprep.mubr.bf16.mxu0 0
    %731 = vmatmul.mubr.bf16.gmra.mrb[0].mxu0 %v532
    %v732 = vpop.f32.mrb[0].mxu0
    %v733 = vadd.f32 %v289, %v732
    %v734 = vpop.f32.mrb[0].mxu0
    %v735 = vpop.f32.mrb[0].mxu0
    %v736 = vadd.f32 %v294, %v735
    %v737 = vpop.f32.mrb[0].mxu0
    %738 = vmatprep.mubr.bf16.mxu0 0
    %739 = vmatmul.mubr.bf16.gmra.mrb[0].mxu0 %v533
    %v740 = vpop.f32.mrb[0].mxu0
    %v741 = vadd.f32 %v299, %v740
    %v742 = vpop.f32.mrb[0].mxu0
    %v743 = vpop.f32.mrb[0].mxu0
    %v744 = vadd.f32 %v304, %v743
    %v745 = vpop.f32.mrb[0].mxu0
    %746 = vmatprep.mubr.bf16.mxu0 0
    %747 = vmatmul.mubr.bf16.gmra.mrb[0].mxu0 %v534
    %v748 = vpop.f32.mrb[0].mxu0
    %v749 = vadd.f32 %v309, %v748
    %v750 = vpop.f32.mrb[0].mxu0
    %v751 = vpop.f32.mrb[0].mxu0
    %v752 = vadd.f32 %v314, %v751
    %v753 = vpop.f32.mrb[0].mxu0
    %754 = vmatprep.mubr.bf16.mxu0 0
    %755 = vmatmul.mubr.bf16.gmra.mrb[0].mxu0 %v535
    %v756 = vpop.f32.mrb[0].mxu0
    %v757 = vadd.f32 %v319, %v756
    %v758 = vpop.f32.mrb[0].mxu0
    %v759 = vpop.f32.mrb[0].mxu0
    %v760 = vadd.f32 %v324, %v759
    %v761 = vpop.f32.mrb[0].mxu0
    %762 = vmatprep.mubr.bf16.mxu0 0
    %763 = vmatmul.mubr.bf16.gmra.mrb[0].mxu0 %v536
    %v764 = vpop.f32.mrb[0].mxu0
    %v765 = vadd.f32 %v329, %v764
    %v766 = vpop.f32.mrb[0].mxu0
    %v767 = vpop.f32.mrb[0].mxu0
    %v768 = vadd.f32 %v334, %v767
    %v769 = vpop.f32.mrb[0].mxu0
    %770 = vmatprep.mubr.bf16.mxu0 0
    %771 = vmatmul.mubr.bf16.gmra.mrb[0].mxu0 %v537
    %v772 = vpop.f32.mrb[0].mxu0
    %v773 = vadd.f32 %v339, %v772
    %v774 = vpop.f32.mrb[0].mxu0
    %v775 = vpop.f32.mrb[0].mxu0
    %v776 = vadd.f32 %v344, %v775
    %v777 = vpop.f32.mrb[0].mxu0
    %778 = vmatprep.mubr.bf16.mxu0 0
    %779 = vmatmul.mubr.bf16.gmra.mrb[0].mxu0 %v538
    %v780 = vpop.f32.mrb[0].mxu0
    %v781 = vadd.f32 %v349, %v780
    %v782 = vpop.f32.mrb[0].mxu0
    %v783 = vpop.f32.mrb[0].mxu0
    %v784 = vadd.f32 %v354, %v783
    %v785 = vpop.f32.mrb[0].mxu0
    %786 = vmatprep.mubr.bf16.mxu0 0
    %787 = vmatmul.mubr.bf16.gmra.mrb[0].mxu0 %v539
    %v788 = vpop.f32.mrb[0].mxu0
    %v789 = vadd.f32 %v359, %v788
    %v790 = vpop.f32.mrb[0].mxu0
    %v791 = vpop.f32.mrb[0].mxu0
    %v792 = vadd.f32 %v364, %v791
    %v793 = vpop.f32.mrb[0].mxu0
    %794 = vmatprep.mubr.bf16.mxu0 0
    %795 = vmatmul.mubr.bf16.gmra.mrb[0].mxu0 %v540
    %v796 = vpop.f32.mrb[0].mxu0
    %v797 = vadd.f32 %v369, %v796
    %v798 = vpop.f32.mrb[0].mxu0
    %v799 = vpop.f32.mrb[0].mxu0
    %v800 = vadd.f32 %v374, %v799
    %v801 = vpop.f32.mrb[0].mxu0
    %802 = vmatprep.mubr.bf16.mxu0 0
    %803 = vmatmul.mubr.bf16.gmra.mrb[0].mxu0 %v541
    %v804 = vpop.f32.mrb[0].mxu0
    %v805 = vadd.f32 %v379, %v804
    %v806 = vpop.f32.mrb[0].mxu0
    %v807 = vpop.f32.mrb[0].mxu0
    %v808 = vadd.f32 %v384, %v807
    %v809 = vpop.f32.mrb[0].mxu0
    %810 = vmatprep.mubr.bf16.mxu0 0
    %811 = vmatmul.mubr.bf16.gmra.mrb[0].mxu0 %v542
    %v812 = vpop.f32.mrb[0].mxu0
    %v813 = vadd.f32 %v389, %v812
    %v814 = vpop.f32.mrb[0].mxu0
    %v815 = vpop.f32.mrb[0].mxu0
    %v816 = vadd.f32 %v394, %v815
    %v817 = vpop.f32.mrb[0].mxu0
    %818 = vmatprep.mubr.bf16.mxu0 0
    %819 = vmatmul.mubr.bf16.gmra.mrb[0].mxu0 %v543
    %v820 = vpop.f32.mrb[0].mxu0
    %v821 = vadd.f32 %v399, %v820
    %v822 = vpop.f32.mrb[0].mxu0
    %v823 = vpop.f32.mrb[0].mxu0
    %v824 = vadd.f32 %v404, %v823
    %v825 = vpop.f32.mrb[0].mxu0
    %826 = vmatprep.mubr.bf16.mxu0 0
    %827 = vmatmul.mubr.bf16.gmra.mrb[0].mxu0 %v544
    %v828 = vpop.f32.mrb[0].mxu0
    %v829 = vadd.f32 %v409, %v828
    %v830 = vpop.f32.mrb[0].mxu0
    %v831 = vpop.f32.mrb[0].mxu0
    %v832 = vadd.f32 %v414, %v831
    %v833 = vpop.f32.mrb[0].mxu0
    %834 = vmatprep.mubr.bf16.mxu0 0
    %835 = vmatmul.mubr.bf16.gmra.mrb[0].mxu0 %v545
    %v836 = vpop.f32.mrb[0].mxu0
    %v837 = vadd.f32 %v419, %v836
    %v838 = vpop.f32.mrb[0].mxu0
    %v839 = vpop.f32.mrb[0].mxu0
    %v840 = vadd.f32 %v424, %v839
    %v841 = vpop.f32.mrb[0].mxu0
    %842 = vdwg.mxu0
    %843 = vrot.lane.b32.xlu0 %v653, 8
    %v844 = vpop.permute.xlu0 %843
    %845 = vrot.lane.b32.xlu0 %v656, 8
    %v846 = vpop.permute.xlu0 %845
    %847 = vrot.lane.b32.xlu0 %v661, 8
    %v848 = vpop.permute.xlu0 %847
    %849 = vrot.lane.b32.xlu0 %v664, 8
    %v850 = vpop.permute.xlu0 %849
    %v851 = vsel %vm70, 1, 0
    %vm852 = vcmp.eq.s32.totalorder %v851, 1
    %v853 = vsel %vm852, %v653, %v844
    %v854 = vsel %vm852, %v656, %v846
    %v855 = vsel %vm852, %v661, %v848
    %v856 = vsel %vm852, %v664, %v850
    %857 = vrot.lane.b32.xlu0 %v717, 1
    %v858 = vpop.permute.xlu0 %857
    %859 = vrot.lane.b32.xlu0 %v720, 1
    %v860 = vpop.permute.xlu0 %859
    %861 = vrot.lane.b32.xlu0 %v725, 1
    %v862 = vpop.permute.xlu0 %861
    %863 = vrot.lane.b32.xlu0 %v728, 1
    %v864 = vpop.permute.xlu0 %863
    %v865 = vsel %vm72, 1, 0
    %vm866 = vcmp.eq.s32.totalorder %v865, 1
    %v867 = vsel %vm866, %v717, %v858
    %v868 = vsel %vm866, %v720, %v860
    %v869 = vsel %vm866, %v725, %v862
    %v870 = vsel %vm866, %v728, %v864
    %v871 = vadd.f32 %v853, %v867
    %v872 = vadd.f32 %v854, %v868
    %v873 = vadd.f32 %v855, %v869
    %v874 = vadd.f32 %v856, %v870
    %v875 = vadd.f32 %v871, %v781
    %v876 = vadd.f32 %v872, %v784
    %v877 = vadd.f32 %v873, %v789
    %v878 = vadd.f32 %v874, %v792
    %879 = vadd.xlane.f32.xlu0 %v875
    %v880 = vpop.xlane.xlu0 %879
    %881 = vadd.xlane.f32.xlu0 %v876
    %v882 = vpop.xlane.xlu0 %881
    %883 = vadd.xlane.f32.xlu0 %v877
    %v884 = vpop.xlane.xlu0 %883
    %885 = vadd.xlane.f32.xlu0 %v878
    %v886 = vpop.xlane.xlu0 %885
    %887 = vrot.lane.b32.xlu0 %v669, 120
    %v888 = vpop.permute.xlu0 %887
    %889 = vrot.lane.b32.xlu0 %v672, 120
    %v890 = vpop.permute.xlu0 %889
    %891 = vrot.lane.b32.xlu0 %v677, 120
    %v892 = vpop.permute.xlu0 %891
    %893 = vrot.lane.b32.xlu0 %v680, 120
    %v894 = vpop.permute.xlu0 %893
    %v895 = vsel %vm71, 1, 0
    %vm896 = vcmp.eq.s32.totalorder %v895, 1
    %v897 = vsel %vm896, %v669, %v888
    %v898 = vsel %vm896, %v672, %v890
    %v899 = vsel %vm896, %v677, %v892
    %v900 = vsel %vm896, %v680, %v894
    %901 = vrot.lane.b32.xlu0 %v733, 127
    %v902 = vpop.permute.xlu0 %901
    %903 = vrot.lane.b32.xlu0 %v736, 127
    %v904 = vpop.permute.xlu0 %903
    %905 = vrot.lane.b32.xlu0 %v741, 127
    %v906 = vpop.permute.xlu0 %905
    %907 = vrot.lane.b32.xlu0 %v744, 127
    %v908 = vpop.permute.xlu0 %907
    %v909 = vsel %vm73, 1, 0
    %vm910 = vcmp.eq.s32.totalorder %v909, 1
    %v911 = vsel %vm910, %v733, %v902
    %v912 = vsel %vm910, %v736, %v904
    %v913 = vsel %vm910, %v741, %v906
    %v914 = vsel %vm910, %v744, %v908
    %v915 = vadd.f32 %v897, %v911
    %v916 = vadd.f32 %v898, %v912
    %v917 = vadd.f32 %v899, %v913
    %v918 = vadd.f32 %v900, %v914
    %v919 = vadd.f32 %v915, %v797
    %v920 = vadd.f32 %v916, %v800
    %v921 = vadd.f32 %v917, %v805
    %v922 = vadd.f32 %v918, %v808
    %923 = vadd.xlane.f32.xlu0 %v919
    %v924 = vpop.xlane.xlu0 %923
    %925 = vadd.xlane.f32.xlu0 %v920
    %v926 = vpop.xlane.xlu0 %925
    %927 = vadd.xlane.f32.xlu0 %v921
    %v928 = vpop.xlane.xlu0 %927
    %929 = vadd.xlane.f32.xlu0 %v922
    %v930 = vpop.xlane.xlu0 %929
    %931 = vrot.lane.b32.xlu0 %v685, 1
    %v932 = vpop.permute.xlu0 %931
    %933 = vrot.lane.b32.xlu0 %v688, 1
    %v934 = vpop.permute.xlu0 %933
    %935 = vrot.lane.b32.xlu0 %v693, 1
    %v936 = vpop.permute.xlu0 %935
    %937 = vrot.lane.b32.xlu0 %v696, 1
    %v938 = vpop.permute.xlu0 %937
    %v939 = vsel %vm866, %v685, %v932
    %v940 = vsel %vm866, %v688, %v934
    %v941 = vsel %vm866, %v693, %v936
    %v942 = vsel %vm866, %v696, %v938
    %943 = vrot.lane.b32.xlu0 %v749, 8
    %v944 = vpop.permute.xlu0 %943
    %945 = vrot.lane.b32.xlu0 %v752, 8
    %v946 = vpop.permute.xlu0 %945
    %947 = vrot.lane.b32.xlu0 %v757, 8
    %v948 = vpop.permute.xlu0 %947
    %949 = vrot.lane.b32.xlu0 %v760, 8
    %v950 = vpop.permute.xlu0 %949
    %v951 = vsel %vm852, %v749, %v944
    %v952 = vsel %vm852, %v752, %v946
    %v953 = vsel %vm852, %v757, %v948
    %v954 = vsel %vm852, %v760, %v950
    %v955 = vadd.f32 %v939, %v951
    %v956 = vadd.f32 %v940, %v952
    %v957 = vadd.f32 %v941, %v953
    %v958 = vadd.f32 %v942, %v954
    %v959 = vadd.f32 %v955, %v813
    %v960 = vadd.f32 %v956, %v816
    %v961 = vadd.f32 %v957, %v821
    %v962 = vadd.f32 %v958, %v824
    %963 = vadd.xlane.f32.xlu0 %v959
    %v964 = vpop.xlane.xlu0 %963
    %965 = vadd.xlane.f32.xlu0 %v960
    %v966 = vpop.xlane.xlu0 %965
    %967 = vadd.xlane.f32.xlu0 %v961
    %v968 = vpop.xlane.xlu0 %967
    %969 = vadd.xlane.f32.xlu0 %v962
    %v970 = vpop.xlane.xlu0 %969
    %971 = vrot.lane.b32.xlu0 %v701, 127
    %v972 = vpop.permute.xlu0 %971
    %973 = vrot.lane.b32.xlu0 %v704, 127
    %v974 = vpop.permute.xlu0 %973
    %975 = vrot.lane.b32.xlu0 %v709, 127
    %v976 = vpop.permute.xlu0 %975
    %977 = vrot.lane.b32.xlu0 %v712, 127
    %v978 = vpop.permute.xlu0 %977
    %v979 = vsel %vm910, %v701, %v972
    %v980 = vsel %vm910, %v704, %v974
    %v981 = vsel %vm910, %v709, %v976
    %v982 = vsel %vm910, %v712, %v978
    %983 = vrot.lane.b32.xlu0 %v765, 120
    %v984 = vpop.permute.xlu0 %983
    %985 = vrot.lane.b32.xlu0 %v768, 120
    %v986 = vpop.permute.xlu0 %985
    %987 = vrot.lane.b32.xlu0 %v773, 120
    %v988 = vpop.permute.xlu0 %987
    %989 = vrot.lane.b32.xlu0 %v776, 120
    %v990 = vpop.permute.xlu0 %989
    %v991 = vsel %vm896, %v765, %v984
    %v992 = vsel %vm896, %v768, %v986
    %v993 = vsel %vm896, %v773, %v988
    %v994 = vsel %vm896, %v776, %v990
    %v995 = vadd.f32 %v979, %v991
    %v996 = vadd.f32 %v980, %v992
    %v997 = vadd.f32 %v981, %v993
    %v998 = vadd.f32 %v982, %v994
    %v999 = vadd.f32 %v995, %v829
    %v1000 = vadd.f32 %v996, %v832
    %v1001 = vadd.f32 %v997, %v837
    %v1002 = vadd.f32 %v998, %v840
    %1003 = vadd.xlane.f32.xlu0 %v999
    %v1004 = vpop.xlane.xlu0 %1003
    %1005 = vadd.xlane.f32.xlu0 %v1000
    %v1006 = vpop.xlane.xlu0 %1005
    %1007 = vadd.xlane.f32.xlu0 %v1001
    %v1008 = vpop.xlane.xlu0 %1007
    %1009 = vadd.xlane.f32.xlu0 %v1002
    %v1010 = vpop.xlane.xlu0 %1009
    %v1011 = vld [vmem:[#allocation2] sm:$0xf]
    %v1012 = vld [vmem:[#allocation2 + $0x4] sm:$0xf]
    %v1013 = vld [vmem:[#allocation2 + $0x8] sm:$0xf]
    %v1014 = vld [vmem:[#allocation2 + $0xc] sm:$0xf]
    %v1015 = vld [vmem:[#allocation2 + $0x10] sm:$0xf]
    %v1016 = vld [vmem:[#allocation2 + $0x14] sm:$0xf]
    %v1017 = vld [vmem:[#allocation2 + $0x18] sm:$0xf]
    %v1018 = vld [vmem:[#allocation2 + $0x1c] sm:$0xf]
    %v1019 = vld [vmem:[#allocation2 + $0x20] sm:$0xf]
    %v1020 = vld [vmem:[#allocation2 + $0x24] sm:$0xf]
    %v1021 = vld [vmem:[#allocation2 + $0x28] sm:$0xf]
    %v1022 = vld [vmem:[#allocation2 + $0x2c] sm:$0xf]
    %v1023 = vld [vmem:[#allocation2 + $0x30] sm:$0xf]
    %v1024 = vld [vmem:[#allocation2 + $0x34] sm:$0xf]
    %v1025 = vld [vmem:[#allocation2 + $0x38] sm:$0xf]
    %v1026 = vld [vmem:[#allocation2 + $0x3c] sm:$0xf]
    %v1027 = vpack.c.bf16 %v882, %v880
    %v1028 = vpack.c.bf16 %v886, %v884
    %v1029 = vpack.c.bf16 %v926, %v924
    %v1030 = vpack.c.bf16 %v930, %v928
    %v1031 = vpack.c.bf16 %v966, %v964
    %v1032 = vpack.c.bf16 %v970, %v968
    %v1033 = vpack.c.bf16 %v1006, %v1004
    %v1034 = vpack.c.bf16 %v1010, %v1008
    %v1051 = vunpack.c.l.b16 %v1011
    %v1052 = vunpack.c.l.b16 %v1012
    %v1053 = vunpack.c.l.b16 %v1013
    %v1054 = vunpack.c.l.b16 %v1014
    %v1055 = vunpack.c.l.b16 %v1015
    %v1056 = vunpack.c.l.b16 %v1016
    %v1057 = vunpack.c.l.b16 %v1017
    %v1058 = vunpack.c.l.b16 %v1018
    %v1059 = vunpack.c.l.b16 %v1019
    %v1060 = vunpack.c.l.b16 %v1020
    %v1061 = vunpack.c.l.b16 %v1021
    %v1062 = vunpack.c.l.b16 %v1022
    %v1063 = vunpack.c.l.b16 %v1023
    %v1064 = vunpack.c.l.b16 %v1024
    %v1065 = vunpack.c.l.b16 %v1025
    %v1066 = vunpack.c.l.b16 %v1026
    %v1067 = vpack.c.b16 %v1052, %v1051
    %v1068 = vpack.c.b16 %v1054, %v1053
    %v1069 = vpack.c.b16 %v1056, %v1055
    %v1070 = vpack.c.b16 %v1058, %v1057
    %v1071 = vpack.c.b16 %v1060, %v1059
    %v1072 = vpack.c.b16 %v1062, %v1061
    %v1073 = vpack.c.b16 %v1064, %v1063
    %v1074 = vpack.c.b16 %v1066, %v1065
    %1083 = vmatprep.subr.bf16.mxu0 0
    %1084 = vmatpush1.bf16.msra.mxu0 %v1027
    %1085 = vmatprep.subr.bf16.mxu0 0
    %1086 = vmatpush1.bf16.msra.mxu0 %v1028
    %1087 = vmatprep.subr.bf16.mxu0 0
    %1088 = vmatpush1.bf16.msra.mxu0 %v1029
    %1089 = vmatprep.subr.bf16.mxu0 0
    %1090 = vmatpush1.bf16.msra.mxu0 %v1030
    %1091 = vmatprep.subr.bf16.mxu0 0
    %1092 = vmatpush1.bf16.msra.mxu0 %v1031
    %1093 = vmatprep.subr.bf16.mxu0 0
    %1094 = vmatpush1.bf16.msra.mxu0 %v1032
    %1095 = vmatprep.subr.bf16.mxu0 0
    %1096 = vmatpush1.bf16.msra.mxu0 %v1033
    %1097 = vmatprep.subr.bf16.mxu0 0
    %1098 = vmatpush1.bf16.msra.mxu0 %v1034
    %1099 = vmatprep.subr.bf16.mxu0 0
    %1100 = vmatpush1.bf16.msra.mxu0 0
    %1101 = vmatprep.subr.bf16.mxu0 0
    %1102 = vmatpush1.bf16.msra.mxu0 0
    %1103 = vmatprep.subr.bf16.mxu0 0
    %1104 = vmatpush1.bf16.msra.mxu0 0
    %1105 = vmatprep.subr.bf16.mxu0 0
    %1106 = vmatpush1.bf16.msra.mxu0 0
    %1107 = vmatprep.subr.bf16.mxu0 0
    %1108 = vmatpush1.bf16.msra.mxu0 0
    %1109 = vmatprep.subr.bf16.mxu0 0
    %1110 = vmatpush1.bf16.msra.mxu0 0
    %1111 = vmatprep.subr.bf16.mxu0 0
    %1112 = vmatpush1.bf16.msra.mxu0 0
    %1113 = vmatprep.subr.bf16.mxu0 0
    %1114 = vmatpush1.bf16.msra.mxu0 0
    %1115 = vmatprep.mubr.bf16.mxu0 0
    %1116 = vmatmul.mubr.bf16.gmra.mrb[0].mxu0 %v1067
    %v1117 = vpop.f32.mrb[0].mxu0
    %v1118 = vadd.f32 0.0, %v1117
    %v1119 = vpop.f32.mrb[0].mxu0
    %v1120 = vpop.f32.mrb[0].mxu0
    %v1121 = vadd.f32 0.0, %v1120
    %v1122 = vpop.f32.mrb[0].mxu0
    %1123 = vmatprep.mubr.bf16.mxu0 0
    %1124 = vmatmul.mubr.bf16.gmra.mrb[0].mxu0 %v1068
    %v1125 = vpop.f32.mrb[0].mxu0
    %v1126 = vadd.f32 0.0, %v1125
    %v1127 = vpop.f32.mrb[0].mxu0
    %v1128 = vpop.f32.mrb[0].mxu0
    %v1129 = vadd.f32 0.0, %v1128
    %v1130 = vpop.f32.mrb[0].mxu0
    %1131 = vmatprep.mubr.bf16.mxu0 0
    %1132 = vmatmul.mubr.bf16.gmra.mrb[0].mxu0 %v1069
    %v1133 = vpop.f32.mrb[0].mxu0
    %v1134 = vadd.f32 0.0, %v1133
    %v1135 = vpop.f32.mrb[0].mxu0
    %v1136 = vpop.f32.mrb[0].mxu0
    %v1137 = vadd.f32 0.0, %v1136
    %v1138 = vpop.f32.mrb[0].mxu0
    %1139 = vmatprep.mubr.bf16.mxu0 0
    %1140 = vmatmul.mubr.bf16.gmra.mrb[0].mxu0 %v1070
    %v1141 = vpop.f32.mrb[0].mxu0
    %v1142 = vadd.f32 0.0, %v1141
    %v1143 = vpop.f32.mrb[0].mxu0
    %v1144 = vpop.f32.mrb[0].mxu0
    %v1145 = vadd.f32 0.0, %v1144
    %v1146 = vpop.f32.mrb[0].mxu0
    %1147 = vmatprep.mubr.bf16.mxu0 0
    %1148 = vmatmul.mubr.bf16.gmra.mrb[0].mxu0 %v1071
    %v1149 = vpop.f32.mrb[0].mxu0
    %v1150 = vadd.f32 0.0, %v1149
    %v1151 = vpop.f32.mrb[0].mxu0
    %v1152 = vpop.f32.mrb[0].mxu0
    %v1153 = vadd.f32 0.0, %v1152
    %v1154 = vpop.f32.mrb[0].mxu0
    %1155 = vmatprep.mubr.bf16.mxu0 0
    %1156 = vmatmul.mubr.bf16.gmra.mrb[0].mxu0 %v1072
    %v1157 = vpop.f32.mrb[0].mxu0
    %v1158 = vadd.f32 0.0, %v1157
    %v1159 = vpop.f32.mrb[0].mxu0
    %v1160 = vpop.f32.mrb[0].mxu0
    %v1161 = vadd.f32 0.0, %v1160
    %v1162 = vpop.f32.mrb[0].mxu0
    %1163 = vmatprep.mubr.bf16.mxu0 0
    %1164 = vmatmul.mubr.bf16.gmra.mrb[0].mxu0 %v1073
    %v1165 = vpop.f32.mrb[0].mxu0
    %v1166 = vadd.f32 0.0, %v1165
    %v1167 = vpop.f32.mrb[0].mxu0
    %v1168 = vpop.f32.mrb[0].mxu0
    %v1169 = vadd.f32 0.0, %v1168
    %v1170 = vpop.f32.mrb[0].mxu0
    %1171 = vmatprep.mubr.bf16.mxu0 0
    %1172 = vmatmul.mubr.bf16.gmra.mrb[0].mxu0 %v1074
    %v1173 = vpop.f32.mrb[0].mxu0
    %v1174 = vadd.f32 0.0, %v1173
    %v1175 = vpop.f32.mrb[0].mxu0
    %v1176 = vpop.f32.mrb[0].mxu0
    %v1177 = vadd.f32 0.0, %v1176
    %v1178 = vpop.f32.mrb[0].mxu0
    %1179 = vdwg.mxu0
    %v1180 = vmul.f32 %v1118, 0.5
    %v1181 = vmul.f32 %v1121, 0.5
    %v1182 = vmul.f32 %v1126, 0.5
    %v1183 = vmul.f32 %v1129, 0.5
    %v1184 = vmul.f32 %v1134, 0.5
    %v1185 = vmul.f32 %v1137, 0.5
    %v1186 = vmul.f32 %v1142, 0.5
    %v1187 = vmul.f32 %v1145, 0.5
    %v1188 = vmul.f32 %v1150, 0.5
    %v1189 = vmul.f32 %v1153, 0.5
    %v1190 = vmul.f32 %v1158, 0.5
    %v1191 = vmul.f32 %v1161, 0.5
    %v1192 = vmul.f32 %v1166, 0.5
    %v1193 = vmul.f32 %v1169, 0.5
    %v1194 = vmul.f32 %v1174, 0.5
    %v1195 = vmul.f32 %v1177, 0.5
    %v1196 = vmul.f32 %v1118, 0.70710677
    %v1197 = vmul.f32 %v1121, 0.70710677
    %v1198 = vmul.f32 %v1126, 0.70710677
    %v1199 = vmul.f32 %v1129, 0.70710677
    %v1200 = vmul.f32 %v1134, 0.70710677
    %v1201 = vmul.f32 %v1137, 0.70710677
    %v1202 = vmul.f32 %v1142, 0.70710677
    %v1203 = vmul.f32 %v1145, 0.70710677
    %v1204 = vmul.f32 %v1150, 0.70710677
    %v1205 = vmul.f32 %v1153, 0.70710677
    %v1206 = vmul.f32 %v1158, 0.70710677
    %v1207 = vmul.f32 %v1161, 0.70710677
    %v1208 = vmul.f32 %v1166, 0.70710677
    %v1209 = vmul.f32 %v1169, 0.70710677
    %v1210 = vmul.f32 %v1174, 0.70710677
    %v1211 = vmul.f32 %v1177, 0.70710677
    %v1212 = verf.f32.pop %v1196
    %v1213 = verf.f32.pop %v1197
    %v1214 = verf.f32.pop %v1198
    %v1215 = verf.f32.pop %v1199
    %v1216 = verf.f32.pop %v1200
    %v1217 = verf.f32.pop %v1201
    %v1218 = verf.f32.pop %v1202
    %v1219 = verf.f32.pop %v1203
    %v1220 = verf.f32.pop %v1204
    %v1221 = verf.f32.pop %v1205
    %v1222 = verf.f32.pop %v1206
    %v1223 = verf.f32.pop %v1207
    %v1224 = verf.f32.pop %v1208
    %v1225 = verf.f32.pop %v1209
    %v1226 = verf.f32.pop %v1210
    %v1227 = verf.f32.pop %v1211
    %v1228 = vadd.f32 %v1212, 1.0
    %v1229 = vadd.f32 %v1213, 1.0
    %v1230 = vadd.f32 %v1214, 1.0
    %v1231 = vadd.f32 %v1215, 1.0
    %v1232 = vadd.f32 %v1216, 1.0
    %v1233 = vadd.f32 %v1217, 1.0
    %v1234 = vadd.f32 %v1218, 1.0
    %v1235 = vadd.f32 %v1219, 1.0
    %v1236 = vadd.f32 %v1220, 1.0
    %v1237 = vadd.f32 %v1221, 1.0
    %v1238 = vadd.f32 %v1222, 1.0
    %v1239 = vadd.f32 %v1223, 1.0
    %v1240 = vadd.f32 %v1224, 1.0
    %v1241 = vadd.f32 %v1225, 1.0
    %v1242 = vadd.f32 %v1226, 1.0
    %v1243 = vadd.f32 %v1227, 1.0
    %v1244 = vmul.f32 %v1180, %v1228
    %v1245 = vmul.f32 %v1181, %v1229
    %v1246 = vmul.f32 %v1182, %v1230
    %v1247 = vmul.f32 %v1183, %v1231
    %v1248 = vmul.f32 %v1184, %v1232
    %v1249 = vmul.f32 %v1185, %v1233
    %v1250 = vmul.f32 %v1186, %v1234
    %v1251 = vmul.f32 %v1187, %v1235
    %v1252 = vmul.f32 %v1188, %v1236
    %v1253 = vmul.f32 %v1189, %v1237
    %v1254 = vmul.f32 %v1190, %v1238
    %v1255 = vmul.f32 %v1191, %v1239
    %v1256 = vmul.f32 %v1192, %v1240
    %v1257 = vmul.f32 %v1193, %v1241
    %v1258 = vmul.f32 %v1194, %v1242
    %v1259 = vmul.f32 %v1195, %v1243
    %v1260 = vld [vmem:[%s4] sm:$0xf]
    %v1261 = vld [vmem:[%s4 + $0x4] sm:$0xf]
    %v1262 = vld [vmem:[%s4 + $0x8] sm:$0xf]
    %v1263 = vld [vmem:[%s4 + $0xc] sm:$0xf]
    %v1264 = vld [vmem:[%s4 + $0x10] sm:$0xf]
    %v1265 = vld [vmem:[%s4 + $0x14] sm:$0xf]
    %v1266 = vld [vmem:[%s4 + $0x18] sm:$0xf]
    %v1267 = vld [vmem:[%s4 + $0x1c] sm:$0xf]
    %v1268 = vld [vmem:[%s4 + $0x20] sm:$0xf]
    %v1269 = vld [vmem:[%s4 + $0x24] sm:$0xf]
    %v1270 = vld [vmem:[%s4 + $0x28] sm:$0xf]
    %v1271 = vld [vmem:[%s4 + $0x2c] sm:$0xf]
    %v1272 = vld [vmem:[%s4 + $0x30] sm:$0xf]
    %v1273 = vld [vmem:[%s4 + $0x34] sm:$0xf]
    %v1274 = vld [vmem:[%s4 + $0x38] sm:$0xf]
    %v1275 = vld [vmem:[%s4 + $0x3c] sm:$0xf]
    %v1276 = vld [vmem:[%s4 + $0x40] sm:$0xf]
    %v1277 = vld [vmem:[%s4 + $0x44] sm:$0xf]
    %v1278 = vld [vmem:[%s4 + $0x48] sm:$0xf]
    %v1279 = vld [vmem:[%s4 + $0x4c] sm:$0xf]
    %v1280 = vld [vmem:[%s4 + $0x50] sm:$0xf]
    %v1281 = vld [vmem:[%s4 + $0x54] sm:$0xf]
    %v1282 = vld [vmem:[%s4 + $0x58] sm:$0xf]
    %v1283 = vld [vmem:[%s4 + $0x5c] sm:$0xf]
    %v1284 = vld [vmem:[%s4 + $0x60] sm:$0xf]
    %v1285 = vld [vmem:[%s4 + $0x64] sm:$0xf]
    %v1286 = vld [vmem:[%s4 + $0x68] sm:$0xf]
    %v1287 = vld [vmem:[%s4 + $0x6c] sm:$0xf]
    %v1288 = vld [vmem:[%s4 + $0x70] sm:$0xf]
    %v1289 = vld [vmem:[%s4 + $0x74] sm:$0xf]
    %v1290 = vld [vmem:[%s4 + $0x78] sm:$0xf]
    %v1291 = vld [vmem:[%s4 + $0x7c] sm:$0xf]
    %v1292 = vld [vmem:[%s4 + $0x80] sm:$0xf]
    %v1293 = vld [vmem:[%s4 + $0x84] sm:$0xf]
    %v1294 = vld [vmem:[%s4 + $0x88] sm:$0xf]
    %v1295 = vld [vmem:[%s4 + $0x8c] sm:$0xf]
    %v1296 = vld [vmem:[%s4 + $0x90] sm:$0xf]
    %v1297 = vld [vmem:[%s4 + $0x94] sm:$0xf]
    %v1298 = vld [vmem:[%s4 + $0x98] sm:$0xf]
    %v1299 = vld [vmem:[%s4 + $0x9c] sm:$0xf]
    %v1300 = vld [vmem:[%s4 + $0xa0] sm:$0xf]
    %v1301 = vld [vmem:[%s4 + $0xa4] sm:$0xf]
    %v1302 = vld [vmem:[%s4 + $0xa8] sm:$0xf]
    %v1303 = vld [vmem:[%s4 + $0xac] sm:$0xf]
    %v1304 = vld [vmem:[%s4 + $0xb0] sm:$0xf]
    %v1305 = vld [vmem:[%s4 + $0xb4] sm:$0xf]
    %v1306 = vld [vmem:[%s4 + $0xb8] sm:$0xf]
    %v1307 = vld [vmem:[%s4 + $0xbc] sm:$0xf]
    %v1308 = vpack.c.bf16 %v1245, %v1244
    %v1309 = vpack.c.bf16 %v1247, %v1246
    %v1310 = vpack.c.bf16 %v1249, %v1248
    %v1311 = vpack.c.bf16 %v1251, %v1250
    %v1312 = vpack.c.bf16 %v1253, %v1252
    %v1313 = vpack.c.bf16 %v1255, %v1254
    %v1314 = vpack.c.bf16 %v1257, %v1256
    %v1315 = vpack.c.bf16 %v1259, %v1258
    %v1364 = vunpack.c.l.b16 %v1260
    %v1365 = vunpack.c.l.b16 %v1261
    %v1366 = vunpack.c.l.b16 %v1262
    %v1367 = vunpack.c.l.b16 %v1263
    %v1368 = vunpack.c.l.b16 %v1264
    %v1369 = vunpack.c.l.b16 %v1265
    %v1370 = vunpack.c.l.b16 %v1266
    %v1371 = vunpack.c.l.b16 %v1267
    %v1372 = vunpack.c.l.b16 %v1268
    %v1373 = vunpack.c.l.b16 %v1269
    %v1374 = vunpack.c.l.b16 %v1270
    %v1375 = vunpack.c.l.b16 %v1271
    %v1376 = vunpack.c.l.b16 %v1272
    %v1377 = vunpack.c.l.b16 %v1273
    %v1378 = vunpack.c.l.b16 %v1274
    %v1379 = vunpack.c.l.b16 %v1275
    %v1380 = vunpack.c.l.b16 %v1276
    %v1381 = vunpack.c.l.b16 %v1277
    %v1382 = vunpack.c.l.b16 %v1278
    %v1383 = vunpack.c.l.b16 %v1279
    %v1384 = vunpack.c.l.b16 %v1280
    %v1385 = vunpack.c.l.b16 %v1281
    %v1386 = vunpack.c.l.b16 %v1282
    %v1387 = vunpack.c.l.b16 %v1283
    %v1388 = vunpack.c.l.b16 %v1284
    %v1389 = vunpack.c.l.b16 %v1285
    %v1390 = vunpack.c.l.b16 %v1286
    %v1391 = vunpack.c.l.b16 %v1287
    %v1392 = vunpack.c.l.b16 %v1288
    %v1393 = vunpack.c.l.b16 %v1289
    %v1394 = vunpack.c.l.b16 %v1290
    %v1395 = vunpack.c.l.b16 %v1291
    %v1396 = vunpack.c.l.b16 %v1292
    %v1397 = vunpack.c.l.b16 %v1293
    %v1398 = vunpack.c.l.b16 %v1294
    %v1399 = vunpack.c.l.b16 %v1295
    %v1400 = vunpack.c.l.b16 %v1296
    %v1401 = vunpack.c.l.b16 %v1297
    %v1402 = vunpack.c.l.b16 %v1298
    %v1403 = vunpack.c.l.b16 %v1299
    %v1404 = vunpack.c.l.b16 %v1300
    %v1405 = vunpack.c.l.b16 %v1301
    %v1406 = vunpack.c.l.b16 %v1302
    %v1407 = vunpack.c.l.b16 %v1303
    %v1408 = vunpack.c.l.b16 %v1304
    %v1409 = vunpack.c.l.b16 %v1305
    %v1410 = vunpack.c.l.b16 %v1306
    %v1411 = vunpack.c.l.b16 %v1307
    %v1412 = vpack.c.b16 %v1365, %v1364
    %v1413 = vpack.c.b16 %v1367, %v1366
    %v1414 = vpack.c.b16 %v1369, %v1368
    %v1415 = vpack.c.b16 %v1371, %v1370
    %v1416 = vpack.c.b16 %v1373, %v1372
    %v1417 = vpack.c.b16 %v1375, %v1374
    %v1418 = vpack.c.b16 %v1377, %v1376
    %v1419 = vpack.c.b16 %v1379, %v1378
    %v1420 = vpack.c.b16 %v1381, %v1380
    %v1421 = vpack.c.b16 %v1383, %v1382
    %v1422 = vpack.c.b16 %v1385, %v1384
    %v1423 = vpack.c.b16 %v1387, %v1386
    %v1424 = vpack.c.b16 %v1389, %v1388
    %v1425 = vpack.c.b16 %v1391, %v1390
    %v1426 = vpack.c.b16 %v1393, %v1392
    %v1427 = vpack.c.b16 %v1395, %v1394
    %v1428 = vpack.c.b16 %v1397, %v1396
    %v1429 = vpack.c.b16 %v1399, %v1398
    %v1430 = vpack.c.b16 %v1401, %v1400
    %v1431 = vpack.c.b16 %v1403, %v1402
    %v1432 = vpack.c.b16 %v1405, %v1404
    %v1433 = vpack.c.b16 %v1407, %v1406
    %v1434 = vpack.c.b16 %v1409, %v1408
    %v1435 = vpack.c.b16 %v1411, %v1410
    %1460 = vmatprep.subr.bf16.mxu0 0
    %1461 = vmatpush1.bf16.msra.mxu0 %v1308
    %1462 = vmatprep.subr.bf16.mxu0 0
    %1463 = vmatpush1.bf16.msra.mxu0 %v1309
    %1464 = vmatprep.subr.bf16.mxu0 0
    %1465 = vmatpush1.bf16.msra.mxu0 %v1310
    %1466 = vmatprep.subr.bf16.mxu0 0
    %1467 = vmatpush1.bf16.msra.mxu0 %v1311
    %1468 = vmatprep.subr.bf16.mxu0 0
    %1469 = vmatpush1.bf16.msra.mxu0 %v1312
    %1470 = vmatprep.subr.bf16.mxu0 0
    %1471 = vmatpush1.bf16.msra.mxu0 %v1313
    %1472 = vmatprep.subr.bf16.mxu0 0
    %1473 = vmatpush1.bf16.msra.mxu0 %v1314
    %1474 = vmatprep.subr.bf16.mxu0 0
    %1475 = vmatpush1.bf16.msra.mxu0 %v1315
    %1476 = vmatprep.subr.bf16.mxu0 0
    %1477 = vmatpush1.bf16.msra.mxu0 0
    %1478 = vmatprep.subr.bf16.mxu0 0
    %1479 = vmatpush1.bf16.msra.mxu0 0
    %1480 = vmatprep.subr.bf16.mxu0 0
    %1481 = vmatpush1.bf16.msra.mxu0 0
    %1482 = vmatprep.subr.bf16.mxu0 0
    %1483 = vmatpush1.bf16.msra.mxu0 0
    %1484 = vmatprep.subr.bf16.mxu0 0
    %1485 = vmatpush1.bf16.msra.mxu0 0
    %1486 = vmatprep.subr.bf16.mxu0 0
    %1487 = vmatpush1.bf16.msra.mxu0 0
    %1488 = vmatprep.subr.bf16.mxu0 0
    %1489 = vmatpush1.bf16.msra.mxu0 0
    %1490 = vmatprep.subr.bf16.mxu0 0
    %1491 = vmatpush1.bf16.msra.mxu0 0
    %1492 = vmatprep.mubr.bf16.mxu0 0
    %1493 = vmatmul.mubr.bf16.gmra.mrb[0].mxu0 %v1412
    %v1494 = vpop.f32.mrb[0].mxu0
    %v1495 = vadd.f32 0.0, %v1494
    %v1496 = vpop.f32.mrb[0].mxu0
    %v1497 = vpop.f32.mrb[0].mxu0
    %v1498 = vadd.f32 0.0, %v1497
    %v1499 = vpop.f32.mrb[0].mxu0
    %1500 = vmatprep.mubr.bf16.mxu0 0
    %1501 = vmatmul.mubr.bf16.gmra.mrb[0].mxu0 %v1413
    %v1502 = vpop.f32.mrb[0].mxu0
    %v1503 = vadd.f32 0.0, %v1502
    %v1504 = vpop.f32.mrb[0].mxu0
    %v1505 = vpop.f32.mrb[0].mxu0
    %v1506 = vadd.f32 0.0, %v1505
    %v1507 = vpop.f32.mrb[0].mxu0
    %1508 = vmatprep.mubr.bf16.mxu0 0
    %1509 = vmatmul.mubr.bf16.gmra.mrb[0].mxu0 %v1414
    %v1510 = vpop.f32.mrb[0].mxu0
    %v1511 = vadd.f32 0.0, %v1510
    %v1512 = vpop.f32.mrb[0].mxu0
    %v1513 = vpop.f32.mrb[0].mxu0
    %v1514 = vadd.f32 0.0, %v1513
    %v1515 = vpop.f32.mrb[0].mxu0
    %1516 = vmatprep.mubr.bf16.mxu0 0
    %1517 = vmatmul.mubr.bf16.gmra.mrb[0].mxu0 %v1415
    %v1518 = vpop.f32.mrb[0].mxu0
    %v1519 = vadd.f32 0.0, %v1518
    %v1520 = vpop.f32.mrb[0].mxu0
    %v1521 = vpop.f32.mrb[0].mxu0
    %v1522 = vadd.f32 0.0, %v1521
    %v1523 = vpop.f32.mrb[0].mxu0
    %1524 = vmatprep.mubr.bf16.mxu0 0
    %1525 = vmatmul.mubr.bf16.gmra.mrb[0].mxu0 %v1416
    %v1526 = vpop.f32.mrb[0].mxu0
    %v1527 = vadd.f32 0.0, %v1526
    %v1528 = vpop.f32.mrb[0].mxu0
    %v1529 = vpop.f32.mrb[0].mxu0
    %v1530 = vadd.f32 0.0, %v1529
    %v1531 = vpop.f32.mrb[0].mxu0
    %1532 = vmatprep.mubr.bf16.mxu0 0
    %1533 = vmatmul.mubr.bf16.gmra.mrb[0].mxu0 %v1417
    %v1534 = vpop.f32.mrb[0].mxu0
    %v1535 = vadd.f32 0.0, %v1534
    %v1536 = vpop.f32.mrb[0].mxu0
    %v1537 = vpop.f32.mrb[0].mxu0
    %v1538 = vadd.f32 0.0, %v1537
    %v1539 = vpop.f32.mrb[0].mxu0
    %1540 = vmatprep.mubr.bf16.mxu0 0
    %1541 = vmatmul.mubr.bf16.gmra.mrb[0].mxu0 %v1418
    %v1542 = vpop.f32.mrb[0].mxu0
    %v1543 = vadd.f32 0.0, %v1542
    %v1544 = vpop.f32.mrb[0].mxu0
    %v1545 = vpop.f32.mrb[0].mxu0
    %v1546 = vadd.f32 0.0, %v1545
    %v1547 = vpop.f32.mrb[0].mxu0
    %1548 = vmatprep.mubr.bf16.mxu0 0
    %1549 = vmatmul.mubr.bf16.gmra.mrb[0].mxu0 %v1419
    %v1550 = vpop.f32.mrb[0].mxu0
    %v1551 = vadd.f32 0.0, %v1550
    %v1552 = vpop.f32.mrb[0].mxu0
    %v1553 = vpop.f32.mrb[0].mxu0
    %v1554 = vadd.f32 0.0, %v1553
    %v1555 = vpop.f32.mrb[0].mxu0
    %1556 = vmatprep.mubr.bf16.mxu0 0
    %1557 = vmatmul.mubr.bf16.gmra.mrb[0].mxu0 %v1420
    %v1558 = vpop.f32.mrb[0].mxu0
    %v1559 = vadd.f32 0.0, %v1558
    %v1560 = vpop.f32.mrb[0].mxu0
    %v1561 = vpop.f32.mrb[0].mxu0
    %v1562 = vadd.f32 0.0, %v1561
    %v1563 = vpop.f32.mrb[0].mxu0
    %1564 = vmatprep.mubr.bf16.mxu0 0
    %1565 = vmatmul.mubr.bf16.gmra.mrb[0].mxu0 %v1421
    %v1566 = vpop.f32.mrb[0].mxu0
    %v1567 = vadd.f32 0.0, %v1566
    %v1568 = vpop.f32.mrb[0].mxu0
    %v1569 = vpop.f32.mrb[0].mxu0
    %v1570 = vadd.f32 0.0, %v1569
    %v1571 = vpop.f32.mrb[0].mxu0
    %1572 = vmatprep.mubr.bf16.mxu0 0
    %1573 = vmatmul.mubr.bf16.gmra.mrb[0].mxu0 %v1422
    %v1574 = vpop.f32.mrb[0].mxu0
    %v1575 = vadd.f32 0.0, %v1574
    %v1576 = vpop.f32.mrb[0].mxu0
    %v1577 = vpop.f32.mrb[0].mxu0
    %v1578 = vadd.f32 0.0, %v1577
    %v1579 = vpop.f32.mrb[0].mxu0
    %1580 = vmatprep.mubr.bf16.mxu0 0
    %1581 = vmatmul.mubr.bf16.gmra.mrb[0].mxu0 %v1423
    %v1582 = vpop.f32.mrb[0].mxu0
    %v1583 = vadd.f32 0.0, %v1582
    %v1584 = vpop.f32.mrb[0].mxu0
    %v1585 = vpop.f32.mrb[0].mxu0
    %v1586 = vadd.f32 0.0, %v1585
    %v1587 = vpop.f32.mrb[0].mxu0
    %1588 = vmatprep.mubr.bf16.mxu0 0
    %1589 = vmatmul.mubr.bf16.gmra.mrb[0].mxu0 %v1424
    %v1590 = vpop.f32.mrb[0].mxu0
    %v1591 = vadd.f32 0.0, %v1590
    %v1592 = vpop.f32.mrb[0].mxu0
    %v1593 = vpop.f32.mrb[0].mxu0
    %v1594 = vadd.f32 0.0, %v1593
    %v1595 = vpop.f32.mrb[0].mxu0
    %1596 = vmatprep.mubr.bf16.mxu0 0
    %1597 = vmatmul.mubr.bf16.gmra.mrb[0].mxu0 %v1425
    %v1598 = vpop.f32.mrb[0].mxu0
    %v1599 = vadd.f32 0.0, %v1598
    %v1600 = vpop.f32.mrb[0].mxu0
    %v1601 = vpop.f32.mrb[0].mxu0
    %v1602 = vadd.f32 0.0, %v1601
    %v1603 = vpop.f32.mrb[0].mxu0
    %1604 = vmatprep.mubr.bf16.mxu0 0
    %1605 = vmatmul.mubr.bf16.gmra.mrb[0].mxu0 %v1426
    %v1606 = vpop.f32.mrb[0].mxu0
    %v1607 = vadd.f32 0.0, %v1606
    %v1608 = vpop.f32.mrb[0].mxu0
    %v1609 = vpop.f32.mrb[0].mxu0
    %v1610 = vadd.f32 0.0, %v1609
    %v1611 = vpop.f32.mrb[0].mxu0
    %1612 = vmatprep.mubr.bf16.mxu0 0
    %1613 = vmatmul.mubr.bf16.gmra.mrb[0].mxu0 %v1427
    %v1614 = vpop.f32.mrb[0].mxu0
    %v1615 = vadd.f32 0.0, %v1614
    %v1616 = vpop.f32.mrb[0].mxu0
    %v1617 = vpop.f32.mrb[0].mxu0
    %v1618 = vadd.f32 0.0, %v1617
    %v1619 = vpop.f32.mrb[0].mxu0
    %1620 = vmatprep.mubr.bf16.mxu0 0
    %1621 = vmatmul.mubr.bf16.gmra.mrb[0].mxu0 %v1428
    %v1622 = vpop.f32.mrb[0].mxu0
    %v1623 = vadd.f32 0.0, %v1622
    %v1624 = vpop.f32.mrb[0].mxu0
    %v1625 = vpop.f32.mrb[0].mxu0
    %v1626 = vadd.f32 0.0, %v1625
    %v1627 = vpop.f32.mrb[0].mxu0
    %1628 = vmatprep.mubr.bf16.mxu0 0
    %1629 = vmatmul.mubr.bf16.gmra.mrb[0].mxu0 %v1429
    %v1630 = vpop.f32.mrb[0].mxu0
    %v1631 = vadd.f32 0.0, %v1630
    %v1632 = vpop.f32.mrb[0].mxu0
    %v1633 = vpop.f32.mrb[0].mxu0
    %v1634 = vadd.f32 0.0, %v1633
    %v1635 = vpop.f32.mrb[0].mxu0
    %1636 = vmatprep.mubr.bf16.mxu0 0
    %1637 = vmatmul.mubr.bf16.gmra.mrb[0].mxu0 %v1430
    %v1638 = vpop.f32.mrb[0].mxu0
    %v1639 = vadd.f32 0.0, %v1638
    %v1640 = vpop.f32.mrb[0].mxu0
    %v1641 = vpop.f32.mrb[0].mxu0
    %v1642 = vadd.f32 0.0, %v1641
    %v1643 = vpop.f32.mrb[0].mxu0
    %1644 = vmatprep.mubr.bf16.mxu0 0
    %1645 = vmatmul.mubr.bf16.gmra.mrb[0].mxu0 %v1431
    %v1646 = vpop.f32.mrb[0].mxu0
    %v1647 = vadd.f32 0.0, %v1646
    %v1648 = vpop.f32.mrb[0].mxu0
    %v1649 = vpop.f32.mrb[0].mxu0
    %v1650 = vadd.f32 0.0, %v1649
    %v1651 = vpop.f32.mrb[0].mxu0
    %1652 = vmatprep.mubr.bf16.mxu0 0
    %1653 = vmatmul.mubr.bf16.gmra.mrb[0].mxu0 %v1432
    %v1654 = vpop.f32.mrb[0].mxu0
    %v1655 = vadd.f32 0.0, %v1654
    %v1656 = vpop.f32.mrb[0].mxu0
    %v1657 = vpop.f32.mrb[0].mxu0
    %v1658 = vadd.f32 0.0, %v1657
    %v1659 = vpop.f32.mrb[0].mxu0
    %1660 = vmatprep.mubr.bf16.mxu0 0
    %1661 = vmatmul.mubr.bf16.gmra.mrb[0].mxu0 %v1433
    %v1662 = vpop.f32.mrb[0].mxu0
    %v1663 = vadd.f32 0.0, %v1662
    %v1664 = vpop.f32.mrb[0].mxu0
    %v1665 = vpop.f32.mrb[0].mxu0
    %v1666 = vadd.f32 0.0, %v1665
    %v1667 = vpop.f32.mrb[0].mxu0
    %1668 = vmatprep.mubr.bf16.mxu0 0
    %1669 = vmatmul.mubr.bf16.gmra.mrb[0].mxu0 %v1434
    %v1670 = vpop.f32.mrb[0].mxu0
    %v1671 = vadd.f32 0.0, %v1670
    %v1672 = vpop.f32.mrb[0].mxu0
    %v1673 = vpop.f32.mrb[0].mxu0
    %v1674 = vadd.f32 0.0, %v1673
    %v1675 = vpop.f32.mrb[0].mxu0
    %1676 = vmatprep.mubr.bf16.mxu0 0
    %1677 = vmatmul.mubr.bf16.gmra.mrb[0].mxu0 %v1435
    %v1678 = vpop.f32.mrb[0].mxu0
    %v1679 = vadd.f32 0.0, %v1678
    %v1680 = vpop.f32.mrb[0].mxu0
    %v1681 = vpop.f32.mrb[0].mxu0
    %v1682 = vadd.f32 0.0, %v1681
    %v1683 = vpop.f32.mrb[0].mxu0
    %1684 = vdwg.mxu0
    %v1685 = vmax.f32 %v1495, %v1559
    %v1686 = vmax.f32 %v1498, %v1562
    %v1687 = vmax.f32 %v1503, %v1567
    %v1688 = vmax.f32 %v1506, %v1570
    %v1689 = vmax.f32 %v1511, %v1575
    %v1690 = vmax.f32 %v1514, %v1578
    %v1691 = vmax.f32 %v1519, %v1583
    %v1692 = vmax.f32 %v1522, %v1586
    %v1693 = vmax.f32 %v1527, %v1591
    %v1694 = vmax.f32 %v1530, %v1594
    %v1695 = vmax.f32 %v1535, %v1599
    %v1696 = vmax.f32 %v1538, %v1602
    %v1697 = vmax.f32 %v1543, %v1607
    %v1698 = vmax.f32 %v1546, %v1610
    %v1699 = vmax.f32 %v1551, %v1615
    %v1700 = vmax.f32 %v1554, %v1618
    %v1701 = vmax.f32 %v1685, %v1623
    %v1702 = vmax.f32 %v1686, %v1626
    %v1703 = vmax.f32 %v1687, %v1631
    %v1704 = vmax.f32 %v1688, %v1634
    %v1705 = vmax.f32 %v1689, %v1639
    %v1706 = vmax.f32 %v1690, %v1642
    %v1707 = vmax.f32 %v1691, %v1647
    %v1708 = vmax.f32 %v1692, %v1650
    %v1709 = vmax.f32 %v1693, %v1655
    %v1710 = vmax.f32 %v1694, %v1658
    %v1711 = vmax.f32 %v1695, %v1663
    %v1712 = vmax.f32 %v1696, %v1666
    %v1713 = vmax.f32 %v1697, %v1671
    %v1714 = vmax.f32 %v1698, %v1674
    %v1715 = vmax.f32 %v1699, %v1679
    %v1716 = vmax.f32 %v1700, %v1682
    %v1717 = vsub.f32 %v1495, %v1701
    %v1718 = vsub.f32 %v1498, %v1702
    %v1719 = vsub.f32 %v1503, %v1703
    %v1720 = vsub.f32 %v1506, %v1704
    %v1721 = vsub.f32 %v1511, %v1705
    %v1722 = vsub.f32 %v1514, %v1706
    %v1723 = vsub.f32 %v1519, %v1707
    %v1724 = vsub.f32 %v1522, %v1708
    %v1725 = vsub.f32 %v1527, %v1709
    %v1726 = vsub.f32 %v1530, %v1710
    %v1727 = vsub.f32 %v1535, %v1711
    %v1728 = vsub.f32 %v1538, %v1712
    %v1729 = vsub.f32 %v1543, %v1713
    %v1730 = vsub.f32 %v1546, %v1714
    %v1731 = vsub.f32 %v1551, %v1715
    %v1732 = vsub.f32 %v1554, %v1716
    %v1733 = vmul.f32 %v1717, 1.442695
    %v1734 = vpow.pop %v1733
    %v1735 = vmul.f32 %v1718, 1.442695
    %v1736 = vpow.pop %v1735
    %v1737 = vmul.f32 %v1719, 1.442695
    %v1738 = vpow.pop %v1737
    %v1739 = vmul.f32 %v1720, 1.442695
    %v1740 = vpow.pop %v1739
    %v1741 = vmul.f32 %v1721, 1.442695
    %v1742 = vpow.pop %v1741
    %v1743 = vmul.f32 %v1722, 1.442695
    %v1744 = vpow.pop %v1743
    %v1745 = vmul.f32 %v1723, 1.442695
    %v1746 = vpow.pop %v1745
    %v1747 = vmul.f32 %v1724, 1.442695
    %v1748 = vpow.pop %v1747
    %v1749 = vmul.f32 %v1725, 1.442695
    %v1750 = vpow.pop %v1749
    %v1751 = vmul.f32 %v1726, 1.442695
    %v1752 = vpow.pop %v1751
    %v1753 = vmul.f32 %v1727, 1.442695
    %v1754 = vpow.pop %v1753
    %v1755 = vmul.f32 %v1728, 1.442695
    %v1756 = vpow.pop %v1755
    %v1757 = vmul.f32 %v1729, 1.442695
    %v1758 = vpow.pop %v1757
    %v1759 = vmul.f32 %v1730, 1.442695
    %v1760 = vpow.pop %v1759
    %v1761 = vmul.f32 %v1731, 1.442695
    %v1762 = vpow.pop %v1761
    %v1763 = vmul.f32 %v1732, 1.442695
    %v1764 = vpow.pop %v1763
    %v1765 = vsub.f32 %v1559, %v1701
    %v1766 = vsub.f32 %v1562, %v1702
    %v1767 = vsub.f32 %v1567, %v1703
    %v1768 = vsub.f32 %v1570, %v1704
    %v1769 = vsub.f32 %v1575, %v1705
    %v1770 = vsub.f32 %v1578, %v1706
    %v1771 = vsub.f32 %v1583, %v1707
    %v1772 = vsub.f32 %v1586, %v1708
    %v1773 = vsub.f32 %v1591, %v1709
    %v1774 = vsub.f32 %v1594, %v1710
    %v1775 = vsub.f32 %v1599, %v1711
    %v1776 = vsub.f32 %v1602, %v1712
    %v1777 = vsub.f32 %v1607, %v1713
    %v1778 = vsub.f32 %v1610, %v1714
    %v1779 = vsub.f32 %v1615, %v1715
    %v1780 = vsub.f32 %v1618, %v1716
    %v1781 = vmul.f32 %v1765, 1.442695
    %v1782 = vpow.pop %v1781
    %v1783 = vmul.f32 %v1766, 1.442695
    %v1784 = vpow.pop %v1783
    %v1785 = vmul.f32 %v1767, 1.442695
    %v1786 = vpow.pop %v1785
    %v1787 = vmul.f32 %v1768, 1.442695
    %v1788 = vpow.pop %v1787
    %v1789 = vmul.f32 %v1769, 1.442695
    %v1790 = vpow.pop %v1789
    %v1791 = vmul.f32 %v1770, 1.442695
    %v1792 = vpow.pop %v1791
    %v1793 = vmul.f32 %v1771, 1.442695
    %v1794 = vpow.pop %v1793
    %v1795 = vmul.f32 %v1772, 1.442695
    %v1796 = vpow.pop %v1795
    %v1797 = vmul.f32 %v1773, 1.442695
    %v1798 = vpow.pop %v1797
    %v1799 = vmul.f32 %v1774, 1.442695
    %v1800 = vpow.pop %v1799
    %v1801 = vmul.f32 %v1775, 1.442695
    %v1802 = vpow.pop %v1801
    %v1803 = vmul.f32 %v1776, 1.442695
    %v1804 = vpow.pop %v1803
    %v1805 = vmul.f32 %v1777, 1.442695
    %v1806 = vpow.pop %v1805
    %v1807 = vmul.f32 %v1778, 1.442695
    %v1808 = vpow.pop %v1807
    %v1809 = vmul.f32 %v1779, 1.442695
    %v1810 = vpow.pop %v1809
    %v1811 = vmul.f32 %v1780, 1.442695
    %v1812 = vpow.pop %v1811
    %v1813 = vsub.f32 %v1623, %v1701
    %v1814 = vsub.f32 %v1626, %v1702
    %v1815 = vsub.f32 %v1631, %v1703
    %v1816 = vsub.f32 %v1634, %v1704
    %v1817 = vsub.f32 %v1639, %v1705
    %v1818 = vsub.f32 %v1642, %v1706
    %v1819 = vsub.f32 %v1647, %v1707
    %v1820 = vsub.f32 %v1650, %v1708
    %v1821 = vsub.f32 %v1655, %v1709
    %v1822 = vsub.f32 %v1658, %v1710
    %v1823 = vsub.f32 %v1663, %v1711
    %v1824 = vsub.f32 %v1666, %v1712
    %v1825 = vsub.f32 %v1671, %v1713
    %v1826 = vsub.f32 %v1674, %v1714
    %v1827 = vsub.f32 %v1679, %v1715
    %v1828 = vsub.f32 %v1682, %v1716
    %v1829 = vmul.f32 %v1813, 1.442695
    %v1830 = vpow.pop %v1829
    %v1831 = vmul.f32 %v1814, 1.442695
    %v1832 = vpow.pop %v1831
    %v1833 = vmul.f32 %v1815, 1.442695
    %v1834 = vpow.pop %v1833
    %v1835 = vmul.f32 %v1816, 1.442695
    %v1836 = vpow.pop %v1835
    %v1837 = vmul.f32 %v1817, 1.442695
    %v1838 = vpow.pop %v1837
    %v1839 = vmul.f32 %v1818, 1.442695
    %v1840 = vpow.pop %v1839
    %v1841 = vmul.f32 %v1819, 1.442695
    %v1842 = vpow.pop %v1841
    %v1843 = vmul.f32 %v1820, 1.442695
    %v1844 = vpow.pop %v1843
    %v1845 = vmul.f32 %v1821, 1.442695
    %v1846 = vpow.pop %v1845
    %v1847 = vmul.f32 %v1822, 1.442695
    %v1848 = vpow.pop %v1847
    %v1849 = vmul.f32 %v1823, 1.442695
    %v1850 = vpow.pop %v1849
    %v1851 = vmul.f32 %v1824, 1.442695
    %v1852 = vpow.pop %v1851
    %v1853 = vmul.f32 %v1825, 1.442695
    %v1854 = vpow.pop %v1853
    %v1855 = vmul.f32 %v1826, 1.442695
    %v1856 = vpow.pop %v1855
    %v1857 = vmul.f32 %v1827, 1.442695
    %v1858 = vpow.pop %v1857
    %v1859 = vmul.f32 %v1828, 1.442695
    %v1860 = vpow.pop %v1859
    %v1861 = vadd.f32 %v1734, %v1782
    %v1862 = vadd.f32 %v1736, %v1784
    %v1863 = vadd.f32 %v1738, %v1786
    %v1864 = vadd.f32 %v1740, %v1788
    %v1865 = vadd.f32 %v1742, %v1790
    %v1866 = vadd.f32 %v1744, %v1792
    %v1867 = vadd.f32 %v1746, %v1794
    %v1868 = vadd.f32 %v1748, %v1796
    %v1869 = vadd.f32 %v1750, %v1798
    %v1870 = vadd.f32 %v1752, %v1800
    %v1871 = vadd.f32 %v1754, %v1802
    %v1872 = vadd.f32 %v1756, %v1804
    %v1873 = vadd.f32 %v1758, %v1806
    %v1874 = vadd.f32 %v1760, %v1808
    %v1875 = vadd.f32 %v1762, %v1810
    %v1876 = vadd.f32 %v1764, %v1812
    %v1877 = vadd.f32 %v1861, %v1830
    %v1878 = vadd.f32 %v1862, %v1832
    %v1879 = vadd.f32 %v1863, %v1834
    %v1880 = vadd.f32 %v1864, %v1836
    %v1881 = vadd.f32 %v1865, %v1838
    %v1882 = vadd.f32 %v1866, %v1840
    %v1883 = vadd.f32 %v1867, %v1842
    %v1884 = vadd.f32 %v1868, %v1844
    %v1885 = vadd.f32 %v1869, %v1846
    %v1886 = vadd.f32 %v1870, %v1848
    %v1887 = vadd.f32 %v1871, %v1850
    %v1888 = vadd.f32 %v1872, %v1852
    %v1889 = vadd.f32 %v1873, %v1854
    %v1890 = vadd.f32 %v1874, %v1856
    %v1891 = vadd.f32 %v1875, %v1858
    %v1892 = vadd.f32 %v1876, %v1860
    %v1893 = vrcp.pop %v1877
    %v1894 = vmul.f32 1.0, %v1893
    %v1895 = vrcp.pop %v1878
    %v1896 = vmul.f32 1.0, %v1895
    %v1897 = vrcp.pop %v1879
    %v1898 = vmul.f32 1.0, %v1897
    %v1899 = vrcp.pop %v1880
    %v1900 = vmul.f32 1.0, %v1899
    %v1901 = vrcp.pop %v1881
    %v1902 = vmul.f32 1.0, %v1901
    %v1903 = vrcp.pop %v1882
    %v1904 = vmul.f32 1.0, %v1903
    %v1905 = vrcp.pop %v1883
    %v1906 = vmul.f32 1.0, %v1905
    %v1907 = vrcp.pop %v1884
    %v1908 = vmul.f32 1.0, %v1907
    %v1909 = vrcp.pop %v1885
    %v1910 = vmul.f32 1.0, %v1909
    %v1911 = vrcp.pop %v1886
    %v1912 = vmul.f32 1.0, %v1911
    %v1913 = vrcp.pop %v1887
    %v1914 = vmul.f32 1.0, %v1913
    %v1915 = vrcp.pop %v1888
    %v1916 = vmul.f32 1.0, %v1915
    %v1917 = vrcp.pop %v1889
    %v1918 = vmul.f32 1.0, %v1917
    %v1919 = vrcp.pop %v1890
    %v1920 = vmul.f32 1.0, %v1919
    %v1921 = vrcp.pop %v1891
    %v1922 = vmul.f32 1.0, %v1921
    %v1923 = vrcp.pop %v1892
    %v1924 = vmul.f32 1.0, %v1923
    %v1925 = vmul.f32 %v1734, %v1894
    %v1926 = vmul.f32 %v1736, %v1896
    %v1927 = vmul.f32 %v1738, %v1898
    %v1928 = vmul.f32 %v1740, %v1900
    %v1929 = vmul.f32 %v1742, %v1902
    %v1930 = vmul.f32 %v1744, %v1904
    %v1931 = vmul.f32 %v1746, %v1906
    %v1932 = vmul.f32 %v1748, %v1908
    %v1933 = vmul.f32 %v1750, %v1910
    %v1934 = vmul.f32 %v1752, %v1912
    %v1935 = vmul.f32 %v1754, %v1914
    %v1936 = vmul.f32 %v1756, %v1916
    %v1937 = vmul.f32 %v1758, %v1918
    %v1938 = vmul.f32 %v1760, %v1920
    %v1939 = vmul.f32 %v1762, %v1922
    %v1940 = vmul.f32 %v1764, %v1924
    %v1941 = vmul.f32 %v1782, %v1894
    %v1942 = vmul.f32 %v1784, %v1896
    %v1943 = vmul.f32 %v1786, %v1898
    %v1944 = vmul.f32 %v1788, %v1900
    %v1945 = vmul.f32 %v1790, %v1902
    %v1946 = vmul.f32 %v1792, %v1904
    %v1947 = vmul.f32 %v1794, %v1906
    %v1948 = vmul.f32 %v1796, %v1908
    %v1949 = vmul.f32 %v1798, %v1910
    %v1950 = vmul.f32 %v1800, %v1912
    %v1951 = vmul.f32 %v1802, %v1914
    %v1952 = vmul.f32 %v1804, %v1916
    %v1953 = vmul.f32 %v1806, %v1918
    %v1954 = vmul.f32 %v1808, %v1920
    %v1955 = vmul.f32 %v1810, %v1922
    %v1956 = vmul.f32 %v1812, %v1924
    %v1957 = vmul.f32 %v1830, %v1894
    %v1958 = vmul.f32 %v1832, %v1896
    %v1959 = vmul.f32 %v1834, %v1898
    %v1960 = vmul.f32 %v1836, %v1900
    %v1961 = vmul.f32 %v1838, %v1902
    %v1962 = vmul.f32 %v1840, %v1904
    %v1963 = vmul.f32 %v1842, %v1906
    %v1964 = vmul.f32 %v1844, %v1908
    %v1965 = vmul.f32 %v1846, %v1910
    %v1966 = vmul.f32 %v1848, %v1912
    %v1967 = vmul.f32 %v1850, %v1914
    %v1968 = vmul.f32 %v1852, %v1916
    %v1969 = vmul.f32 %v1854, %v1918
    %v1970 = vmul.f32 %v1856, %v1920
    %v1971 = vmul.f32 %v1858, %v1922
    %v1972 = vmul.f32 %v1860, %v1924
    %1974 = vset.pattern.permute.xlu0 0
    %1975 = vperm.xlu0 %1974, %v1925
    %v1976 = vpop.permute.xlu0 %1975
    %1979 = vset.pattern.permute.xlu0 0
    %1980 = vperm.xlu0 %1979, %v1926
    %v1981 = vpop.permute.xlu0 %1980
    %1984 = vset.pattern.permute.xlu0 0
    %1985 = vperm.xlu0 %1984, %v1927
    %v1986 = vpop.permute.xlu0 %1985
    %1989 = vset.pattern.permute.xlu0 0
    %1990 = vperm.xlu0 %1989, %v1928
    %v1991 = vpop.permute.xlu0 %1990
    %v1993 = vmul.f32 %v1976, %v853
    %v1994 = vmul.f32 %v1981, %v854
    %v1995 = vmul.f32 %v1986, %v855
    %v1996 = vmul.f32 %v1991, %v856
    %1998 = vset.pattern.permute.xlu0 0
    %1999 = vperm.xlu0 %1998, %v1941
    %v2000 = vpop.permute.xlu0 %1999
    %2003 = vset.pattern.permute.xlu0 0
    %2004 = vperm.xlu0 %2003, %v1942
    %v2005 = vpop.permute.xlu0 %2004
    %2008 = vset.pattern.permute.xlu0 0
    %2009 = vperm.xlu0 %2008, %v1943
    %v2010 = vpop.permute.xlu0 %2009
    %2013 = vset.pattern.permute.xlu0 0
    %2014 = vperm.xlu0 %2013, %v1944
    %v2015 = vpop.permute.xlu0 %2014
    %v2017 = vmul.f32 %v2000, %v867
    %v2018 = vmul.f32 %v2005, %v868
    %v2019 = vmul.f32 %v2010, %v869
    %v2020 = vmul.f32 %v2015, %v870
    %v2021 = vadd.f32 %v1993, %v2017
    %v2022 = vadd.f32 %v1994, %v2018
    %v2023 = vadd.f32 %v1995, %v2019
    %v2024 = vadd.f32 %v1996, %v2020
    %2026 = vset.pattern.permute.xlu0 0
    %2027 = vperm.xlu0 %2026, %v1957
    %v2028 = vpop.permute.xlu0 %2027
    %2031 = vset.pattern.permute.xlu0 0
    %2032 = vperm.xlu0 %2031, %v1958
    %v2033 = vpop.permute.xlu0 %2032
    %2036 = vset.pattern.permute.xlu0 0
    %2037 = vperm.xlu0 %2036, %v1959
    %v2038 = vpop.permute.xlu0 %2037
    %2041 = vset.pattern.permute.xlu0 0
    %2042 = vperm.xlu0 %2041, %v1960
    %v2043 = vpop.permute.xlu0 %2042
    %v2045 = vmul.f32 %v2028, %v781
    %v2046 = vmul.f32 %v2033, %v784
    %v2047 = vmul.f32 %v2038, %v789
    %v2048 = vmul.f32 %v2043, %v792
    %v2049 = vadd.f32 %v2021, %v2045
    %v2050 = vadd.f32 %v2022, %v2046
    %v2051 = vadd.f32 %v2023, %v2047
    %v2052 = vadd.f32 %v2024, %v2048
    %v2053 = vpack.c.bf16 %v2050, %v2049
    %v2054 = vpack.c.bf16 %v2052, %v2051
    %2056 = vset.pattern.permute.xlu0 0
    %2057 = vperm.xlu0 %2056, %v1929
    %v2058 = vpop.permute.xlu0 %2057
    %2061 = vset.pattern.permute.xlu0 0
    %2062 = vperm.xlu0 %2061, %v1930
    %v2063 = vpop.permute.xlu0 %2062
    %2066 = vset.pattern.permute.xlu0 0
    %2067 = vperm.xlu0 %2066, %v1931
    %v2068 = vpop.permute.xlu0 %2067
    %2071 = vset.pattern.permute.xlu0 0
    %2072 = vperm.xlu0 %2071, %v1932
    %v2073 = vpop.permute.xlu0 %2072
    %v2075 = vmul.f32 %v2058, %v897
    %v2076 = vmul.f32 %v2063, %v898
    %v2077 = vmul.f32 %v2068, %v899
    %v2078 = vmul.f32 %v2073, %v900
    %2080 = vset.pattern.permute.xlu0 0
    %2081 = vperm.xlu0 %2080, %v1945
    %v2082 = vpop.permute.xlu0 %2081
    %2085 = vset.pattern.permute.xlu0 0
    %2086 = vperm.xlu0 %2085, %v1946
    %v2087 = vpop.permute.xlu0 %2086
    %2090 = vset.pattern.permute.xlu0 0
    %2091 = vperm.xlu0 %2090, %v1947
    %v2092 = vpop.permute.xlu0 %2091
    %2095 = vset.pattern.permute.xlu0 0
    %2096 = vperm.xlu0 %2095, %v1948
    %v2097 = vpop.permute.xlu0 %2096
    %v2099 = vmul.f32 %v2082, %v911
    %v2100 = vmul.f32 %v2087, %v912
    %v2101 = vmul.f32 %v2092, %v913
    %v2102 = vmul.f32 %v2097, %v914
    %v2103 = vadd.f32 %v2075, %v2099
    %v2104 = vadd.f32 %v2076, %v2100
    %v2105 = vadd.f32 %v2077, %v2101
    %v2106 = vadd.f32 %v2078, %v2102
    %2108 = vset.pattern.permute.xlu0 0
    %2109 = vperm.xlu0 %2108, %v1961
    %v2110 = vpop.permute.xlu0 %2109
    %2113 = vset.pattern.permute.xlu0 0
    %2114 = vperm.xlu0 %2113, %v1962
    %v2115 = vpop.permute.xlu0 %2114
    %2118 = vset.pattern.permute.xlu0 0
    %2119 = vperm.xlu0 %2118, %v1963
    %v2120 = vpop.permute.xlu0 %2119
    %2123 = vset.pattern.permute.xlu0 0
    %2124 = vperm.xlu0 %2123, %v1964
    %v2125 = vpop.permute.xlu0 %2124
    %v2127 = vmul.f32 %v2110, %v797
    %v2128 = vmul.f32 %v2115, %v800
    %v2129 = vmul.f32 %v2120, %v805
    %v2130 = vmul.f32 %v2125, %v808
    %v2131 = vadd.f32 %v2103, %v2127
    %v2132 = vadd.f32 %v2104, %v2128
    %v2133 = vadd.f32 %v2105, %v2129
    %v2134 = vadd.f32 %v2106, %v2130
    %v2135 = vpack.c.bf16 %v2132, %v2131
    %v2136 = vpack.c.bf16 %v2134, %v2133
    %2138 = vset.pattern.permute.xlu0 0
    %2139 = vperm.xlu0 %2138, %v1933
    %v2140 = vpop.permute.xlu0 %2139
    %2143 = vset.pattern.permute.xlu0 0
    %2144 = vperm.xlu0 %2143, %v1934
    %v2145 = vpop.permute.xlu0 %2144
    %2148 = vset.pattern.permute.xlu0 0
    %2149 = vperm.xlu0 %2148, %v1935
    %v2150 = vpop.permute.xlu0 %2149
    %2153 = vset.pattern.permute.xlu0 0
    %2154 = vperm.xlu0 %2153, %v1936
    %v2155 = vpop.permute.xlu0 %2154
    %v2157 = vmul.f32 %v2140, %v939
    %v2158 = vmul.f32 %v2145, %v940
    %v2159 = vmul.f32 %v2150, %v941
    %v2160 = vmul.f32 %v2155, %v942
    %2162 = vset.pattern.permute.xlu0 0
    %2163 = vperm.xlu0 %2162, %v1949
    %v2164 = vpop.permute.xlu0 %2163
    %2167 = vset.pattern.permute.xlu0 0
    %2168 = vperm.xlu0 %2167, %v1950
    %v2169 = vpop.permute.xlu0 %2168
    %2172 = vset.pattern.permute.xlu0 0
    %2173 = vperm.xlu0 %2172, %v1951
    %v2174 = vpop.permute.xlu0 %2173
    %2177 = vset.pattern.permute.xlu0 0
    %2178 = vperm.xlu0 %2177, %v1952
    %v2179 = vpop.permute.xlu0 %2178
    %v2181 = vmul.f32 %v2164, %v951
    %v2182 = vmul.f32 %v2169, %v952
    %v2183 = vmul.f32 %v2174, %v953
    %v2184 = vmul.f32 %v2179, %v954
    %v2185 = vadd.f32 %v2157, %v2181
    %v2186 = vadd.f32 %v2158, %v2182
    %v2187 = vadd.f32 %v2159, %v2183
    %v2188 = vadd.f32 %v2160, %v2184
    %2190 = vset.pattern.permute.xlu0 0
    %2191 = vperm.xlu0 %2190, %v1965
    %v2192 = vpop.permute.xlu0 %2191
    %2195 = vset.pattern.permute.xlu0 0
    %2196 = vperm.xlu0 %2195, %v1966
    %v2197 = vpop.permute.xlu0 %2196
    %2200 = vset.pattern.permute.xlu0 0
    %2201 = vperm.xlu0 %2200, %v1967
    %v2202 = vpop.permute.xlu0 %2201
    %2205 = vset.pattern.permute.xlu0 0
    %2206 = vperm.xlu0 %2205, %v1968
    %v2207 = vpop.permute.xlu0 %2206
    %v2209 = vmul.f32 %v2192, %v813
    %v2210 = vmul.f32 %v2197, %v816
    %v2211 = vmul.f32 %v2202, %v821
    %v2212 = vmul.f32 %v2207, %v824
    %v2213 = vadd.f32 %v2185, %v2209
    %v2214 = vadd.f32 %v2186, %v2210
    %v2215 = vadd.f32 %v2187, %v2211
    %v2216 = vadd.f32 %v2188, %v2212
    %v2217 = vpack.c.bf16 %v2214, %v2213
    %v2218 = vpack.c.bf16 %v2216, %v2215
    %2220 = vset.pattern.permute.xlu0 0
    %2221 = vperm.xlu0 %2220, %v1937
    %v2222 = vpop.permute.xlu0 %2221
    %2225 = vset.pattern.permute.xlu0 0
    %2226 = vperm.xlu0 %2225, %v1938
    %v2227 = vpop.permute.xlu0 %2226
    %2230 = vset.pattern.permute.xlu0 0
    %2231 = vperm.xlu0 %2230, %v1939
    %v2232 = vpop.permute.xlu0 %2231
    %2235 = vset.pattern.permute.xlu0 0
    %2236 = vperm.xlu0 %2235, %v1940
    %v2237 = vpop.permute.xlu0 %2236
    %v2239 = vmul.f32 %v2222, %v979
    %v2240 = vmul.f32 %v2227, %v980
    %v2241 = vmul.f32 %v2232, %v981
    %v2242 = vmul.f32 %v2237, %v982
    %2244 = vset.pattern.permute.xlu0 0
    %2245 = vperm.xlu0 %2244, %v1953
    %v2246 = vpop.permute.xlu0 %2245
    %2249 = vset.pattern.permute.xlu0 0
    %2250 = vperm.xlu0 %2249, %v1954
    %v2251 = vpop.permute.xlu0 %2250
    %2254 = vset.pattern.permute.xlu0 0
    %2255 = vperm.xlu0 %2254, %v1955
    %v2256 = vpop.permute.xlu0 %2255
    %2259 = vset.pattern.permute.xlu0 0
    %2260 = vperm.xlu0 %2259, %v1956
    %v2261 = vpop.permute.xlu0 %2260
    %v2263 = vmul.f32 %v2246, %v991
    %v2264 = vmul.f32 %v2251, %v992
    %v2265 = vmul.f32 %v2256, %v993
    %v2266 = vmul.f32 %v2261, %v994
    %v2267 = vadd.f32 %v2239, %v2263
    %v2268 = vadd.f32 %v2240, %v2264
    %v2269 = vadd.f32 %v2241, %v2265
    %v2270 = vadd.f32 %v2242, %v2266
    %2272 = vset.pattern.permute.xlu0 0
    %2273 = vperm.xlu0 %2272, %v1969
    %v2274 = vpop.permute.xlu0 %2273
    %2277 = vset.pattern.permute.xlu0 0
    %2278 = vperm.xlu0 %2277, %v1970
    %v2279 = vpop.permute.xlu0 %2278
    %2282 = vset.pattern.permute.xlu0 0
    %2283 = vperm.xlu0 %2282, %v1971
    %v2284 = vpop.permute.xlu0 %2283
    %2287 = vset.pattern.permute.xlu0 0
    %2288 = vperm.xlu0 %2287, %v1972
    %v2289 = vpop.permute.xlu0 %2288
    %v2291 = vmul.f32 %v2274, %v829
    %v2292 = vmul.f32 %v2279, %v832
    %v2293 = vmul.f32 %v2284, %v837
    %v2294 = vmul.f32 %v2289, %v840
    %v2295 = vadd.f32 %v2267, %v2291
    %v2296 = vadd.f32 %v2268, %v2292
    %v2297 = vadd.f32 %v2269, %v2293
    %v2298 = vadd.f32 %v2270, %v2294
    %v2299 = vpack.c.bf16 %v2296, %v2295
    %v2300 = vpack.c.bf16 %v2298, %v2297
    %v2301 = vld [vmem:[#allocation5] sm:$0xf]
    %v2302 = vld [vmem:[#allocation5 + $0x4] sm:$0xf]
    %v2303 = vld [vmem:[#allocation5 + $0x8] sm:$0xf]
    %v2304 = vld [vmem:[#allocation5 + $0xc] sm:$0xf]
    %v2305 = vld [vmem:[#allocation5 + $0x10] sm:$0xf]
    %v2306 = vld [vmem:[#allocation5 + $0x14] sm:$0xf]
    %v2307 = vld [vmem:[#allocation5 + $0x18] sm:$0xf]
    %v2308 = vld [vmem:[#allocation5 + $0x1c] sm:$0xf]
    %v2309 = vld [vmem:[#allocation5 + $0x20] sm:$0xf]
    %v2310 = vld [vmem:[#allocation5 + $0x24] sm:$0xf]
    %v2311 = vld [vmem:[#allocation5 + $0x28] sm:$0xf]
    %v2312 = vld [vmem:[#allocation5 + $0x2c] sm:$0xf]
    %v2313 = vld [vmem:[#allocation5 + $0x30] sm:$0xf]
    %v2314 = vld [vmem:[#allocation5 + $0x34] sm:$0xf]
    %v2315 = vld [vmem:[#allocation5 + $0x38] sm:$0xf]
    %v2316 = vld [vmem:[#allocation5 + $0x3c] sm:$0xf]
    %v2317 = vld [vmem:[%s6] sm:$0xff]
    %v2318 = vld [vmem:[%s6 + $0x8] sm:$0xff]
    %v2319 = vld [vmem:[%s6 + $0x10] sm:$0xff]
    %v2320 = vld [vmem:[%s6 + $0x18] sm:$0xff]
    %v2321 = vld [vmem:[%s6 + $0x20] sm:$0xff]
    %v2322 = vld [vmem:[%s6 + $0x28] sm:$0xff]
    %v2323 = vld [vmem:[%s6 + $0x30] sm:$0xff]
    %v2324 = vld [vmem:[%s6 + $0x38] sm:$0xff]
    %v2325 = vld [vmem:[%s6 + $0x40] sm:$0xff]
    %v2326 = vld [vmem:[%s6 + $0x48] sm:$0xff]
    %v2327 = vld [vmem:[%s6 + $0x50] sm:$0xff]
    %v2328 = vld [vmem:[%s6 + $0x58] sm:$0xff]
    %v2329 = vld [vmem:[%s6 + $0x60] sm:$0xff]
    %v2330 = vld [vmem:[%s6 + $0x68] sm:$0xff]
    %v2331 = vld [vmem:[%s6 + $0x70] sm:$0xff]
    %v2332 = vld [vmem:[%s6 + $0x78] sm:$0xff]
    %2334 = vset.pattern.permute.xlu0 0
    %2335 = vperm.xlu0 %2334, %v2317
    %v2336 = vpop.permute.xlu0 %2335
    %2339 = vset.pattern.permute.xlu0 0
    %2340 = vperm.xlu0 %2339, %v2318
    %v2341 = vpop.permute.xlu0 %2340
    %2344 = vset.pattern.permute.xlu0 0
    %2345 = vperm.xlu0 %2344, %v2319
    %v2346 = vpop.permute.xlu0 %2345
    %2349 = vset.pattern.permute.xlu0 0
    %2350 = vperm.xlu0 %2349, %v2320
    %v2351 = vpop.permute.xlu0 %2350
    %2354 = vset.pattern.permute.xlu0 0
    %2355 = vperm.xlu0 %2354, %v2321
    %v2356 = vpop.permute.xlu0 %2355
    %2359 = vset.pattern.permute.xlu0 0
    %2360 = vperm.xlu0 %2359, %v2322
    %v2361 = vpop.permute.xlu0 %2360
    %2364 = vset.pattern.permute.xlu0 0
    %2365 = vperm.xlu0 %2364, %v2323
    %v2366 = vpop.permute.xlu0 %2365
    %2369 = vset.pattern.permute.xlu0 0
    %2370 = vperm.xlu0 %2369, %v2324
    %v2371 = vpop.permute.xlu0 %2370
    %2374 = vset.pattern.permute.xlu0 0
    %2375 = vperm.xlu0 %2374, %v2325
    %v2376 = vpop.permute.xlu0 %2375
    %2379 = vset.pattern.permute.xlu0 0
    %2380 = vperm.xlu0 %2379, %v2326
    %v2381 = vpop.permute.xlu0 %2380
    %2384 = vset.pattern.permute.xlu0 0
    %2385 = vperm.xlu0 %2384, %v2327
    %v2386 = vpop.permute.xlu0 %2385
    %2389 = vset.pattern.permute.xlu0 0
    %2390 = vperm.xlu0 %2389, %v2328
    %v2391 = vpop.permute.xlu0 %2390
    %2394 = vset.pattern.permute.xlu0 0
    %2395 = vperm.xlu0 %2394, %v2329
    %v2396 = vpop.permute.xlu0 %2395
    %2399 = vset.pattern.permute.xlu0 0
    %2400 = vperm.xlu0 %2399, %v2330
    %v2401 = vpop.permute.xlu0 %2400
    %2404 = vset.pattern.permute.xlu0 0
    %2405 = vperm.xlu0 %2404, %v2331
    %v2406 = vpop.permute.xlu0 %2405
    %2409 = vset.pattern.permute.xlu0 0
    %2410 = vperm.xlu0 %2409, %v2332
    %v2411 = vpop.permute.xlu0 %2410
    %v2429 = vunpack.c.l.b16 %v2301
    %v2430 = vunpack.c.l.b16 %v2302
    %v2431 = vunpack.c.l.b16 %v2303
    %v2432 = vunpack.c.l.b16 %v2304
    %v2433 = vunpack.c.l.b16 %v2305
    %v2434 = vunpack.c.l.b16 %v2306
    %v2435 = vunpack.c.l.b16 %v2307
    %v2436 = vunpack.c.l.b16 %v2308
    %v2437 = vunpack.c.l.b16 %v2309
    %v2438 = vunpack.c.l.b16 %v2310
    %v2439 = vunpack.c.l.b16 %v2311
    %v2440 = vunpack.c.l.b16 %v2312
    %v2441 = vunpack.c.l.b16 %v2313
    %v2442 = vunpack.c.l.b16 %v2314
    %v2443 = vunpack.c.l.b16 %v2315
    %v2444 = vunpack.c.l.b16 %v2316
    %v2445 = vpack.c.b16 %v2430, %v2429
    %v2446 = vpack.c.b16 %v2432, %v2431
    %v2447 = vpack.c.b16 %v2434, %v2433
    %v2448 = vpack.c.b16 %v2436, %v2435
    %v2449 = vpack.c.b16 %v2438, %v2437
    %v2450 = vpack.c.b16 %v2440, %v2439
    %v2451 = vpack.c.b16 %v2442, %v2441
    %v2452 = vpack.c.b16 %v2444, %v2443
    %2461 = vmatprep.subr.bf16.mxu0 0
    %2462 = vmatpush1.bf16.msra.mxu0 %v2053
    %2463 = vmatprep.subr.bf16.mxu0 0
    %2464 = vmatpush1.bf16.msra.mxu0 %v2054
    %2465 = vmatprep.subr.bf16.mxu0 0
    %2466 = vmatpush1.bf16.msra.mxu0 %v2135
    %2467 = vmatprep.subr.bf16.mxu0 0
    %2468 = vmatpush1.bf16.msra.mxu0 %v2136
    %2469 = vmatprep.subr.bf16.mxu0 0
    %2470 = vmatpush1.bf16.msra.mxu0 %v2217
    %2471 = vmatprep.subr.bf16.mxu0 0
    %2472 = vmatpush1.bf16.msra.mxu0 %v2218
    %2473 = vmatprep.subr.bf16.mxu0 0
    %2474 = vmatpush1.bf16.msra.mxu0 %v2299
    %2475 = vmatprep.subr.bf16.mxu0 0
    %2476 = vmatpush1.bf16.msra.mxu0 %v2300
    %2477 = vmatprep.subr.bf16.mxu0 0
    %2478 = vmatpush1.bf16.msra.mxu0 0
    %2479 = vmatprep.subr.bf16.mxu0 0
    %2480 = vmatpush1.bf16.msra.mxu0 0
    %2481 = vmatprep.subr.bf16.mxu0 0
    %2482 = vmatpush1.bf16.msra.mxu0 0
    %2483 = vmatprep.subr.bf16.mxu0 0
    %2484 = vmatpush1.bf16.msra.mxu0 0
    %2485 = vmatprep.subr.bf16.mxu0 0
    %2486 = vmatpush1.bf16.msra.mxu0 0
    %2487 = vmatprep.subr.bf16.mxu0 0
    %2488 = vmatpush1.bf16.msra.mxu0 0
    %2489 = vmatprep.subr.bf16.mxu0 0
    %2490 = vmatpush1.bf16.msra.mxu0 0
    %2491 = vmatprep.subr.bf16.mxu0 0
    %2492 = vmatpush1.bf16.msra.mxu0 0
    %2493 = vmatprep.mubr.bf16.mxu0 0
    %2494 = vmatmul.mubr.bf16.gmra.mrb[0].mxu0 %v2445
    %v2495 = vpop.f32.mrb[0].mxu0
    %v2496 = vadd.f32 %v2336, %v2495
    %v2497 = vpop.f32.mrb[0].mxu0
    %v2498 = vpop.f32.mrb[0].mxu0
    %v2499 = vadd.f32 %v2341, %v2498
    %v2500 = vpop.f32.mrb[0].mxu0
    %2501 = vmatprep.mubr.bf16.mxu0 0
    %2502 = vmatmul.mubr.bf16.gmra.mrb[0].mxu0 %v2446
    %v2503 = vpop.f32.mrb[0].mxu0
    %v2504 = vadd.f32 %v2346, %v2503
    %v2505 = vpop.f32.mrb[0].mxu0
    %v2506 = vpop.f32.mrb[0].mxu0
    %v2507 = vadd.f32 %v2351, %v2506
    %v2508 = vpop.f32.mrb[0].mxu0
    %2509 = vmatprep.mubr.bf16.mxu0 0
    %2510 = vmatmul.mubr.bf16.gmra.mrb[0].mxu0 %v2447
    %v2511 = vpop.f32.mrb[0].mxu0
    %v2512 = vadd.f32 %v2356, %v2511
    %v2513 = vpop.f32.mrb[0].mxu0
    %v2514 = vpop.f32.mrb[0].mxu0
    %v2515 = vadd.f32 %v2361, %v2514
    %v2516 = vpop.f32.mrb[0].mxu0
    %2517 = vmatprep.mubr.bf16.mxu0 0
    %2518 = vmatmul.mubr.bf16.gmra.mrb[0].mxu0 %v2448
    %v2519 = vpop.f32.mrb[0].mxu0
    %v2520 = vadd.f32 %v2366, %v2519
    %v2521 = vpop.f32.mrb[0].mxu0
    %v2522 = vpop.f32.mrb[0].mxu0
    %v2523 = vadd.f32 %v2371, %v2522
    %v2524 = vpop.f32.mrb[0].mxu0
    %2525 = vmatprep.mubr.bf16.mxu0 0
    %2526 = vmatmul.mubr.bf16.gmra.mrb[0].mxu0 %v2449
    %v2527 = vpop.f32.mrb[0].mxu0
    %v2528 = vadd.f32 %v2376, %v2527
    %v2529 = vpop.f32.mrb[0].mxu0
    %v2530 = vpop.f32.mrb[0].mxu0
    %v2531 = vadd.f32 %v2381, %v2530
    %v2532 = vpop.f32.mrb[0].mxu0
    %2533 = vmatprep.mubr.bf16.mxu0 0
    %2534 = vmatmul.mubr.bf16.gmra.mrb[0].mxu0 %v2450
    %v2535 = vpop.f32.mrb[0].mxu0
    %v2536 = vadd.f32 %v2386, %v2535
    %v2537 = vpop.f32.mrb[0].mxu0
    %v2538 = vpop.f32.mrb[0].mxu0
    %v2539 = vadd.f32 %v2391, %v2538
    %v2540 = vpop.f32.mrb[0].mxu0
    %2541 = vmatprep.mubr.bf16.mxu0 0
    %2542 = vmatmul.mubr.bf16.gmra.mrb[0].mxu0 %v2451
    %v2543 = vpop.f32.mrb[0].mxu0
    %v2544 = vadd.f32 %v2396, %v2543
    %v2545 = vpop.f32.mrb[0].mxu0
    %v2546 = vpop.f32.mrb[0].mxu0
    %v2547 = vadd.f32 %v2401, %v2546
    %v2548 = vpop.f32.mrb[0].mxu0
    %2549 = vmatprep.mubr.bf16.mxu0 0
    %2550 = vmatmul.mubr.bf16.gmra.mrb[0].mxu0 %v2452
    %v2551 = vpop.f32.mrb[0].mxu0
    %v2552 = vadd.f32 %v2406, %v2551
    %v2553 = vpop.f32.mrb[0].mxu0
    %v2554 = vpop.f32.mrb[0].mxu0
    %v2555 = vadd.f32 %v2411, %v2554
    %v2556 = vpop.f32.mrb[0].mxu0
    %2557 = vdwg.mxu0
    %v2558 = vpack.c.bf16 %v2499, %v2496
    %v2559 = vpack.c.bf16 %v2507, %v2504
    %v2560 = vpack.c.bf16 %v2515, %v2512
    %v2561 = vpack.c.bf16 %v2523, %v2520
    %v2562 = vpack.c.bf16 %v2531, %v2528
    %v2563 = vpack.c.bf16 %v2539, %v2536
    %v2564 = vpack.c.bf16 %v2547, %v2544
    %v2565 = vpack.c.bf16 %v2555, %v2552
    %v2574 = vunpack.c.l.b16 %v2558
    %v2575 = vunpack.c.h.b16 %v2558
    %v2576 = vunpack.c.l.b16 %v2559
    %v2577 = vunpack.c.h.b16 %v2559
    %v2578 = vunpack.c.l.b16 %v2560
    %v2579 = vunpack.c.h.b16 %v2560
    %v2580 = vunpack.c.l.b16 %v2561
    %v2581 = vunpack.c.h.b16 %v2561
    %v2582 = vunpack.c.l.b16 %v2562
    %v2583 = vunpack.c.h.b16 %v2562
    %v2584 = vunpack.c.l.b16 %v2563
    %v2585 = vunpack.c.h.b16 %v2563
    %v2586 = vunpack.c.l.b16 %v2564
    %v2587 = vunpack.c.h.b16 %v2564
    %v2588 = vunpack.c.l.b16 %v2565
    %v2589 = vunpack.c.h.b16 %v2565
    %v2590 = vpack.c.b16 %v2574, %v2574
    %v2591 = vpack.c.b16 %v2575, %v2575
    %v2592 = vpack.c.b16 %v2576, %v2576
    %v2593 = vpack.c.b16 %v2577, %v2577
    %v2594 = vpack.c.b16 %v2578, %v2578
    %v2595 = vpack.c.b16 %v2579, %v2579
    %v2596 = vpack.c.b16 %v2580, %v2580
    %v2597 = vpack.c.b16 %v2581, %v2581
    %v2598 = vpack.c.b16 %v2582, %v2582
    %v2599 = vpack.c.b16 %v2583, %v2583
    %v2600 = vpack.c.b16 %v2584, %v2584
    %v2601 = vpack.c.b16 %v2585, %v2585
    %v2602 = vpack.c.b16 %v2586, %v2586
    %v2603 = vpack.c.b16 %v2587, %v2587
    %v2604 = vpack.c.b16 %v2588, %v2588
    %v2605 = vpack.c.b16 %v2589, %v2589
    %2622 = vst [vmem:[#allocation7] sm:$0xf] %v2590
    %2623 = vst [vmem:[#allocation7 + $0x4] sm:$0xf] %v2591
    %2624 = vst [vmem:[#allocation7 + $0x8] sm:$0xf] %v2592
    %2625 = vst [vmem:[#allocation7 + $0xc] sm:$0xf] %v2593
    %2626 = vst [vmem:[#allocation7 + $0x10] sm:$0xf] %v2594
    %2627 = vst [vmem:[#allocation7 + $0x14] sm:$0xf] %v2595
    %2628 = vst [vmem:[#allocation7 + $0x18] sm:$0xf] %v2596
    %2629 = vst [vmem:[#allocation7 + $0x1c] sm:$0xf] %v2597
    %2630 = vst [vmem:[#allocation7 + $0x20] sm:$0xf] %v2598
    %2631 = vst [vmem:[#allocation7 + $0x24] sm:$0xf] %v2599
    %2632 = vst [vmem:[#allocation7 + $0x28] sm:$0xf] %v2600
    %2633 = vst [vmem:[#allocation7 + $0x2c] sm:$0xf] %v2601
    %2634 = vst [vmem:[#allocation7 + $0x30] sm:$0xf] %v2602
    %2635 = vst [vmem:[#allocation7 + $0x34] sm:$0xf] %v2603
    %2636 = vst [vmem:[#allocation7 + $0x38] sm:$0xf] %v2604
    %2637 = vst [vmem:[#allocation7 + $0x3c] sm:$0xf] %v2605
    %s2638 = scalar_lea.vmem %s0, 64
    %v2639 = vld [vmem:[%s2638] sm:$0xf]
    %v2640 = vld [vmem:[%s2638 + $0x4] sm:$0xf]
    %v2641 = vld [vmem:[%s2638 + $0x8] sm:$0xf]
    %v2642 = vld [vmem:[%s2638 + $0xc] sm:$0xf]
    %v2643 = vld [vmem:[%s2638 + $0x10] sm:$0xf]
    %v2644 = vld [vmem:[%s2638 + $0x14] sm:$0xf]
    %v2645 = vld [vmem:[%s2638 + $0x18] sm:$0xf]
    %v2646 = vld [vmem:[%s2638 + $0x1c] sm:$0xf]
    %v2647 = vld [vmem:[%s2638 + $0x20] sm:$0xf]
    %v2648 = vld [vmem:[%s2638 + $0x24] sm:$0xf]
    %v2649 = vld [vmem:[%s2638 + $0x28] sm:$0xf]
    %v2650 = vld [vmem:[%s2638 + $0x2c] sm:$0xf]
    %v2651 = vld [vmem:[%s2638 + $0x30] sm:$0xf]
    %v2652 = vld [vmem:[%s2638 + $0x34] sm:$0xf]
    %v2653 = vld [vmem:[%s2638 + $0x38] sm:$0xf]
    %v2654 = vld [vmem:[%s2638 + $0x3c] sm:$0xf]
    %v2655 = vld [vmem:[%s1] sm:$0xf]
    %v2656 = vld [vmem:[%s1 + $0x4] sm:$0xf]
    %v2657 = vld [vmem:[%s1 + $0x8] sm:$0xf]
    %v2658 = vld [vmem:[%s1 + $0xc] sm:$0xf]
    %v2659 = vld [vmem:[%s1 + $0x10] sm:$0xf]
    %v2660 = vld [vmem:[%s1 + $0x14] sm:$0xf]
    %v2661 = vld [vmem:[%s1 + $0x18] sm:$0xf]
    %v2662 = vld [vmem:[%s1 + $0x1c] sm:$0xf]
    %v2663 = vld [vmem:[%s1 + $0x20] sm:$0xf]
    %v2664 = vld [vmem:[%s1 + $0x24] sm:$0xf]
    %v2665 = vld [vmem:[%s1 + $0x28] sm:$0xf]
    %v2666 = vld [vmem:[%s1 + $0x2c] sm:$0xf]
    %v2667 = vld [vmem:[%s1 + $0x30] sm:$0xf]
    %v2668 = vld [vmem:[%s1 + $0x34] sm:$0xf]
    %v2669 = vld [vmem:[%s1 + $0x38] sm:$0xf]
    %v2670 = vld [vmem:[%s1 + $0x3c] sm:$0xf]
    %v2671 = vld [vmem:[%s1 + $0x40] sm:$0xf]
    %v2672 = vld [vmem:[%s1 + $0x44] sm:$0xf]
    %v2673 = vld [vmem:[%s1 + $0x48] sm:$0xf]
    %v2674 = vld [vmem:[%s1 + $0x4c] sm:$0xf]
    %v2675 = vld [vmem:[%s1 + $0x50] sm:$0xf]
    %v2676 = vld [vmem:[%s1 + $0x54] sm:$0xf]
    %v2677 = vld [vmem:[%s1 + $0x58] sm:$0xf]
    %v2678 = vld [vmem:[%s1 + $0x5c] sm:$0xf]
    %v2679 = vld [vmem:[%s1 + $0x60] sm:$0xf]
    %v2680 = vld [vmem:[%s1 + $0x64] sm:$0xf]
    %v2681 = vld [vmem:[%s1 + $0x68] sm:$0xf]
    %v2682 = vld [vmem:[%s1 + $0x6c] sm:$0xf]
    %v2683 = vld [vmem:[%s1 + $0x70] sm:$0xf]
    %v2684 = vld [vmem:[%s1 + $0x74] sm:$0xf]
    %v2685 = vld [vmem:[%s1 + $0x78] sm:$0xf]
    %v2686 = vld [vmem:[%s1 + $0x7c] sm:$0xf]
    %v2687 = vld [vmem:[%s1 + $0x80] sm:$0xf]
    %v2688 = vld [vmem:[%s1 + $0x84] sm:$0xf]
    %v2689 = vld [vmem:[%s1 + $0x88] sm:$0xf]
    %v2690 = vld [vmem:[%s1 + $0x8c] sm:$0xf]
    %v2691 = vld [vmem:[%s1 + $0x90] sm:$0xf]
    %v2692 = vld [vmem:[%s1 + $0x94] sm:$0xf]
    %v2693 = vld [vmem:[%s1 + $0x98] sm:$0xf]
    %v2694 = vld [vmem:[%s1 + $0x9c] sm:$0xf]
    %v2695 = vld [vmem:[%s1 + $0xa0] sm:$0xf]
    %v2696 = vld [vmem:[%s1 + $0xa4] sm:$0xf]
    %v2697 = vld [vmem:[%s1 + $0xa8] sm:$0xf]
    %v2698 = vld [vmem:[%s1 + $0xac] sm:$0xf]
    %v2699 = vld [vmem:[%s1 + $0xb0] sm:$0xf]
    %v2700 = vld [vmem:[%s1 + $0xb4] sm:$0xf]
    %v2701 = vld [vmem:[%s1 + $0xb8] sm:$0xf]
    %v2702 = vld [vmem:[%s1 + $0xbc] sm:$0xf]
    %v2703 = vld [vmem:[%s2] sm:$0xff]
    %v2704 = vld [vmem:[%s2 + $0x8] sm:$0xff]
    %v2705 = vld [vmem:[%s2 + $0x10] sm:$0xff]
    %v2706 = vld [vmem:[%s2 + $0x18] sm:$0xff]
    %v2707 = vld [vmem:[%s2 + $0x20] sm:$0xff]
    %v2708 = vld [vmem:[%s2 + $0x28] sm:$0xff]
    %v2709 = vld [vmem:[%s2 + $0x30] sm:$0xff]
    %v2710 = vld [vmem:[%s2 + $0x38] sm:$0xff]
    %v2711 = vld [vmem:[%s2 + $0x40] sm:$0xff]
    %v2712 = vld [vmem:[%s2 + $0x48] sm:$0xff]
    %v2713 = vld [vmem:[%s2 + $0x50] sm:$0xff]
    %v2714 = vld [vmem:[%s2 + $0x58] sm:$0xff]
    %v2715 = vld [vmem:[%s2 + $0x60] sm:$0xff]
    %v2716 = vld [vmem:[%s2 + $0x68] sm:$0xff]
    %v2717 = vld [vmem:[%s2 + $0x70] sm:$0xff]
    %v2718 = vld [vmem:[%s2 + $0x78] sm:$0xff]
    %v2719 = vld [vmem:[%s2 + $0x80] sm:$0xff]
    %v2720 = vld [vmem:[%s2 + $0x88] sm:$0xff]
    %v2721 = vld [vmem:[%s2 + $0x90] sm:$0xff]
    %v2722 = vld [vmem:[%s2 + $0x98] sm:$0xff]
    %v2723 = vld [vmem:[%s2 + $0xa0] sm:$0xff]
    %v2724 = vld [vmem:[%s2 + $0xa8] sm:$0xff]
    %v2725 = vld [vmem:[%s2 + $0xb0] sm:$0xff]
    %v2726 = vld [vmem:[%s2 + $0xb8] sm:$0xff]
    %v2727 = vld [vmem:[%s2 + $0xc0] sm:$0xff]
    %v2728 = vld [vmem:[%s2 + $0xc8] sm:$0xff]
    %v2729 = vld [vmem:[%s2 + $0xd0] sm:$0xff]
    %v2730 = vld [vmem:[%s2 + $0xd8] sm:$0xff]
    %v2731 = vld [vmem:[%s2 + $0xe0] sm:$0xff]
    %v2732 = vld [vmem:[%s2 + $0xe8] sm:$0xff]
    %v2733 = vld [vmem:[%s2 + $0xf0] sm:$0xff]
    %v2734 = vld [vmem:[%s2 + $0xf8] sm:$0xff]
    %v2735 = vld [vmem:[%s2 + $0x100] sm:$0xff]
    %v2736 = vld [vmem:[%s2 + $0x108] sm:$0xff]
    %v2737 = vld [vmem:[%s2 + $0x110] sm:$0xff]
    %v2738 = vld [vmem:[%s2 + $0x118] sm:$0xff]
    %v2739 = vld [vmem:[%s2 + $0x120] sm:$0xff]
    %v2740 = vld [vmem:[%s2 + $0x128] sm:$0xff]
    %v2741 = vld [vmem:[%s2 + $0x130] sm:$0xff]
    %v2742 = vld [vmem:[%s2 + $0x138] sm:$0xff]
    %v2743 = vld [vmem:[%s2 + $0x140] sm:$0xff]
    %v2744 = vld [vmem:[%s2 + $0x148] sm:$0xff]
    %v2745 = vld [vmem:[%s2 + $0x150] sm:$0xff]
    %v2746 = vld [vmem:[%s2 + $0x158] sm:$0xff]
    %v2747 = vld [vmem:[%s2 + $0x160] sm:$0xff]
    %v2748 = vld [vmem:[%s2 + $0x168] sm:$0xff]
    %v2749 = vld [vmem:[%s2 + $0x170] sm:$0xff]
    %v2750 = vld [vmem:[%s2 + $0x178] sm:$0xff]
    %2752 = vset.pattern.permute.xlu0 0
    %2753 = vperm.xlu0 %2752, %v2703
    %v2754 = vpop.permute.xlu0 %2753
    %2757 = vset.pattern.permute.xlu0 0
    %2758 = vperm.xlu0 %2757, %v2704
    %v2759 = vpop.permute.xlu0 %2758
    %2762 = vset.pattern.permute.xlu0 0
    %2763 = vperm.xlu0 %2762, %v2705
    %v2764 = vpop.permute.xlu0 %2763
    %2767 = vset.pattern.permute.xlu0 0
    %2768 = vperm.xlu0 %2767, %v2706
    %v2769 = vpop.permute.xlu0 %2768
    %2772 = vset.pattern.permute.xlu0 0
    %2773 = vperm.xlu0 %2772, %v2707
    %v2774 = vpop.permute.xlu0 %2773
    %2777 = vset.pattern.permute.xlu0 0
    %2778 = vperm.xlu0 %2777, %v2708
    %v2779 = vpop.permute.xlu0 %2778
    %2782 = vset.pattern.permute.xlu0 0
    %2783 = vperm.xlu0 %2782, %v2709
    %v2784 = vpop.permute.xlu0 %2783
    %2787 = vset.pattern.permute.xlu0 0
    %2788 = vperm.xlu0 %2787, %v2710
    %v2789 = vpop.permute.xlu0 %2788
    %2792 = vset.pattern.permute.xlu0 0
    %2793 = vperm.xlu0 %2792, %v2711
    %v2794 = vpop.permute.xlu0 %2793
    %2797 = vset.pattern.permute.xlu0 0
    %2798 = vperm.xlu0 %2797, %v2712
    %v2799 = vpop.permute.xlu0 %2798
    %2802 = vset.pattern.permute.xlu0 0
    %2803 = vperm.xlu0 %2802, %v2713
    %v2804 = vpop.permute.xlu0 %2803
    %2807 = vset.pattern.permute.xlu0 0
    %2808 = vperm.xlu0 %2807, %v2714
    %v2809 = vpop.permute.xlu0 %2808
    %2812 = vset.pattern.permute.xlu0 0
    %2813 = vperm.xlu0 %2812, %v2715
    %v2814 = vpop.permute.xlu0 %2813
    %2817 = vset.pattern.permute.xlu0 0
    %2818 = vperm.xlu0 %2817, %v2716
    %v2819 = vpop.permute.xlu0 %2818
    %2822 = vset.pattern.permute.xlu0 0
    %2823 = vperm.xlu0 %2822, %v2717
    %v2824 = vpop.permute.xlu0 %2823
    %2827 = vset.pattern.permute.xlu0 0
    %2828 = vperm.xlu0 %2827, %v2718
    %v2829 = vpop.permute.xlu0 %2828
    %2832 = vset.pattern.permute.xlu0 0
    %2833 = vperm.xlu0 %2832, %v2719
    %v2834 = vpop.permute.xlu0 %2833
    %2837 = vset.pattern.permute.xlu0 0
    %2838 = vperm.xlu0 %2837, %v2720
    %v2839 = vpop.permute.xlu0 %2838
    %2842 = vset.pattern.permute.xlu0 0
    %2843 = vperm.xlu0 %2842, %v2721
    %v2844 = vpop.permute.xlu0 %2843
    %2847 = vset.pattern.permute.xlu0 0
    %2848 = vperm.xlu0 %2847, %v2722
    %v2849 = vpop.permute.xlu0 %2848
    %2852 = vset.pattern.permute.xlu0 0
    %2853 = vperm.xlu0 %2852, %v2723
    %v2854 = vpop.permute.xlu0 %2853
    %2857 = vset.pattern.permute.xlu0 0
    %2858 = vperm.xlu0 %2857, %v2724
    %v2859 = vpop.permute.xlu0 %2858
    %2862 = vset.pattern.permute.xlu0 0
    %2863 = vperm.xlu0 %2862, %v2725
    %v2864 = vpop.permute.xlu0 %2863
    %2867 = vset.pattern.permute.xlu0 0
    %2868 = vperm.xlu0 %2867, %v2726
    %v2869 = vpop.permute.xlu0 %2868
    %2872 = vset.pattern.permute.xlu0 0
    %2873 = vperm.xlu0 %2872, %v2727
    %v2874 = vpop.permute.xlu0 %2873
    %2877 = vset.pattern.permute.xlu0 0
    %2878 = vperm.xlu0 %2877, %v2728
    %v2879 = vpop.permute.xlu0 %2878
    %2882 = vset.pattern.permute.xlu0 0
    %2883 = vperm.xlu0 %2882, %v2729
    %v2884 = vpop.permute.xlu0 %2883
    %2887 = vset.pattern.permute.xlu0 0
    %2888 = vperm.xlu0 %2887, %v2730
    %v2889 = vpop.permute.xlu0 %2888
    %2892 = vset.pattern.permute.xlu0 0
    %2893 = vperm.xlu0 %2892, %v2731
    %v2894 = vpop.permute.xlu0 %2893
    %2897 = vset.pattern.permute.xlu0 0
    %2898 = vperm.xlu0 %2897, %v2732
    %v2899 = vpop.permute.xlu0 %2898
    %2902 = vset.pattern.permute.xlu0 0
    %2903 = vperm.xlu0 %2902, %v2733
    %v2904 = vpop.permute.xlu0 %2903
    %2907 = vset.pattern.permute.xlu0 0
    %2908 = vperm.xlu0 %2907, %v2734
    %v2909 = vpop.permute.xlu0 %2908
    %2912 = vset.pattern.permute.xlu0 0
    %2913 = vperm.xlu0 %2912, %v2735
    %v2914 = vpop.permute.xlu0 %2913
    %2917 = vset.pattern.permute.xlu0 0
    %2918 = vperm.xlu0 %2917, %v2736
    %v2919 = vpop.permute.xlu0 %2918
    %2922 = vset.pattern.permute.xlu0 0
    %2923 = vperm.xlu0 %2922, %v2737
    %v2924 = vpop.permute.xlu0 %2923
    %2927 = vset.pattern.permute.xlu0 0
    %2928 = vperm.xlu0 %2927, %v2738
    %v2929 = vpop.permute.xlu0 %2928
    %2932 = vset.pattern.permute.xlu0 0
    %2933 = vperm.xlu0 %2932, %v2739
    %v2934 = vpop.permute.xlu0 %2933
    %2937 = vset.pattern.permute.xlu0 0
    %2938 = vperm.xlu0 %2937, %v2740
    %v2939 = vpop.permute.xlu0 %2938
    %2942 = vset.pattern.permute.xlu0 0
    %2943 = vperm.xlu0 %2942, %v2741
    %v2944 = vpop.permute.xlu0 %2943
    %2947 = vset.pattern.permute.xlu0 0
    %2948 = vperm.xlu0 %2947, %v2742
    %v2949 = vpop.permute.xlu0 %2948
    %2952 = vset.pattern.permute.xlu0 0
    %2953 = vperm.xlu0 %2952, %v2743
    %v2954 = vpop.permute.xlu0 %2953
    %2957 = vset.pattern.permute.xlu0 0
    %2958 = vperm.xlu0 %2957, %v2744
    %v2959 = vpop.permute.xlu0 %2958
    %2962 = vset.pattern.permute.xlu0 0
    %2963 = vperm.xlu0 %2962, %v2745
    %v2964 = vpop.permute.xlu0 %2963
    %2967 = vset.pattern.permute.xlu0 0
    %2968 = vperm.xlu0 %2967, %v2746
    %v2969 = vpop.permute.xlu0 %2968
    %2972 = vset.pattern.permute.xlu0 0
    %2973 = vperm.xlu0 %2972, %v2747
    %v2974 = vpop.permute.xlu0 %2973
    %2977 = vset.pattern.permute.xlu0 0
    %2978 = vperm.xlu0 %2977, %v2748
    %v2979 = vpop.permute.xlu0 %2978
    %2982 = vset.pattern.permute.xlu0 0
    %2983 = vperm.xlu0 %2982, %v2749
    %v2984 = vpop.permute.xlu0 %2983
    %2987 = vset.pattern.permute.xlu0 0
    %2988 = vperm.xlu0 %2987, %v2750
    %v2989 = vpop.permute.xlu0 %2988
    %v3039 = vunpack.c.l.b16 %v2655
    %v3040 = vunpack.c.l.b16 %v2656
    %v3041 = vunpack.c.l.b16 %v2657
    %v3042 = vunpack.c.l.b16 %v2658
    %v3043 = vunpack.c.l.b16 %v2659
    %v3044 = vunpack.c.l.b16 %v2660
    %v3045 = vunpack.c.l.b16 %v2661
    %v3046 = vunpack.c.l.b16 %v2662
    %v3047 = vunpack.c.l.b16 %v2663
    %v3048 = vunpack.c.l.b16 %v2664
    %v3049 = vunpack.c.l.b16 %v2665
    %v3050 = vunpack.c.l.b16 %v2666
    %v3051 = vunpack.c.l.b16 %v2667
    %v3052 = vunpack.c.l.b16 %v2668
    %v3053 = vunpack.c.l.b16 %v2669
    %v3054 = vunpack.c.l.b16 %v2670
    %v3055 = vunpack.c.l.b16 %v2671
    %v3056 = vunpack.c.l.b16 %v2672
    %v3057 = vunpack.c.l.b16 %v2673
    %v3058 = vunpack.c.l.b16 %v2674
    %v3059 = vunpack.c.l.b16 %v2675
    %v3060 = vunpack.c.l.b16 %v2676
    %v3061 = vunpack.c.l.b16 %v2677
    %v3062 = vunpack.c.l.b16 %v2678
    %v3063 = vunpack.c.l.b16 %v2679
    %v3064 = vunpack.c.l.b16 %v2680
    %v3065 = vunpack.c.l.b16 %v2681
    %v3066 = vunpack.c.l.b16 %v2682
    %v3067 = vunpack.c.l.b16 %v2683
    %v3068 = vunpack.c.l.b16 %v2684
    %v3069 = vunpack.c.l.b16 %v2685
    %v3070 = vunpack.c.l.b16 %v2686
    %v3071 = vunpack.c.l.b16 %v2687
    %v3072 = vunpack.c.l.b16 %v2688
    %v3073 = vunpack.c.l.b16 %v2689
    %v3074 = vunpack.c.l.b16 %v2690
    %v3075 = vunpack.c.l.b16 %v2691
    %v3076 = vunpack.c.l.b16 %v2692
    %v3077 = vunpack.c.l.b16 %v2693
    %v3078 = vunpack.c.l.b16 %v2694
    %v3079 = vunpack.c.l.b16 %v2695
    %v3080 = vunpack.c.l.b16 %v2696
    %v3081 = vunpack.c.l.b16 %v2697
    %v3082 = vunpack.c.l.b16 %v2698
    %v3083 = vunpack.c.l.b16 %v2699
    %v3084 = vunpack.c.l.b16 %v2700
    %v3085 = vunpack.c.l.b16 %v2701
    %v3086 = vunpack.c.l.b16 %v2702
    %v3087 = vpack.c.b16 %v3040, %v3039
    %v3088 = vpack.c.b16 %v3042, %v3041
    %v3089 = vpack.c.b16 %v3044, %v3043
    %v3090 = vpack.c.b16 %v3046, %v3045
    %v3091 = vpack.c.b16 %v3048, %v3047
    %v3092 = vpack.c.b16 %v3050, %v3049
    %v3093 = vpack.c.b16 %v3052, %v3051
    %v3094 = vpack.c.b16 %v3054, %v3053
    %v3095 = vpack.c.b16 %v3056, %v3055
    %v3096 = vpack.c.b16 %v3058, %v3057
    %v3097 = vpack.c.b16 %v3060, %v3059
    %v3098 = vpack.c.b16 %v3062, %v3061
    %v3099 = vpack.c.b16 %v3064, %v3063
    %v3100 = vpack.c.b16 %v3066, %v3065
    %v3101 = vpack.c.b16 %v3068, %v3067
    %v3102 = vpack.c.b16 %v3070, %v3069
    %v3103 = vpack.c.b16 %v3072, %v3071
    %v3104 = vpack.c.b16 %v3074, %v3073
    %v3105 = vpack.c.b16 %v3076, %v3075
    %v3106 = vpack.c.b16 %v3078, %v3077
    %v3107 = vpack.c.b16 %v3080, %v3079
    %v3108 = vpack.c.b16 %v3082, %v3081
    %v3109 = vpack.c.b16 %v3084, %v3083
    %v3110 = vpack.c.b16 %v3086, %v3085
    %v3151 = vunpack.c.l.b16 %v2639
    %v3152 = vunpack.c.l.b16 %v2640
    %v3153 = vunpack.c.l.b16 %v2641
    %v3154 = vunpack.c.l.b16 %v2642
    %v3155 = vunpack.c.l.b16 %v2643
    %v3156 = vunpack.c.l.b16 %v2644
    %v3157 = vunpack.c.l.b16 %v2645
    %v3158 = vunpack.c.l.b16 %v2646
    %v3159 = vunpack.c.l.b16 %v2647
    %v3160 = vunpack.c.l.b16 %v2648
    %v3161 = vunpack.c.l.b16 %v2649
    %v3162 = vunpack.c.l.b16 %v2650
    %v3163 = vunpack.c.l.b16 %v2651
    %v3164 = vunpack.c.l.b16 %v2652
    %v3165 = vunpack.c.l.b16 %v2653
    %v3166 = vunpack.c.l.b16 %v2654
    %v3167 = vpack.c.b16 %v3152, %v3151
    %v3168 = vpack.c.b16 %v3154, %v3153
    %v3169 = vpack.c.b16 %v3156, %v3155
    %v3170 = vpack.c.b16 %v3158, %v3157
    %v3171 = vpack.c.b16 %v3160, %v3159
    %v3172 = vpack.c.b16 %v3162, %v3161
    %v3173 = vpack.c.b16 %v3164, %v3163
    %v3174 = vpack.c.b16 %v3166, %v3165
    %3183 = vmatprep.subr.bf16.mxu0 0
    %3184 = vmatpush1.bf16.msra.mxu0 %v3167
    %3185 = vmatprep.subr.bf16.mxu0 0
    %3186 = vmatpush1.bf16.msra.mxu0 %v3168
    %3187 = vmatprep.subr.bf16.mxu0 0
    %3188 = vmatpush1.bf16.msra.mxu0 %v3169
    %3189 = vmatprep.subr.bf16.mxu0 0
    %3190 = vmatpush1.bf16.msra.mxu0 %v3170
    %3191 = vmatprep.subr.bf16.mxu0 0
    %3192 = vmatpush1.bf16.msra.mxu0 %v3171
    %3193 = vmatprep.subr.bf16.mxu0 0
    %3194 = vmatpush1.bf16.msra.mxu0 %v3172
    %3195 = vmatprep.subr.bf16.mxu0 0
    %3196 = vmatpush1.bf16.msra.mxu0 %v3173
    %3197 = vmatprep.subr.bf16.mxu0 0
    %3198 = vmatpush1.bf16.msra.mxu0 %v3174
    %3199 = vmatprep.subr.bf16.mxu0 0
    %3200 = vmatpush1.bf16.msra.mxu0 0
    %3201 = vmatprep.subr.bf16.mxu0 0
    %3202 = vmatpush1.bf16.msra.mxu0 0
    %3203 = vmatprep.subr.bf16.mxu0 0
    %3204 = vmatpush1.bf16.msra.mxu0 0
    %3205 = vmatprep.subr.bf16.mxu0 0
    %3206 = vmatpush1.bf16.msra.mxu0 0
    %3207 = vmatprep.subr.bf16.mxu0 0
    %3208 = vmatpush1.bf16.msra.mxu0 0
    %3209 = vmatprep.subr.bf16.mxu0 0
    %3210 = vmatpush1.bf16.msra.mxu0 0
    %3211 = vmatprep.subr.bf16.mxu0 0
    %3212 = vmatpush1.bf16.msra.mxu0 0
    %3213 = vmatprep.subr.bf16.mxu0 0
    %3214 = vmatpush1.bf16.msra.mxu0 0
    %3215 = vmatprep.mubr.bf16.mxu0 0
    %3216 = vmatmul.mubr.bf16.gmra.mrb[0].mxu0 %v3087
    %v3217 = vpop.f32.mrb[0].mxu0
    %v3218 = vadd.f32 %v2754, %v3217
    %v3219 = vpop.f32.mrb[0].mxu0
    %v3220 = vpop.f32.mrb[0].mxu0
    %v3221 = vadd.f32 %v2759, %v3220
    %v3222 = vpop.f32.mrb[0].mxu0
    %3223 = vmatprep.mubr.bf16.mxu0 0
    %3224 = vmatmul.mubr.bf16.gmra.mrb[0].mxu0 %v3088
    %v3225 = vpop.f32.mrb[0].mxu0
    %v3226 = vadd.f32 %v2764, %v3225
    %v3227 = vpop.f32.mrb[0].mxu0
    %v3228 = vpop.f32.mrb[0].mxu0
    %v3229 = vadd.f32 %v2769, %v3228
    %v3230 = vpop.f32.mrb[0].mxu0
    %3231 = vmatprep.mubr.bf16.mxu0 0
    %3232 = vmatmul.mubr.bf16.gmra.mrb[0].mxu0 %v3089
    %v3233 = vpop.f32.mrb[0].mxu0
    %v3234 = vadd.f32 %v2774, %v3233
    %v3235 = vpop.f32.mrb[0].mxu0
    %v3236 = vpop.f32.mrb[0].mxu0
    %v3237 = vadd.f32 %v2779, %v3236
    %v3238 = vpop.f32.mrb[0].mxu0
    %3239 = vmatprep.mubr.bf16.mxu0 0
    %3240 = vmatmul.mubr.bf16.gmra.mrb[0].mxu0 %v3090
    %v3241 = vpop.f32.mrb[0].mxu0
    %v3242 = vadd.f32 %v2784, %v3241
    %v3243 = vpop.f32.mrb[0].mxu0
    %v3244 = vpop.f32.mrb[0].mxu0
    %v3245 = vadd.f32 %v2789, %v3244
    %v3246 = vpop.f32.mrb[0].mxu0
    %3247 = vmatprep.mubr.bf16.mxu0 0
    %3248 = vmatmul.mubr.bf16.gmra.mrb[0].mxu0 %v3091
    %v3249 = vpop.f32.mrb[0].mxu0
    %v3250 = vadd.f32 %v2794, %v3249
    %v3251 = vpop.f32.mrb[0].mxu0
    %v3252 = vpop.f32.mrb[0].mxu0
    %v3253 = vadd.f32 %v2799, %v3252
    %v3254 = vpop.f32.mrb[0].mxu0
    %3255 = vmatprep.mubr.bf16.mxu0 0
    %3256 = vmatmul.mubr.bf16.gmra.mrb[0].mxu0 %v3092
    %v3257 = vpop.f32.mrb[0].mxu0
    %v3258 = vadd.f32 %v2804, %v3257
    %v3259 = vpop.f32.mrb[0].mxu0
    %v3260 = vpop.f32.mrb[0].mxu0
    %v3261 = vadd.f32 %v2809, %v3260
    %v3262 = vpop.f32.mrb[0].mxu0
    %3263 = vmatprep.mubr.bf16.mxu0 0
    %3264 = vmatmul.mubr.bf16.gmra.mrb[0].mxu0 %v3093
    %v3265 = vpop.f32.mrb[0].mxu0
    %v3266 = vadd.f32 %v2814, %v3265
    %v3267 = vpop.f32.mrb[0].mxu0
    %v3268 = vpop.f32.mrb[0].mxu0
    %v3269 = vadd.f32 %v2819, %v3268
    %v3270 = vpop.f32.mrb[0].mxu0
    %3271 = vmatprep.mubr.bf16.mxu0 0
    %3272 = vmatmul.mubr.bf16.gmra.mrb[0].mxu0 %v3094
    %v3273 = vpop.f32.mrb[0].mxu0
    %v3274 = vadd.f32 %v2824, %v3273
    %v3275 = vpop.f32.mrb[0].mxu0
    %v3276 = vpop.f32.mrb[0].mxu0
    %v3277 = vadd.f32 %v2829, %v3276
    %v3278 = vpop.f32.mrb[0].mxu0
    %3279 = vmatprep.mubr.bf16.mxu0 0
    %3280 = vmatmul.mubr.bf16.gmra.mrb[0].mxu0 %v3095
    %v3281 = vpop.f32.mrb[0].mxu0
    %v3282 = vadd.f32 %v2834, %v3281
    %v3283 = vpop.f32.mrb[0].mxu0
    %v3284 = vpop.f32.mrb[0].mxu0
    %v3285 = vadd.f32 %v2839, %v3284
    %v3286 = vpop.f32.mrb[0].mxu0
    %3287 = vmatprep.mubr.bf16.mxu0 0
    %3288 = vmatmul.mubr.bf16.gmra.mrb[0].mxu0 %v3096
    %v3289 = vpop.f32.mrb[0].mxu0
    %v3290 = vadd.f32 %v2844, %v3289
    %v3291 = vpop.f32.mrb[0].mxu0
    %v3292 = vpop.f32.mrb[0].mxu0
    %v3293 = vadd.f32 %v2849, %v3292
    %v3294 = vpop.f32.mrb[0].mxu0
    %3295 = vmatprep.mubr.bf16.mxu0 0
    %3296 = vmatmul.mubr.bf16.gmra.mrb[0].mxu0 %v3097
    %v3297 = vpop.f32.mrb[0].mxu0
    %v3298 = vadd.f32 %v2854, %v3297
    %v3299 = vpop.f32.mrb[0].mxu0
    %v3300 = vpop.f32.mrb[0].mxu0
    %v3301 = vadd.f32 %v2859, %v3300
    %v3302 = vpop.f32.mrb[0].mxu0
    %3303 = vmatprep.mubr.bf16.mxu0 0
    %3304 = vmatmul.mubr.bf16.gmra.mrb[0].mxu0 %v3098
    %v3305 = vpop.f32.mrb[0].mxu0
    %v3306 = vadd.f32 %v2864, %v3305
    %v3307 = vpop.f32.mrb[0].mxu0
    %v3308 = vpop.f32.mrb[0].mxu0
    %v3309 = vadd.f32 %v2869, %v3308
    %v3310 = vpop.f32.mrb[0].mxu0
    %3311 = vmatprep.mubr.bf16.mxu0 0
    %3312 = vmatmul.mubr.bf16.gmra.mrb[0].mxu0 %v3099
    %v3313 = vpop.f32.mrb[0].mxu0
    %v3314 = vadd.f32 %v2874, %v3313
    %v3315 = vpop.f32.mrb[0].mxu0
    %v3316 = vpop.f32.mrb[0].mxu0
    %v3317 = vadd.f32 %v2879, %v3316
    %v3318 = vpop.f32.mrb[0].mxu0
    %3319 = vmatprep.mubr.bf16.mxu0 0
    %3320 = vmatmul.mubr.bf16.gmra.mrb[0].mxu0 %v3100
    %v3321 = vpop.f32.mrb[0].mxu0
    %v3322 = vadd.f32 %v2884, %v3321
    %v3323 = vpop.f32.mrb[0].mxu0
    %v3324 = vpop.f32.mrb[0].mxu0
    %v3325 = vadd.f32 %v2889, %v3324
    %v3326 = vpop.f32.mrb[0].mxu0
    %3327 = vmatprep.mubr.bf16.mxu0 0
    %3328 = vmatmul.mubr.bf16.gmra.mrb[0].mxu0 %v3101
    %v3329 = vpop.f32.mrb[0].mxu0
    %v3330 = vadd.f32 %v2894, %v3329
    %v3331 = vpop.f32.mrb[0].mxu0
    %v3332 = vpop.f32.mrb[0].mxu0
    %v3333 = vadd.f32 %v2899, %v3332
    %v3334 = vpop.f32.mrb[0].mxu0
    %3335 = vmatprep.mubr.bf16.mxu0 0
    %3336 = vmatmul.mubr.bf16.gmra.mrb[0].mxu0 %v3102
    %v3337 = vpop.f32.mrb[0].mxu0
    %v3338 = vadd.f32 %v2904, %v3337
    %v3339 = vpop.f32.mrb[0].mxu0
    %v3340 = vpop.f32.mrb[0].mxu0
    %v3341 = vadd.f32 %v2909, %v3340
    %v3342 = vpop.f32.mrb[0].mxu0
    %3343 = vmatprep.mubr.bf16.mxu0 0
    %3344 = vmatmul.mubr.bf16.gmra.mrb[0].mxu0 %v3103
    %v3345 = vpop.f32.mrb[0].mxu0
    %v3346 = vadd.f32 %v2914, %v3345
    %v3347 = vpop.f32.mrb[0].mxu0
    %v3348 = vpop.f32.mrb[0].mxu0
    %v3349 = vadd.f32 %v2919, %v3348
    %v3350 = vpop.f32.mrb[0].mxu0
    %3351 = vmatprep.mubr.bf16.mxu0 0
    %3352 = vmatmul.mubr.bf16.gmra.mrb[0].mxu0 %v3104
    %v3353 = vpop.f32.mrb[0].mxu0
    %v3354 = vadd.f32 %v2924, %v3353
    %v3355 = vpop.f32.mrb[0].mxu0
    %v3356 = vpop.f32.mrb[0].mxu0
    %v3357 = vadd.f32 %v2929, %v3356
    %v3358 = vpop.f32.mrb[0].mxu0
    %3359 = vmatprep.mubr.bf16.mxu0 0
    %3360 = vmatmul.mubr.bf16.gmra.mrb[0].mxu0 %v3105
    %v3361 = vpop.f32.mrb[0].mxu0
    %v3362 = vadd.f32 %v2934, %v3361
    %v3363 = vpop.f32.mrb[0].mxu0
    %v3364 = vpop.f32.mrb[0].mxu0
    %v3365 = vadd.f32 %v2939, %v3364
    %v3366 = vpop.f32.mrb[0].mxu0
    %3367 = vmatprep.mubr.bf16.mxu0 0
    %3368 = vmatmul.mubr.bf16.gmra.mrb[0].mxu0 %v3106
    %v3369 = vpop.f32.mrb[0].mxu0
    %v3370 = vadd.f32 %v2944, %v3369
    %v3371 = vpop.f32.mrb[0].mxu0
    %v3372 = vpop.f32.mrb[0].mxu0
    %v3373 = vadd.f32 %v2949, %v3372
    %v3374 = vpop.f32.mrb[0].mxu0
    %3375 = vmatprep.mubr.bf16.mxu0 0
    %3376 = vmatmul.mubr.bf16.gmra.mrb[0].mxu0 %v3107
    %v3377 = vpop.f32.mrb[0].mxu0
    %v3378 = vadd.f32 %v2954, %v3377
    %v3379 = vpop.f32.mrb[0].mxu0
    %v3380 = vpop.f32.mrb[0].mxu0
    %v3381 = vadd.f32 %v2959, %v3380
    %v3382 = vpop.f32.mrb[0].mxu0
    %3383 = vmatprep.mubr.bf16.mxu0 0
    %3384 = vmatmul.mubr.bf16.gmra.mrb[0].mxu0 %v3108
    %v3385 = vpop.f32.mrb[0].mxu0
    %v3386 = vadd.f32 %v2964, %v3385
    %v3387 = vpop.f32.mrb[0].mxu0
    %v3388 = vpop.f32.mrb[0].mxu0
    %v3389 = vadd.f32 %v2969, %v3388
    %v3390 = vpop.f32.mrb[0].mxu0
    %3391 = vmatprep.mubr.bf16.mxu0 0
    %3392 = vmatmul.mubr.bf16.gmra.mrb[0].mxu0 %v3109
    %v3393 = vpop.f32.mrb[0].mxu0
    %v3394 = vadd.f32 %v2974, %v3393
    %v3395 = vpop.f32.mrb[0].mxu0
    %v3396 = vpop.f32.mrb[0].mxu0
    %v3397 = vadd.f32 %v2979, %v3396
    %v3398 = vpop.f32.mrb[0].mxu0
    %3399 = vmatprep.mubr.bf16.mxu0 0
    %3400 = vmatmul.mubr.bf16.gmra.mrb[0].mxu0 %v3110
    %v3401 = vpop.f32.mrb[0].mxu0
    %v3402 = vadd.f32 %v2984, %v3401
    %v3403 = vpop.f32.mrb[0].mxu0
    %v3404 = vpop.f32.mrb[0].mxu0
    %v3405 = vadd.f32 %v2989, %v3404
    %v3406 = vpop.f32.mrb[0].mxu0
    %3407 = vdwg.mxu0
    %3408 = vrot.lane.b32.xlu0 %v3218, 8
    %v3409 = vpop.permute.xlu0 %3408
    %3410 = vrot.lane.b32.xlu0 %v3221, 8
    %v3411 = vpop.permute.xlu0 %3410
    %3412 = vrot.lane.b32.xlu0 %v3226, 8
    %v3413 = vpop.permute.xlu0 %3412
    %3414 = vrot.lane.b32.xlu0 %v3229, 8
    %v3415 = vpop.permute.xlu0 %3414
    %v3416 = vsel %vm852, %v3218, %v3409
    %v3417 = vsel %vm852, %v3221, %v3411
    %v3418 = vsel %vm852, %v3226, %v3413
    %v3419 = vsel %vm852, %v3229, %v3415
    %3420 = vrot.lane.b32.xlu0 %v3282, 1
    %v3421 = vpop.permute.xlu0 %3420
    %3422 = vrot.lane.b32.xlu0 %v3285, 1
    %v3423 = vpop.permute.xlu0 %3422
    %3424 = vrot.lane.b32.xlu0 %v3290, 1
    %v3425 = vpop.permute.xlu0 %3424
    %3426 = vrot.lane.b32.xlu0 %v3293, 1
    %v3427 = vpop.permute.xlu0 %3426
    %v3428 = vsel %vm866, %v3282, %v3421
    %v3429 = vsel %vm866, %v3285, %v3423
    %v3430 = vsel %vm866, %v3290, %v3425
    %v3431 = vsel %vm866, %v3293, %v3427
    %v3432 = vadd.f32 %v3416, %v3428
    %v3433 = vadd.f32 %v3417, %v3429
    %v3434 = vadd.f32 %v3418, %v3430
    %v3435 = vadd.f32 %v3419, %v3431
    %v3436 = vadd.f32 %v3432, %v3346
    %v3437 = vadd.f32 %v3433, %v3349
    %v3438 = vadd.f32 %v3434, %v3354
    %v3439 = vadd.f32 %v3435, %v3357
    %3440 = vadd.xlane.f32.xlu0 %v3436
    %v3441 = vpop.xlane.xlu0 %3440
    %3442 = vadd.xlane.f32.xlu0 %v3437
    %v3443 = vpop.xlane.xlu0 %3442
    %3444 = vadd.xlane.f32.xlu0 %v3438
    %v3445 = vpop.xlane.xlu0 %3444
    %3446 = vadd.xlane.f32.xlu0 %v3439
    %v3447 = vpop.xlane.xlu0 %3446
    %3448 = vrot.lane.b32.xlu0 %v3234, 120
    %v3449 = vpop.permute.xlu0 %3448
    %3450 = vrot.lane.b32.xlu0 %v3237, 120
    %v3451 = vpop.permute.xlu0 %3450
    %3452 = vrot.lane.b32.xlu0 %v3242, 120
    %v3453 = vpop.permute.xlu0 %3452
    %3454 = vrot.lane.b32.xlu0 %v3245, 120
    %v3455 = vpop.permute.xlu0 %3454
    %v3456 = vsel %vm896, %v3234, %v3449
    %v3457 = vsel %vm896, %v3237, %v3451
    %v3458 = vsel %vm896, %v3242, %v3453
    %v3459 = vsel %vm896, %v3245, %v3455
    %3460 = vrot.lane.b32.xlu0 %v3298, 127
    %v3461 = vpop.permute.xlu0 %3460
    %3462 = vrot.lane.b32.xlu0 %v3301, 127
    %v3463 = vpop.permute.xlu0 %3462
    %3464 = vrot.lane.b32.xlu0 %v3306, 127
    %v3465 = vpop.permute.xlu0 %3464
    %3466 = vrot.lane.b32.xlu0 %v3309, 127
    %v3467 = vpop.permute.xlu0 %3466
    %v3468 = vsel %vm910, %v3298, %v3461
    %v3469 = vsel %vm910, %v3301, %v3463
    %v3470 = vsel %vm910, %v3306, %v3465
    %v3471 = vsel %vm910, %v3309, %v3467
    %v3472 = vadd.f32 %v3456, %v3468
    %v3473 = vadd.f32 %v3457, %v3469
    %v3474 = vadd.f32 %v3458, %v3470
    %v3475 = vadd.f32 %v3459, %v3471
    %v3476 = vadd.f32 %v3472, %v3362
    %v3477 = vadd.f32 %v3473, %v3365
    %v3478 = vadd.f32 %v3474, %v3370
    %v3479 = vadd.f32 %v3475, %v3373
    %3480 = vadd.xlane.f32.xlu0 %v3476
    %v3481 = vpop.xlane.xlu0 %3480
    %3482 = vadd.xlane.f32.xlu0 %v3477
    %v3483 = vpop.xlane.xlu0 %3482
    %3484 = vadd.xlane.f32.xlu0 %v3478
    %v3485 = vpop.xlane.xlu0 %3484
    %3486 = vadd.xlane.f32.xlu0 %v3479
    %v3487 = vpop.xlane.xlu0 %3486
    %3488 = vrot.lane.b32.xlu0 %v3250, 1
    %v3489 = vpop.permute.xlu0 %3488
    %3490 = vrot.lane.b32.xlu0 %v3253, 1
    %v3491 = vpop.permute.xlu0 %3490
    %3492 = vrot.lane.b32.xlu0 %v3258, 1
    %v3493 = vpop.permute.xlu0 %3492
    %3494 = vrot.lane.b32.xlu0 %v3261, 1
    %v3495 = vpop.permute.xlu0 %3494
    %v3496 = vsel %vm866, %v3250, %v3489
    %v3497 = vsel %vm866, %v3253, %v3491
    %v3498 = vsel %vm866, %v3258, %v3493
    %v3499 = vsel %vm866, %v3261, %v3495
    %3500 = vrot.lane.b32.xlu0 %v3314, 8
    %v3501 = vpop.permute.xlu0 %3500
    %3502 = vrot.lane.b32.xlu0 %v3317, 8
    %v3503 = vpop.permute.xlu0 %3502
    %3504 = vrot.lane.b32.xlu0 %v3322, 8
    %v3505 = vpop.permute.xlu0 %3504
    %3506 = vrot.lane.b32.xlu0 %v3325, 8
    %v3507 = vpop.permute.xlu0 %3506
    %v3508 = vsel %vm852, %v3314, %v3501
    %v3509 = vsel %vm852, %v3317, %v3503
    %v3510 = vsel %vm852, %v3322, %v3505
    %v3511 = vsel %vm852, %v3325, %v3507
    %v3512 = vadd.f32 %v3496, %v3508
    %v3513 = vadd.f32 %v3497, %v3509
    %v3514 = vadd.f32 %v3498, %v3510
    %v3515 = vadd.f32 %v3499, %v3511
    %v3516 = vadd.f32 %v3512, %v3378
    %v3517 = vadd.f32 %v3513, %v3381
    %v3518 = vadd.f32 %v3514, %v3386
    %v3519 = vadd.f32 %v3515, %v3389
    %3520 = vadd.xlane.f32.xlu0 %v3516
    %v3521 = vpop.xlane.xlu0 %3520
    %3522 = vadd.xlane.f32.xlu0 %v3517
    %v3523 = vpop.xlane.xlu0 %3522
    %3524 = vadd.xlane.f32.xlu0 %v3518
    %v3525 = vpop.xlane.xlu0 %3524
    %3526 = vadd.xlane.f32.xlu0 %v3519
    %v3527 = vpop.xlane.xlu0 %3526
    %3528 = vrot.lane.b32.xlu0 %v3266, 127
    %v3529 = vpop.permute.xlu0 %3528
    %3530 = vrot.lane.b32.xlu0 %v3269, 127
    %v3531 = vpop.permute.xlu0 %3530
    %3532 = vrot.lane.b32.xlu0 %v3274, 127
    %v3533 = vpop.permute.xlu0 %3532
    %3534 = vrot.lane.b32.xlu0 %v3277, 127
    %v3535 = vpop.permute.xlu0 %3534
    %v3536 = vsel %vm910, %v3266, %v3529
    %v3537 = vsel %vm910, %v3269, %v3531
    %v3538 = vsel %vm910, %v3274, %v3533
    %v3539 = vsel %vm910, %v3277, %v3535
    %3540 = vrot.lane.b32.xlu0 %v3330, 120
    %v3541 = vpop.permute.xlu0 %3540
    %3542 = vrot.lane.b32.xlu0 %v3333, 120
    %v3543 = vpop.permute.xlu0 %3542
    %3544 = vrot.lane.b32.xlu0 %v3338, 120
    %v3545 = vpop.permute.xlu0 %3544
    %3546 = vrot.lane.b32.xlu0 %v3341, 120
    %v3547 = vpop.permute.xlu0 %3546
    %v3548 = vsel %vm896, %v3330, %v3541
    %v3549 = vsel %vm896, %v3333, %v3543
    %v3550 = vsel %vm896, %v3338, %v3545
    %v3551 = vsel %vm896, %v3341, %v3547
    %v3552 = vadd.f32 %v3536, %v3548
    %v3553 = vadd.f32 %v3537, %v3549
    %v3554 = vadd.f32 %v3538, %v3550
    %v3555 = vadd.f32 %v3539, %v3551
    %v3556 = vadd.f32 %v3552, %v3394
    %v3557 = vadd.f32 %v3553, %v3397
    %v3558 = vadd.f32 %v3554, %v3402
    %v3559 = vadd.f32 %v3555, %v3405
    %3560 = vadd.xlane.f32.xlu0 %v3556
    %v3561 = vpop.xlane.xlu0 %3560
    %3562 = vadd.xlane.f32.xlu0 %v3557
    %v3563 = vpop.xlane.xlu0 %3562
    %3564 = vadd.xlane.f32.xlu0 %v3558
    %v3565 = vpop.xlane.xlu0 %3564
    %3566 = vadd.xlane.f32.xlu0 %v3559
    %v3567 = vpop.xlane.xlu0 %3566
    %v3568 = vld [vmem:[#allocation2] sm:$0xf]
    %v3569 = vld [vmem:[#allocation2 + $0x4] sm:$0xf]
    %v3570 = vld [vmem:[#allocation2 + $0x8] sm:$0xf]
    %v3571 = vld [vmem:[#allocation2 + $0xc] sm:$0xf]
    %v3572 = vld [vmem:[#allocation2 + $0x10] sm:$0xf]
    %v3573 = vld [vmem:[#allocation2 + $0x14] sm:$0xf]
    %v3574 = vld [vmem:[#allocation2 + $0x18] sm:$0xf]
    %v3575 = vld [vmem:[#allocation2 + $0x1c] sm:$0xf]
    %v3576 = vld [vmem:[#allocation2 + $0x20] sm:$0xf]
    %v3577 = vld [vmem:[#allocation2 + $0x24] sm:$0xf]
    %v3578 = vld [vmem:[#allocation2 + $0x28] sm:$0xf]
    %v3579 = vld [vmem:[#allocation2 + $0x2c] sm:$0xf]
    %v3580 = vld [vmem:[#allocation2 + $0x30] sm:$0xf]
    %v3581 = vld [vmem:[#allocation2 + $0x34] sm:$0xf]
    %v3582 = vld [vmem:[#allocation2 + $0x38] sm:$0xf]
    %v3583 = vld [vmem:[#allocation2 + $0x3c] sm:$0xf]
    %v3584 = vpack.c.bf16 %v3443, %v3441
    %v3585 = vpack.c.bf16 %v3447, %v3445
    %v3586 = vpack.c.bf16 %v3483, %v3481
    %v3587 = vpack.c.bf16 %v3487, %v3485
    %v3588 = vpack.c.bf16 %v3523, %v3521
    %v3589 = vpack.c.bf16 %v3527, %v3525
    %v3590 = vpack.c.bf16 %v3563, %v3561
    %v3591 = vpack.c.bf16 %v3567, %v3565
    %v3608 = vunpack.c.l.b16 %v3568
    %v3609 = vunpack.c.l.b16 %v3569
    %v3610 = vunpack.c.l.b16 %v3570
    %v3611 = vunpack.c.l.b16 %v3571
    %v3612 = vunpack.c.l.b16 %v3572
    %v3613 = vunpack.c.l.b16 %v3573
    %v3614 = vunpack.c.l.b16 %v3574
    %v3615 = vunpack.c.l.b16 %v3575
    %v3616 = vunpack.c.l.b16 %v3576
    %v3617 = vunpack.c.l.b16 %v3577
    %v3618 = vunpack.c.l.b16 %v3578
    %v3619 = vunpack.c.l.b16 %v3579
    %v3620 = vunpack.c.l.b16 %v3580
    %v3621 = vunpack.c.l.b16 %v3581
    %v3622 = vunpack.c.l.b16 %v3582
    %v3623 = vunpack.c.l.b16 %v3583
    %v3624 = vpack.c.b16 %v3609, %v3608
    %v3625 = vpack.c.b16 %v3611, %v3610
    %v3626 = vpack.c.b16 %v3613, %v3612
    %v3627 = vpack.c.b16 %v3615, %v3614
    %v3628 = vpack.c.b16 %v3617, %v3616
    %v3629 = vpack.c.b16 %v3619, %v3618
    %v3630 = vpack.c.b16 %v3621, %v3620
    %v3631 = vpack.c.b16 %v3623, %v3622
    %3640 = vmatprep.subr.bf16.mxu0 0
    %3641 = vmatpush1.bf16.msra.mxu0 %v3584
    %3642 = vmatprep.subr.bf16.mxu0 0
    %3643 = vmatpush1.bf16.msra.mxu0 %v3585
    %3644 = vmatprep.subr.bf16.mxu0 0
    %3645 = vmatpush1.bf16.msra.mxu0 %v3586
    %3646 = vmatprep.subr.bf16.mxu0 0
    %3647 = vmatpush1.bf16.msra.mxu0 %v3587
    %3648 = vmatprep.subr.bf16.mxu0 0
    %3649 = vmatpush1.bf16.msra.mxu0 %v3588
    %3650 = vmatprep.subr.bf16.mxu0 0
    %3651 = vmatpush1.bf16.msra.mxu0 %v3589
    %3652 = vmatprep.subr.bf16.mxu0 0
    %3653 = vmatpush1.bf16.msra.mxu0 %v3590
    %3654 = vmatprep.subr.bf16.mxu0 0
    %3655 = vmatpush1.bf16.msra.mxu0 %v3591
    %3656 = vmatprep.subr.bf16.mxu0 0
    %3657 = vmatpush1.bf16.msra.mxu0 0
    %3658 = vmatprep.subr.bf16.mxu0 0
    %3659 = vmatpush1.bf16.msra.mxu0 0
    %3660 = vmatprep.subr.bf16.mxu0 0
    %3661 = vmatpush1.bf16.msra.mxu0 0
    %3662 = vmatprep.subr.bf16.mxu0 0
    %3663 = vmatpush1.bf16.msra.mxu0 0
    %3664 = vmatprep.subr.bf16.mxu0 0
    %3665 = vmatpush1.bf16.msra.mxu0 0
    %3666 = vmatprep.subr.bf16.mxu0 0
    %3667 = vmatpush1.bf16.msra.mxu0 0
    %3668 = vmatprep.subr.bf16.mxu0 0
    %3669 = vmatpush1.bf16.msra.mxu0 0
    %3670 = vmatprep.subr.bf16.mxu0 0
    %3671 = vmatpush1.bf16.msra.mxu0 0
    %3672 = vmatprep.mubr.bf16.mxu0 0
    %3673 = vmatmul.mubr.bf16.gmra.mrb[0].mxu0 %v3624
    %v3674 = vpop.f32.mrb[0].mxu0
    %v3675 = vadd.f32 0.0, %v3674
    %v3676 = vpop.f32.mrb[0].mxu0
    %v3677 = vpop.f32.mrb[0].mxu0
    %v3678 = vadd.f32 0.0, %v3677
    %v3679 = vpop.f32.mrb[0].mxu0
    %3680 = vmatprep.mubr.bf16.mxu0 0
    %3681 = vmatmul.mubr.bf16.gmra.mrb[0].mxu0 %v3625
    %v3682 = vpop.f32.mrb[0].mxu0
    %v3683 = vadd.f32 0.0, %v3682
    %v3684 = vpop.f32.mrb[0].mxu0
    %v3685 = vpop.f32.mrb[0].mxu0
    %v3686 = vadd.f32 0.0, %v3685
    %v3687 = vpop.f32.mrb[0].mxu0
    %3688 = vmatprep.mubr.bf16.mxu0 0
    %3689 = vmatmul.mubr.bf16.gmra.mrb[0].mxu0 %v3626
    %v3690 = vpop.f32.mrb[0].mxu0
    %v3691 = vadd.f32 0.0, %v3690
    %v3692 = vpop.f32.mrb[0].mxu0
    %v3693 = vpop.f32.mrb[0].mxu0
    %v3694 = vadd.f32 0.0, %v3693
    %v3695 = vpop.f32.mrb[0].mxu0
    %3696 = vmatprep.mubr.bf16.mxu0 0
    %3697 = vmatmul.mubr.bf16.gmra.mrb[0].mxu0 %v3627
    %v3698 = vpop.f32.mrb[0].mxu0
    %v3699 = vadd.f32 0.0, %v3698
    %v3700 = vpop.f32.mrb[0].mxu0
    %v3701 = vpop.f32.mrb[0].mxu0
    %v3702 = vadd.f32 0.0, %v3701
    %v3703 = vpop.f32.mrb[0].mxu0
    %3704 = vmatprep.mubr.bf16.mxu0 0
    %3705 = vmatmul.mubr.bf16.gmra.mrb[0].mxu0 %v3628
    %v3706 = vpop.f32.mrb[0].mxu0
    %v3707 = vadd.f32 0.0, %v3706
    %v3708 = vpop.f32.mrb[0].mxu0
    %v3709 = vpop.f32.mrb[0].mxu0
    %v3710 = vadd.f32 0.0, %v3709
    %v3711 = vpop.f32.mrb[0].mxu0
    %3712 = vmatprep.mubr.bf16.mxu0 0
    %3713 = vmatmul.mubr.bf16.gmra.mrb[0].mxu0 %v3629
    %v3714 = vpop.f32.mrb[0].mxu0
    %v3715 = vadd.f32 0.0, %v3714
    %v3716 = vpop.f32.mrb[0].mxu0
    %v3717 = vpop.f32.mrb[0].mxu0
    %v3718 = vadd.f32 0.0, %v3717
    %v3719 = vpop.f32.mrb[0].mxu0
    %3720 = vmatprep.mubr.bf16.mxu0 0
    %3721 = vmatmul.mubr.bf16.gmra.mrb[0].mxu0 %v3630
    %v3722 = vpop.f32.mrb[0].mxu0
    %v3723 = vadd.f32 0.0, %v3722
    %v3724 = vpop.f32.mrb[0].mxu0
    %v3725 = vpop.f32.mrb[0].mxu0
    %v3726 = vadd.f32 0.0, %v3725
    %v3727 = vpop.f32.mrb[0].mxu0
    %3728 = vmatprep.mubr.bf16.mxu0 0
    %3729 = vmatmul.mubr.bf16.gmra.mrb[0].mxu0 %v3631
    %v3730 = vpop.f32.mrb[0].mxu0
    %v3731 = vadd.f32 0.0, %v3730
    %v3732 = vpop.f32.mrb[0].mxu0
    %v3733 = vpop.f32.mrb[0].mxu0
    %v3734 = vadd.f32 0.0, %v3733
    %v3735 = vpop.f32.mrb[0].mxu0
    %3736 = vdwg.mxu0
    %v3737 = vmul.f32 %v3675, 0.5
    %v3738 = vmul.f32 %v3678, 0.5
    %v3739 = vmul.f32 %v3683, 0.5
    %v3740 = vmul.f32 %v3686, 0.5
    %v3741 = vmul.f32 %v3691, 0.5
    %v3742 = vmul.f32 %v3694, 0.5
    %v3743 = vmul.f32 %v3699, 0.5
    %v3744 = vmul.f32 %v3702, 0.5
    %v3745 = vmul.f32 %v3707, 0.5
    %v3746 = vmul.f32 %v3710, 0.5
    %v3747 = vmul.f32 %v3715, 0.5
    %v3748 = vmul.f32 %v3718, 0.5
    %v3749 = vmul.f32 %v3723, 0.5
    %v3750 = vmul.f32 %v3726, 0.5
    %v3751 = vmul.f32 %v3731, 0.5
    %v3752 = vmul.f32 %v3734, 0.5
    %v3753 = vmul.f32 %v3675, 0.70710677
    %v3754 = vmul.f32 %v3678, 0.70710677
    %v3755 = vmul.f32 %v3683, 0.70710677
    %v3756 = vmul.f32 %v3686, 0.70710677
    %v3757 = vmul.f32 %v3691, 0.70710677
    %v3758 = vmul.f32 %v3694, 0.70710677
    %v3759 = vmul.f32 %v3699, 0.70710677
    %v3760 = vmul.f32 %v3702, 0.70710677
    %v3761 = vmul.f32 %v3707, 0.70710677
    %v3762 = vmul.f32 %v3710, 0.70710677
    %v3763 = vmul.f32 %v3715, 0.70710677
    %v3764 = vmul.f32 %v3718, 0.70710677
    %v3765 = vmul.f32 %v3723, 0.70710677
    %v3766 = vmul.f32 %v3726, 0.70710677
    %v3767 = vmul.f32 %v3731, 0.70710677
    %v3768 = vmul.f32 %v3734, 0.70710677
    %v3769 = verf.f32.pop %v3753
    %v3770 = verf.f32.pop %v3754
    %v3771 = verf.f32.pop %v3755
    %v3772 = verf.f32.pop %v3756
    %v3773 = verf.f32.pop %v3757
    %v3774 = verf.f32.pop %v3758
    %v3775 = verf.f32.pop %v3759
    %v3776 = verf.f32.pop %v3760
    %v3777 = verf.f32.pop %v3761
    %v3778 = verf.f32.pop %v3762
    %v3779 = verf.f32.pop %v3763
    %v3780 = verf.f32.pop %v3764
    %v3781 = verf.f32.pop %v3765
    %v3782 = verf.f32.pop %v3766
    %v3783 = verf.f32.pop %v3767
    %v3784 = verf.f32.pop %v3768
    %v3785 = vadd.f32 %v3769, 1.0
    %v3786 = vadd.f32 %v3770, 1.0
    %v3787 = vadd.f32 %v3771, 1.0
    %v3788 = vadd.f32 %v3772, 1.0
    %v3789 = vadd.f32 %v3773, 1.0
    %v3790 = vadd.f32 %v3774, 1.0
    %v3791 = vadd.f32 %v3775, 1.0
    %v3792 = vadd.f32 %v3776, 1.0
    %v3793 = vadd.f32 %v3777, 1.0
    %v3794 = vadd.f32 %v3778, 1.0
    %v3795 = vadd.f32 %v3779, 1.0
    %v3796 = vadd.f32 %v3780, 1.0
    %v3797 = vadd.f32 %v3781, 1.0
    %v3798 = vadd.f32 %v3782, 1.0
    %v3799 = vadd.f32 %v3783, 1.0
    %v3800 = vadd.f32 %v3784, 1.0
    %v3801 = vmul.f32 %v3737, %v3785
    %v3802 = vmul.f32 %v3738, %v3786
    %v3803 = vmul.f32 %v3739, %v3787
    %v3804 = vmul.f32 %v3740, %v3788
    %v3805 = vmul.f32 %v3741, %v3789
    %v3806 = vmul.f32 %v3742, %v3790
    %v3807 = vmul.f32 %v3743, %v3791
    %v3808 = vmul.f32 %v3744, %v3792
    %v3809 = vmul.f32 %v3745, %v3793
    %v3810 = vmul.f32 %v3746, %v3794
    %v3811 = vmul.f32 %v3747, %v3795
    %v3812 = vmul.f32 %v3748, %v3796
    %v3813 = vmul.f32 %v3749, %v3797
    %v3814 = vmul.f32 %v3750, %v3798
    %v3815 = vmul.f32 %v3751, %v3799
    %v3816 = vmul.f32 %v3752, %v3800
    %v3817 = vld [vmem:[%s4] sm:$0xf]
    %v3818 = vld [vmem:[%s4 + $0x4] sm:$0xf]
    %v3819 = vld [vmem:[%s4 + $0x8] sm:$0xf]
    %v3820 = vld [vmem:[%s4 + $0xc] sm:$0xf]
    %v3821 = vld [vmem:[%s4 + $0x10] sm:$0xf]
    %v3822 = vld [vmem:[%s4 + $0x14] sm:$0xf]
    %v3823 = vld [vmem:[%s4 + $0x18] sm:$0xf]
    %v3824 = vld [vmem:[%s4 + $0x1c] sm:$0xf]
    %v3825 = vld [vmem:[%s4 + $0x20] sm:$0xf]
    %v3826 = vld [vmem:[%s4 + $0x24] sm:$0xf]
    %v3827 = vld [vmem:[%s4 + $0x28] sm:$0xf]
    %v3828 = vld [vmem:[%s4 + $0x2c] sm:$0xf]
    %v3829 = vld [vmem:[%s4 + $0x30] sm:$0xf]
    %v3830 = vld [vmem:[%s4 + $0x34] sm:$0xf]
    %v3831 = vld [vmem:[%s4 + $0x38] sm:$0xf]
    %v3832 = vld [vmem:[%s4 + $0x3c] sm:$0xf]
    %v3833 = vld [vmem:[%s4 + $0x40] sm:$0xf]
    %v3834 = vld [vmem:[%s4 + $0x44] sm:$0xf]
    %v3835 = vld [vmem:[%s4 + $0x48] sm:$0xf]
    %v3836 = vld [vmem:[%s4 + $0x4c] sm:$0xf]
    %v3837 = vld [vmem:[%s4 + $0x50] sm:$0xf]
    %v3838 = vld [vmem:[%s4 + $0x54] sm:$0xf]
    %v3839 = vld [vmem:[%s4 + $0x58] sm:$0xf]
    %v3840 = vld [vmem:[%s4 + $0x5c] sm:$0xf]
    %v3841 = vld [vmem:[%s4 + $0x60] sm:$0xf]
    %v3842 = vld [vmem:[%s4 + $0x64] sm:$0xf]
    %v3843 = vld [vmem:[%s4 + $0x68] sm:$0xf]
    %v3844 = vld [vmem:[%s4 + $0x6c] sm:$0xf]
    %v3845 = vld [vmem:[%s4 + $0x70] sm:$0xf]
    %v3846 = vld [vmem:[%s4 + $0x74] sm:$0xf]
    %v3847 = vld [vmem:[%s4 + $0x78] sm:$0xf]
    %v3848 = vld [vmem:[%s4 + $0x7c] sm:$0xf]
    %v3849 = vld [vmem:[%s4 + $0x80] sm:$0xf]
    %v3850 = vld [vmem:[%s4 + $0x84] sm:$0xf]
    %v3851 = vld [vmem:[%s4 + $0x88] sm:$0xf]
    %v3852 = vld [vmem:[%s4 + $0x8c] sm:$0xf]
    %v3853 = vld [vmem:[%s4 + $0x90] sm:$0xf]
    %v3854 = vld [vmem:[%s4 + $0x94] sm:$0xf]
    %v3855 = vld [vmem:[%s4 + $0x98] sm:$0xf]
    %v3856 = vld [vmem:[%s4 + $0x9c] sm:$0xf]
    %v3857 = vld [vmem:[%s4 + $0xa0] sm:$0xf]
    %v3858 = vld [vmem:[%s4 + $0xa4] sm:$0xf]
    %v3859 = vld [vmem:[%s4 + $0xa8] sm:$0xf]
    %v3860 = vld [vmem:[%s4 + $0xac] sm:$0xf]
    %v3861 = vld [vmem:[%s4 + $0xb0] sm:$0xf]
    %v3862 = vld [vmem:[%s4 + $0xb4] sm:$0xf]
    %v3863 = vld [vmem:[%s4 + $0xb8] sm:$0xf]
    %v3864 = vld [vmem:[%s4 + $0xbc] sm:$0xf]
    %v3865 = vpack.c.bf16 %v3802, %v3801
    %v3866 = vpack.c.bf16 %v3804, %v3803
    %v3867 = vpack.c.bf16 %v3806, %v3805
    %v3868 = vpack.c.bf16 %v3808, %v3807
    %v3869 = vpack.c.bf16 %v3810, %v3809
    %v3870 = vpack.c.bf16 %v3812, %v3811
    %v3871 = vpack.c.bf16 %v3814, %v3813
    %v3872 = vpack.c.bf16 %v3816, %v3815
    %v3921 = vunpack.c.l.b16 %v3817
    %v3922 = vunpack.c.l.b16 %v3818
    %v3923 = vunpack.c.l.b16 %v3819
    %v3924 = vunpack.c.l.b16 %v3820
    %v3925 = vunpack.c.l.b16 %v3821
    %v3926 = vunpack.c.l.b16 %v3822
    %v3927 = vunpack.c.l.b16 %v3823
    %v3928 = vunpack.c.l.b16 %v3824
    %v3929 = vunpack.c.l.b16 %v3825
    %v3930 = vunpack.c.l.b16 %v3826
    %v3931 = vunpack.c.l.b16 %v3827
    %v3932 = vunpack.c.l.b16 %v3828
    %v3933 = vunpack.c.l.b16 %v3829
    %v3934 = vunpack.c.l.b16 %v3830
    %v3935 = vunpack.c.l.b16 %v3831
    %v3936 = vunpack.c.l.b16 %v3832
    %v3937 = vunpack.c.l.b16 %v3833
    %v3938 = vunpack.c.l.b16 %v3834
    %v3939 = vunpack.c.l.b16 %v3835
    %v3940 = vunpack.c.l.b16 %v3836
    %v3941 = vunpack.c.l.b16 %v3837
    %v3942 = vunpack.c.l.b16 %v3838
    %v3943 = vunpack.c.l.b16 %v3839
    %v3944 = vunpack.c.l.b16 %v3840
    %v3945 = vunpack.c.l.b16 %v3841
    %v3946 = vunpack.c.l.b16 %v3842
    %v3947 = vunpack.c.l.b16 %v3843
    %v3948 = vunpack.c.l.b16 %v3844
    %v3949 = vunpack.c.l.b16 %v3845
    %v3950 = vunpack.c.l.b16 %v3846
    %v3951 = vunpack.c.l.b16 %v3847
    %v3952 = vunpack.c.l.b16 %v3848
    %v3953 = vunpack.c.l.b16 %v3849
    %v3954 = vunpack.c.l.b16 %v3850
    %v3955 = vunpack.c.l.b16 %v3851
    %v3956 = vunpack.c.l.b16 %v3852
    %v3957 = vunpack.c.l.b16 %v3853
    %v3958 = vunpack.c.l.b16 %v3854
    %v3959 = vunpack.c.l.b16 %v3855
    %v3960 = vunpack.c.l.b16 %v3856
    %v3961 = vunpack.c.l.b16 %v3857
    %v3962 = vunpack.c.l.b16 %v3858
    %v3963 = vunpack.c.l.b16 %v3859
    %v3964 = vunpack.c.l.b16 %v3860
    %v3965 = vunpack.c.l.b16 %v3861
    %v3966 = vunpack.c.l.b16 %v3862
    %v3967 = vunpack.c.l.b16 %v3863
    %v3968 = vunpack.c.l.b16 %v3864
    %v3969 = vpack.c.b16 %v3922, %v3921
    %v3970 = vpack.c.b16 %v3924, %v3923
    %v3971 = vpack.c.b16 %v3926, %v3925
    %v3972 = vpack.c.b16 %v3928, %v3927
    %v3973 = vpack.c.b16 %v3930, %v3929
    %v3974 = vpack.c.b16 %v3932, %v3931
    %v3975 = vpack.c.b16 %v3934, %v3933
    %v3976 = vpack.c.b16 %v3936, %v3935
    %v3977 = vpack.c.b16 %v3938, %v3937
    %v3978 = vpack.c.b16 %v3940, %v3939
    %v3979 = vpack.c.b16 %v3942, %v3941
    %v3980 = vpack.c.b16 %v3944, %v3943
    %v3981 = vpack.c.b16 %v3946, %v3945
    %v3982 = vpack.c.b16 %v3948, %v3947
    %v3983 = vpack.c.b16 %v3950, %v3949
    %v3984 = vpack.c.b16 %v3952, %v3951
    %v3985 = vpack.c.b16 %v3954, %v3953
    %v3986 = vpack.c.b16 %v3956, %v3955
    %v3987 = vpack.c.b16 %v3958, %v3957
    %v3988 = vpack.c.b16 %v3960, %v3959
    %v3989 = vpack.c.b16 %v3962, %v3961
    %v3990 = vpack.c.b16 %v3964, %v3963
    %v3991 = vpack.c.b16 %v3966, %v3965
    %v3992 = vpack.c.b16 %v3968, %v3967
    %4017 = vmatprep.subr.bf16.mxu0 0
    %4018 = vmatpush1.bf16.msra.mxu0 %v3865
    %4019 = vmatprep.subr.bf16.mxu0 0
    %4020 = vmatpush1.bf16.msra.mxu0 %v3866
    %4021 = vmatprep.subr.bf16.mxu0 0
    %4022 = vmatpush1.bf16.msra.mxu0 %v3867
    %4023 = vmatprep.subr.bf16.mxu0 0
    %4024 = vmatpush1.bf16.msra.mxu0 %v3868
    %4025 = vmatprep.subr.bf16.mxu0 0
    %4026 = vmatpush1.bf16.msra.mxu0 %v3869
    %4027 = vmatprep.subr.bf16.mxu0 0
    %4028 = vmatpush1.bf16.msra.mxu0 %v3870
    %4029 = vmatprep.subr.bf16.mxu0 0
    %4030 = vmatpush1.bf16.msra.mxu0 %v3871
    %4031 = vmatprep.subr.bf16.mxu0 0
    %4032 = vmatpush1.bf16.msra.mxu0 %v3872
    %4033 = vmatprep.subr.bf16.mxu0 0
    %4034 = vmatpush1.bf16.msra.mxu0 0
    %4035 = vmatprep.subr.bf16.mxu0 0
    %4036 = vmatpush1.bf16.msra.mxu0 0
    %4037 = vmatprep.subr.bf16.mxu0 0
    %4038 = vmatpush1.bf16.msra.mxu0 0
    %4039 = vmatprep.subr.bf16.mxu0 0
    %4040 = vmatpush1.bf16.msra.mxu0 0
    %4041 = vmatprep.subr.bf16.mxu0 0
    %4042 = vmatpush1.bf16.msra.mxu0 0
    %4043 = vmatprep.subr.bf16.mxu0 0
    %4044 = vmatpush1.bf16.msra.mxu0 0
    %4045 = vmatprep.subr.bf16.mxu0 0
    %4046 = vmatpush1.bf16.msra.mxu0 0
    %4047 = vmatprep.subr.bf16.mxu0 0
    %4048 = vmatpush1.bf16.msra.mxu0 0
    %4049 = vmatprep.mubr.bf16.mxu0 0
    %4050 = vmatmul.mubr.bf16.gmra.mrb[0].mxu0 %v3969
    %v4051 = vpop.f32.mrb[0].mxu0
    %v4052 = vadd.f32 0.0, %v4051
    %v4053 = vpop.f32.mrb[0].mxu0
    %v4054 = vpop.f32.mrb[0].mxu0
    %v4055 = vadd.f32 0.0, %v4054
    %v4056 = vpop.f32.mrb[0].mxu0
    %4057 = vmatprep.mubr.bf16.mxu0 0
    %4058 = vmatmul.mubr.bf16.gmra.mrb[0].mxu0 %v3970
    %v4059 = vpop.f32.mrb[0].mxu0
    %v4060 = vadd.f32 0.0, %v4059
    %v4061 = vpop.f32.mrb[0].mxu0
    %v4062 = vpop.f32.mrb[0].mxu0
    %v4063 = vadd.f32 0.0, %v4062
    %v4064 = vpop.f32.mrb[0].mxu0
    %4065 = vmatprep.mubr.bf16.mxu0 0
    %4066 = vmatmul.mubr.bf16.gmra.mrb[0].mxu0 %v3971
    %v4067 = vpop.f32.mrb[0].mxu0
    %v4068 = vadd.f32 0.0, %v4067
    %v4069 = vpop.f32.mrb[0].mxu0
    %v4070 = vpop.f32.mrb[0].mxu0
    %v4071 = vadd.f32 0.0, %v4070
    %v4072 = vpop.f32.mrb[0].mxu0
    %4073 = vmatprep.mubr.bf16.mxu0 0
    %4074 = vmatmul.mubr.bf16.gmra.mrb[0].mxu0 %v3972
    %v4075 = vpop.f32.mrb[0].mxu0
    %v4076 = vadd.f32 0.0, %v4075
    %v4077 = vpop.f32.mrb[0].mxu0
    %v4078 = vpop.f32.mrb[0].mxu0
    %v4079 = vadd.f32 0.0, %v4078
    %v4080 = vpop.f32.mrb[0].mxu0
    %4081 = vmatprep.mubr.bf16.mxu0 0
    %4082 = vmatmul.mubr.bf16.gmra.mrb[0].mxu0 %v3973
    %v4083 = vpop.f32.mrb[0].mxu0
    %v4084 = vadd.f32 0.0, %v4083
    %v4085 = vpop.f32.mrb[0].mxu0
    %v4086 = vpop.f32.mrb[0].mxu0
    %v4087 = vadd.f32 0.0, %v4086
    %v4088 = vpop.f32.mrb[0].mxu0
    %4089 = vmatprep.mubr.bf16.mxu0 0
    %4090 = vmatmul.mubr.bf16.gmra.mrb[0].mxu0 %v3974
    %v4091 = vpop.f32.mrb[0].mxu0
    %v4092 = vadd.f32 0.0, %v4091
    %v4093 = vpop.f32.mrb[0].mxu0
    %v4094 = vpop.f32.mrb[0].mxu0
    %v4095 = vadd.f32 0.0, %v4094
    %v4096 = vpop.f32.mrb[0].mxu0
    %4097 = vmatprep.mubr.bf16.mxu0 0
    %4098 = vmatmul.mubr.bf16.gmra.mrb[0].mxu0 %v3975
    %v4099 = vpop.f32.mrb[0].mxu0
    %v4100 = vadd.f32 0.0, %v4099
    %v4101 = vpop.f32.mrb[0].mxu0
    %v4102 = vpop.f32.mrb[0].mxu0
    %v4103 = vadd.f32 0.0, %v4102
    %v4104 = vpop.f32.mrb[0].mxu0
    %4105 = vmatprep.mubr.bf16.mxu0 0
    %4106 = vmatmul.mubr.bf16.gmra.mrb[0].mxu0 %v3976
    %v4107 = vpop.f32.mrb[0].mxu0
    %v4108 = vadd.f32 0.0, %v4107
    %v4109 = vpop.f32.mrb[0].mxu0
    %v4110 = vpop.f32.mrb[0].mxu0
    %v4111 = vadd.f32 0.0, %v4110
    %v4112 = vpop.f32.mrb[0].mxu0
    %4113 = vmatprep.mubr.bf16.mxu0 0
    %4114 = vmatmul.mubr.bf16.gmra.mrb[0].mxu0 %v3977
    %v4115 = vpop.f32.mrb[0].mxu0
    %v4116 = vadd.f32 0.0, %v4115
    %v4117 = vpop.f32.mrb[0].mxu0
    %v4118 = vpop.f32.mrb[0].mxu0
    %v4119 = vadd.f32 0.0, %v4118
    %v4120 = vpop.f32.mrb[0].mxu0
    %4121 = vmatprep.mubr.bf16.mxu0 0
    %4122 = vmatmul.mubr.bf16.gmra.mrb[0].mxu0 %v3978
    %v4123 = vpop.f32.mrb[0].mxu0
    %v4124 = vadd.f32 0.0, %v4123
    %v4125 = vpop.f32.mrb[0].mxu0
    %v4126 = vpop.f32.mrb[0].mxu0
    %v4127 = vadd.f32 0.0, %v4126
    %v4128 = vpop.f32.mrb[0].mxu0
    %4129 = vmatprep.mubr.bf16.mxu0 0
    %4130 = vmatmul.mubr.bf16.gmra.mrb[0].mxu0 %v3979
    %v4131 = vpop.f32.mrb[0].mxu0
    %v4132 = vadd.f32 0.0, %v4131
    %v4133 = vpop.f32.mrb[0].mxu0
    %v4134 = vpop.f32.mrb[0].mxu0
    %v4135 = vadd.f32 0.0, %v4134
    %v4136 = vpop.f32.mrb[0].mxu0
    %4137 = vmatprep.mubr.bf16.mxu0 0
    %4138 = vmatmul.mubr.bf16.gmra.mrb[0].mxu0 %v3980
    %v4139 = vpop.f32.mrb[0].mxu0
    %v4140 = vadd.f32 0.0, %v4139
    %v4141 = vpop.f32.mrb[0].mxu0
    %v4142 = vpop.f32.mrb[0].mxu0
    %v4143 = vadd.f32 0.0, %v4142
    %v4144 = vpop.f32.mrb[0].mxu0
    %4145 = vmatprep.mubr.bf16.mxu0 0
    %4146 = vmatmul.mubr.bf16.gmra.mrb[0].mxu0 %v3981
    %v4147 = vpop.f32.mrb[0].mxu0
    %v4148 = vadd.f32 0.0, %v4147
    %v4149 = vpop.f32.mrb[0].mxu0
    %v4150 = vpop.f32.mrb[0].mxu0
    %v4151 = vadd.f32 0.0, %v4150
    %v4152 = vpop.f32.mrb[0].mxu0
    %4153 = vmatprep.mubr.bf16.mxu0 0
    %4154 = vmatmul.mubr.bf16.gmra.mrb[0].mxu0 %v3982
    %v4155 = vpop.f32.mrb[0].mxu0
    %v4156 = vadd.f32 0.0, %v4155
    %v4157 = vpop.f32.mrb[0].mxu0
    %v4158 = vpop.f32.mrb[0].mxu0
    %v4159 = vadd.f32 0.0, %v4158
    %v4160 = vpop.f32.mrb[0].mxu0
    %4161 = vmatprep.mubr.bf16.mxu0 0
    %4162 = vmatmul.mubr.bf16.gmra.mrb[0].mxu0 %v3983
    %v4163 = vpop.f32.mrb[0].mxu0
    %v4164 = vadd.f32 0.0, %v4163
    %v4165 = vpop.f32.mrb[0].mxu0
    %v4166 = vpop.f32.mrb[0].mxu0
    %v4167 = vadd.f32 0.0, %v4166
    %v4168 = vpop.f32.mrb[0].mxu0
    %4169 = vmatprep.mubr.bf16.mxu0 0
    %4170 = vmatmul.mubr.bf16.gmra.mrb[0].mxu0 %v3984
    %v4171 = vpop.f32.mrb[0].mxu0
    %v4172 = vadd.f32 0.0, %v4171
    %v4173 = vpop.f32.mrb[0].mxu0
    %v4174 = vpop.f32.mrb[0].mxu0
    %v4175 = vadd.f32 0.0, %v4174
    %v4176 = vpop.f32.mrb[0].mxu0
    %4177 = vmatprep.mubr.bf16.mxu0 0
    %4178 = vmatmul.mubr.bf16.gmra.mrb[0].mxu0 %v3985
    %v4179 = vpop.f32.mrb[0].mxu0
    %v4180 = vadd.f32 0.0, %v4179
    %v4181 = vpop.f32.mrb[0].mxu0
    %v4182 = vpop.f32.mrb[0].mxu0
    %v4183 = vadd.f32 0.0, %v4182
    %v4184 = vpop.f32.mrb[0].mxu0
    %4185 = vmatprep.mubr.bf16.mxu0 0
    %4186 = vmatmul.mubr.bf16.gmra.mrb[0].mxu0 %v3986
    %v4187 = vpop.f32.mrb[0].mxu0
    %v4188 = vadd.f32 0.0, %v4187
    %v4189 = vpop.f32.mrb[0].mxu0
    %v4190 = vpop.f32.mrb[0].mxu0
    %v4191 = vadd.f32 0.0, %v4190
    %v4192 = vpop.f32.mrb[0].mxu0
    %4193 = vmatprep.mubr.bf16.mxu0 0
    %4194 = vmatmul.mubr.bf16.gmra.mrb[0].mxu0 %v3987
    %v4195 = vpop.f32.mrb[0].mxu0
    %v4196 = vadd.f32 0.0, %v4195
    %v4197 = vpop.f32.mrb[0].mxu0
    %v4198 = vpop.f32.mrb[0].mxu0
    %v4199 = vadd.f32 0.0, %v4198
    %v4200 = vpop.f32.mrb[0].mxu0
    %4201 = vmatprep.mubr.bf16.mxu0 0
    %4202 = vmatmul.mubr.bf16.gmra.mrb[0].mxu0 %v3988
    %v4203 = vpop.f32.mrb[0].mxu0
    %v4204 = vadd.f32 0.0, %v4203
    %v4205 = vpop.f32.mrb[0].mxu0
    %v4206 = vpop.f32.mrb[0].mxu0
    %v4207 = vadd.f32 0.0, %v4206
    %v4208 = vpop.f32.mrb[0].mxu0
    %4209 = vmatprep.mubr.bf16.mxu0 0
    %4210 = vmatmul.mubr.bf16.gmra.mrb[0].mxu0 %v3989
    %v4211 = vpop.f32.mrb[0].mxu0
    %v4212 = vadd.f32 0.0, %v4211
    %v4213 = vpop.f32.mrb[0].mxu0
    %v4214 = vpop.f32.mrb[0].mxu0
    %v4215 = vadd.f32 0.0, %v4214
    %v4216 = vpop.f32.mrb[0].mxu0
    %4217 = vmatprep.mubr.bf16.mxu0 0
    %4218 = vmatmul.mubr.bf16.gmra.mrb[0].mxu0 %v3990
    %v4219 = vpop.f32.mrb[0].mxu0
    %v4220 = vadd.f32 0.0, %v4219
    %v4221 = vpop.f32.mrb[0].mxu0
    %v4222 = vpop.f32.mrb[0].mxu0
    %v4223 = vadd.f32 0.0, %v4222
    %v4224 = vpop.f32.mrb[0].mxu0
    %4225 = vmatprep.mubr.bf16.mxu0 0
    %4226 = vmatmul.mubr.bf16.gmra.mrb[0].mxu0 %v3991
    %v4227 = vpop.f32.mrb[0].mxu0
    %v4228 = vadd.f32 0.0, %v4227
    %v4229 = vpop.f32.mrb[0].mxu0
    %v4230 = vpop.f32.mrb[0].mxu0
    %v4231 = vadd.f32 0.0, %v4230
    %v4232 = vpop.f32.mrb[0].mxu0
    %4233 = vmatprep.mubr.bf16.mxu0 0
    %4234 = vmatmul.mubr.bf16.gmra.mrb[0].mxu0 %v3992
    %v4235 = vpop.f32.mrb[0].mxu0
    %v4236 = vadd.f32 0.0, %v4235
    %v4237 = vpop.f32.mrb[0].mxu0
    %v4238 = vpop.f32.mrb[0].mxu0
    %v4239 = vadd.f32 0.0, %v4238
    %v4240 = vpop.f32.mrb[0].mxu0
    %4241 = vdwg.mxu0
    %v4242 = vmax.f32 %v4052, %v4116
    %v4243 = vmax.f32 %v4055, %v4119
    %v4244 = vmax.f32 %v4060, %v4124
    %v4245 = vmax.f32 %v4063, %v4127
    %v4246 = vmax.f32 %v4068, %v4132
    %v4247 = vmax.f32 %v4071, %v4135
    %v4248 = vmax.f32 %v4076, %v4140
    %v4249 = vmax.f32 %v4079, %v4143
    %v4250 = vmax.f32 %v4084, %v4148
    %v4251 = vmax.f32 %v4087, %v4151
    %v4252 = vmax.f32 %v4092, %v4156
    %v4253 = vmax.f32 %v4095, %v4159
    %v4254 = vmax.f32 %v4100, %v4164
    %v4255 = vmax.f32 %v4103, %v4167
    %v4256 = vmax.f32 %v4108, %v4172
    %v4257 = vmax.f32 %v4111, %v4175
    %v4258 = vmax.f32 %v4242, %v4180
    %v4259 = vmax.f32 %v4243, %v4183
    %v4260 = vmax.f32 %v4244, %v4188
    %v4261 = vmax.f32 %v4245, %v4191
    %v4262 = vmax.f32 %v4246, %v4196
    %v4263 = vmax.f32 %v4247, %v4199
    %v4264 = vmax.f32 %v4248, %v4204
    %v4265 = vmax.f32 %v4249, %v4207
    %v4266 = vmax.f32 %v4250, %v4212
    %v4267 = vmax.f32 %v4251, %v4215
    %v4268 = vmax.f32 %v4252, %v4220
    %v4269 = vmax.f32 %v4253, %v4223
    %v4270 = vmax.f32 %v4254, %v4228
    %v4271 = vmax.f32 %v4255, %v4231
    %v4272 = vmax.f32 %v4256, %v4236
    %v4273 = vmax.f32 %v4257, %v4239
    %v4274 = vsub.f32 %v4052, %v4258
    %v4275 = vsub.f32 %v4055, %v4259
    %v4276 = vsub.f32 %v4060, %v4260
    %v4277 = vsub.f32 %v4063, %v4261
    %v4278 = vsub.f32 %v4068, %v4262
    %v4279 = vsub.f32 %v4071, %v4263
    %v4280 = vsub.f32 %v4076, %v4264
    %v4281 = vsub.f32 %v4079, %v4265
    %v4282 = vsub.f32 %v4084, %v4266
    %v4283 = vsub.f32 %v4087, %v4267
    %v4284 = vsub.f32 %v4092, %v4268
    %v4285 = vsub.f32 %v4095, %v4269
    %v4286 = vsub.f32 %v4100, %v4270
    %v4287 = vsub.f32 %v4103, %v4271
    %v4288 = vsub.f32 %v4108, %v4272
    %v4289 = vsub.f32 %v4111, %v4273
    %v4290 = vmul.f32 %v4274, 1.442695
    %v4291 = vpow.pop %v4290
    %v4292 = vmul.f32 %v4275, 1.442695
    %v4293 = vpow.pop %v4292
    %v4294 = vmul.f32 %v4276, 1.442695
    %v4295 = vpow.pop %v4294
    %v4296 = vmul.f32 %v4277, 1.442695
    %v4297 = vpow.pop %v4296
    %v4298 = vmul.f32 %v4278, 1.442695
    %v4299 = vpow.pop %v4298
    %v4300 = vmul.f32 %v4279, 1.442695
    %v4301 = vpow.pop %v4300
    %v4302 = vmul.f32 %v4280, 1.442695
    %v4303 = vpow.pop %v4302
    %v4304 = vmul.f32 %v4281, 1.442695
    %v4305 = vpow.pop %v4304
    %v4306 = vmul.f32 %v4282, 1.442695
    %v4307 = vpow.pop %v4306
    %v4308 = vmul.f32 %v4283, 1.442695
    %v4309 = vpow.pop %v4308
    %v4310 = vmul.f32 %v4284, 1.442695
    %v4311 = vpow.pop %v4310
    %v4312 = vmul.f32 %v4285, 1.442695
    %v4313 = vpow.pop %v4312
    %v4314 = vmul.f32 %v4286, 1.442695
    %v4315 = vpow.pop %v4314
    %v4316 = vmul.f32 %v4287, 1.442695
    %v4317 = vpow.pop %v4316
    %v4318 = vmul.f32 %v4288, 1.442695
    %v4319 = vpow.pop %v4318
    %v4320 = vmul.f32 %v4289, 1.442695
    %v4321 = vpow.pop %v4320
    %v4322 = vsub.f32 %v4116, %v4258
    %v4323 = vsub.f32 %v4119, %v4259
    %v4324 = vsub.f32 %v4124, %v4260
    %v4325 = vsub.f32 %v4127, %v4261
    %v4326 = vsub.f32 %v4132, %v4262
    %v4327 = vsub.f32 %v4135, %v4263
    %v4328 = vsub.f32 %v4140, %v4264
    %v4329 = vsub.f32 %v4143, %v4265
    %v4330 = vsub.f32 %v4148, %v4266
    %v4331 = vsub.f32 %v4151, %v4267
    %v4332 = vsub.f32 %v4156, %v4268
    %v4333 = vsub.f32 %v4159, %v4269
    %v4334 = vsub.f32 %v4164, %v4270
    %v4335 = vsub.f32 %v4167, %v4271
    %v4336 = vsub.f32 %v4172, %v4272
    %v4337 = vsub.f32 %v4175, %v4273
    %v4338 = vmul.f32 %v4322, 1.442695
    %v4339 = vpow.pop %v4338
    %v4340 = vmul.f32 %v4323, 1.442695
    %v4341 = vpow.pop %v4340
    %v4342 = vmul.f32 %v4324, 1.442695
    %v4343 = vpow.pop %v4342
    %v4344 = vmul.f32 %v4325, 1.442695
    %v4345 = vpow.pop %v4344
    %v4346 = vmul.f32 %v4326, 1.442695
    %v4347 = vpow.pop %v4346
    %v4348 = vmul.f32 %v4327, 1.442695
    %v4349 = vpow.pop %v4348
    %v4350 = vmul.f32 %v4328, 1.442695
    %v4351 = vpow.pop %v4350
    %v4352 = vmul.f32 %v4329, 1.442695
    %v4353 = vpow.pop %v4352
    %v4354 = vmul.f32 %v4330, 1.442695
    %v4355 = vpow.pop %v4354
    %v4356 = vmul.f32 %v4331, 1.442695
    %v4357 = vpow.pop %v4356
    %v4358 = vmul.f32 %v4332, 1.442695
    %v4359 = vpow.pop %v4358
    %v4360 = vmul.f32 %v4333, 1.442695
    %v4361 = vpow.pop %v4360
    %v4362 = vmul.f32 %v4334, 1.442695
    %v4363 = vpow.pop %v4362
    %v4364 = vmul.f32 %v4335, 1.442695
    %v4365 = vpow.pop %v4364
    %v4366 = vmul.f32 %v4336, 1.442695
    %v4367 = vpow.pop %v4366
    %v4368 = vmul.f32 %v4337, 1.442695
    %v4369 = vpow.pop %v4368
    %v4370 = vsub.f32 %v4180, %v4258
    %v4371 = vsub.f32 %v4183, %v4259
    %v4372 = vsub.f32 %v4188, %v4260
    %v4373 = vsub.f32 %v4191, %v4261
    %v4374 = vsub.f32 %v4196, %v4262
    %v4375 = vsub.f32 %v4199, %v4263
    %v4376 = vsub.f32 %v4204, %v4264
    %v4377 = vsub.f32 %v4207, %v4265
    %v4378 = vsub.f32 %v4212, %v4266
    %v4379 = vsub.f32 %v4215, %v4267
    %v4380 = vsub.f32 %v4220, %v4268
    %v4381 = vsub.f32 %v4223, %v4269
    %v4382 = vsub.f32 %v4228, %v4270
    %v4383 = vsub.f32 %v4231, %v4271
    %v4384 = vsub.f32 %v4236, %v4272
    %v4385 = vsub.f32 %v4239, %v4273
    %v4386 = vmul.f32 %v4370, 1.442695
    %v4387 = vpow.pop %v4386
    %v4388 = vmul.f32 %v4371, 1.442695
    %v4389 = vpow.pop %v4388
    %v4390 = vmul.f32 %v4372, 1.442695
    %v4391 = vpow.pop %v4390
    %v4392 = vmul.f32 %v4373, 1.442695
    %v4393 = vpow.pop %v4392
    %v4394 = vmul.f32 %v4374, 1.442695
    %v4395 = vpow.pop %v4394
    %v4396 = vmul.f32 %v4375, 1.442695
    %v4397 = vpow.pop %v4396
    %v4398 = vmul.f32 %v4376, 1.442695
    %v4399 = vpow.pop %v4398
    %v4400 = vmul.f32 %v4377, 1.442695
    %v4401 = vpow.pop %v4400
    %v4402 = vmul.f32 %v4378, 1.442695
    %v4403 = vpow.pop %v4402
    %v4404 = vmul.f32 %v4379, 1.442695
    %v4405 = vpow.pop %v4404
    %v4406 = vmul.f32 %v4380, 1.442695
    %v4407 = vpow.pop %v4406
    %v4408 = vmul.f32 %v4381, 1.442695
    %v4409 = vpow.pop %v4408
    %v4410 = vmul.f32 %v4382, 1.442695
    %v4411 = vpow.pop %v4410
    %v4412 = vmul.f32 %v4383, 1.442695
    %v4413 = vpow.pop %v4412
    %v4414 = vmul.f32 %v4384, 1.442695
    %v4415 = vpow.pop %v4414
    %v4416 = vmul.f32 %v4385, 1.442695
    %v4417 = vpow.pop %v4416
    %v4418 = vadd.f32 %v4291, %v4339
    %v4419 = vadd.f32 %v4293, %v4341
    %v4420 = vadd.f32 %v4295, %v4343
    %v4421 = vadd.f32 %v4297, %v4345
    %v4422 = vadd.f32 %v4299, %v4347
    %v4423 = vadd.f32 %v4301, %v4349
    %v4424 = vadd.f32 %v4303, %v4351
    %v4425 = vadd.f32 %v4305, %v4353
    %v4426 = vadd.f32 %v4307, %v4355
    %v4427 = vadd.f32 %v4309, %v4357
    %v4428 = vadd.f32 %v4311, %v4359
    %v4429 = vadd.f32 %v4313, %v4361
    %v4430 = vadd.f32 %v4315, %v4363
    %v4431 = vadd.f32 %v4317, %v4365
    %v4432 = vadd.f32 %v4319, %v4367
    %v4433 = vadd.f32 %v4321, %v4369
    %v4434 = vadd.f32 %v4418, %v4387
    %v4435 = vadd.f32 %v4419, %v4389
    %v4436 = vadd.f32 %v4420, %v4391
    %v4437 = vadd.f32 %v4421, %v4393
    %v4438 = vadd.f32 %v4422, %v4395
    %v4439 = vadd.f32 %v4423, %v4397
    %v4440 = vadd.f32 %v4424, %v4399
    %v4441 = vadd.f32 %v4425, %v4401
    %v4442 = vadd.f32 %v4426, %v4403
    %v4443 = vadd.f32 %v4427, %v4405
    %v4444 = vadd.f32 %v4428, %v4407
    %v4445 = vadd.f32 %v4429, %v4409
    %v4446 = vadd.f32 %v4430, %v4411
    %v4447 = vadd.f32 %v4431, %v4413
    %v4448 = vadd.f32 %v4432, %v4415
    %v4449 = vadd.f32 %v4433, %v4417
    %v4450 = vrcp.pop %v4434
    %v4451 = vmul.f32 1.0, %v4450
    %v4452 = vrcp.pop %v4435
    %v4453 = vmul.f32 1.0, %v4452
    %v4454 = vrcp.pop %v4436
    %v4455 = vmul.f32 1.0, %v4454
    %v4456 = vrcp.pop %v4437
    %v4457 = vmul.f32 1.0, %v4456
    %v4458 = vrcp.pop %v4438
    %v4459 = vmul.f32 1.0, %v4458
    %v4460 = vrcp.pop %v4439
    %v4461 = vmul.f32 1.0, %v4460
    %v4462 = vrcp.pop %v4440
    %v4463 = vmul.f32 1.0, %v4462
    %v4464 = vrcp.pop %v4441
    %v4465 = vmul.f32 1.0, %v4464
    %v4466 = vrcp.pop %v4442
    %v4467 = vmul.f32 1.0, %v4466
    %v4468 = vrcp.pop %v4443
    %v4469 = vmul.f32 1.0, %v4468
    %v4470 = vrcp.pop %v4444
    %v4471 = vmul.f32 1.0, %v4470
    %v4472 = vrcp.pop %v4445
    %v4473 = vmul.f32 1.0, %v4472
    %v4474 = vrcp.pop %v4446
    %v4475 = vmul.f32 1.0, %v4474
    %v4476 = vrcp.pop %v4447
    %v4477 = vmul.f32 1.0, %v4476
    %v4478 = vrcp.pop %v4448
    %v4479 = vmul.f32 1.0, %v4478
    %v4480 = vrcp.pop %v4449
    %v4481 = vmul.f32 1.0, %v4480
    %v4482 = vmul.f32 %v4291, %v4451
    %v4483 = vmul.f32 %v4293, %v4453
    %v4484 = vmul.f32 %v4295, %v4455
    %v4485 = vmul.f32 %v4297, %v4457
    %v4486 = vmul.f32 %v4299, %v4459
    %v4487 = vmul.f32 %v4301, %v4461
    %v4488 = vmul.f32 %v4303, %v4463
    %v4489 = vmul.f32 %v4305, %v4465
    %v4490 = vmul.f32 %v4307, %v4467
    %v4491 = vmul.f32 %v4309, %v4469
    %v4492 = vmul.f32 %v4311, %v4471
    %v4493 = vmul.f32 %v4313, %v4473
    %v4494 = vmul.f32 %v4315, %v4475
    %v4495 = vmul.f32 %v4317, %v4477
    %v4496 = vmul.f32 %v4319, %v4479
    %v4497 = vmul.f32 %v4321, %v4481
    %v4498 = vmul.f32 %v4339, %v4451
    %v4499 = vmul.f32 %v4341, %v4453
    %v4500 = vmul.f32 %v4343, %v4455
    %v4501 = vmul.f32 %v4345, %v4457
    %v4502 = vmul.f32 %v4347, %v4459
    %v4503 = vmul.f32 %v4349, %v4461
    %v4504 = vmul.f32 %v4351, %v4463
    %v4505 = vmul.f32 %v4353, %v4465
    %v4506 = vmul.f32 %v4355, %v4467
    %v4507 = vmul.f32 %v4357, %v4469
    %v4508 = vmul.f32 %v4359, %v4471
    %v4509 = vmul.f32 %v4361, %v4473
    %v4510 = vmul.f32 %v4363, %v4475
    %v4511 = vmul.f32 %v4365, %v4477
    %v4512 = vmul.f32 %v4367, %v4479
    %v4513 = vmul.f32 %v4369, %v4481
    %v4514 = vmul.f32 %v4387, %v4451
    %v4515 = vmul.f32 %v4389, %v4453
    %v4516 = vmul.f32 %v4391, %v4455
    %v4517 = vmul.f32 %v4393, %v4457
    %v4518 = vmul.f32 %v4395, %v4459
    %v4519 = vmul.f32 %v4397, %v4461
    %v4520 = vmul.f32 %v4399, %v4463
    %v4521 = vmul.f32 %v4401, %v4465
    %v4522 = vmul.f32 %v4403, %v4467
    %v4523 = vmul.f32 %v4405, %v4469
    %v4524 = vmul.f32 %v4407, %v4471
    %v4525 = vmul.f32 %v4409, %v4473
    %v4526 = vmul.f32 %v4411, %v4475
    %v4527 = vmul.f32 %v4413, %v4477
    %v4528 = vmul.f32 %v4415, %v4479
    %v4529 = vmul.f32 %v4417, %v4481
    %4531 = vset.pattern.permute.xlu0 0
    %4532 = vperm.xlu0 %4531, %v4482
    %v4533 = vpop.permute.xlu0 %4532
    %4536 = vset.pattern.permute.xlu0 0
    %4537 = vperm.xlu0 %4536, %v4483
    %v4538 = vpop.permute.xlu0 %4537
    %4541 = vset.pattern.permute.xlu0 0
    %4542 = vperm.xlu0 %4541, %v4484
    %v4543 = vpop.permute.xlu0 %4542
    %4546 = vset.pattern.permute.xlu0 0
    %4547 = vperm.xlu0 %4546, %v4485
    %v4548 = vpop.permute.xlu0 %4547
    %v4550 = vmul.f32 %v4533, %v3416
    %v4551 = vmul.f32 %v4538, %v3417
    %v4552 = vmul.f32 %v4543, %v3418
    %v4553 = vmul.f32 %v4548, %v3419
    %4555 = vset.pattern.permute.xlu0 0
    %4556 = vperm.xlu0 %4555, %v4498
    %v4557 = vpop.permute.xlu0 %4556
    %4560 = vset.pattern.permute.xlu0 0
    %4561 = vperm.xlu0 %4560, %v4499
    %v4562 = vpop.permute.xlu0 %4561
    %4565 = vset.pattern.permute.xlu0 0
    %4566 = vperm.xlu0 %4565, %v4500
    %v4567 = vpop.permute.xlu0 %4566
    %4570 = vset.pattern.permute.xlu0 0
    %4571 = vperm.xlu0 %4570, %v4501
    %v4572 = vpop.permute.xlu0 %4571
    %v4574 = vmul.f32 %v4557, %v3428
    %v4575 = vmul.f32 %v4562, %v3429
    %v4576 = vmul.f32 %v4567, %v3430
    %v4577 = vmul.f32 %v4572, %v3431
    %v4578 = vadd.f32 %v4550, %v4574
    %v4579 = vadd.f32 %v4551, %v4575
    %v4580 = vadd.f32 %v4552, %v4576
    %v4581 = vadd.f32 %v4553, %v4577
    %4583 = vset.pattern.permute.xlu0 0
    %4584 = vperm.xlu0 %4583, %v4514
    %v4585 = vpop.permute.xlu0 %4584
    %4588 = vset.pattern.permute.xlu0 0
    %4589 = vperm.xlu0 %4588, %v4515
    %v4590 = vpop.permute.xlu0 %4589
    %4593 = vset.pattern.permute.xlu0 0
    %4594 = vperm.xlu0 %4593, %v4516
    %v4595 = vpop.permute.xlu0 %4594
    %4598 = vset.pattern.permute.xlu0 0
    %4599 = vperm.xlu0 %4598, %v4517
    %v4600 = vpop.permute.xlu0 %4599
    %v4602 = vmul.f32 %v4585, %v3346
    %v4603 = vmul.f32 %v4590, %v3349
    %v4604 = vmul.f32 %v4595, %v3354
    %v4605 = vmul.f32 %v4600, %v3357
    %v4606 = vadd.f32 %v4578, %v4602
    %v4607 = vadd.f32 %v4579, %v4603
    %v4608 = vadd.f32 %v4580, %v4604
    %v4609 = vadd.f32 %v4581, %v4605
    %v4610 = vpack.c.bf16 %v4607, %v4606
    %v4611 = vpack.c.bf16 %v4609, %v4608
    %4613 = vset.pattern.permute.xlu0 0
    %4614 = vperm.xlu0 %4613, %v4486
    %v4615 = vpop.permute.xlu0 %4614
    %4618 = vset.pattern.permute.xlu0 0
    %4619 = vperm.xlu0 %4618, %v4487
    %v4620 = vpop.permute.xlu0 %4619
    %4623 = vset.pattern.permute.xlu0 0
    %4624 = vperm.xlu0 %4623, %v4488
    %v4625 = vpop.permute.xlu0 %4624
    %4628 = vset.pattern.permute.xlu0 0
    %4629 = vperm.xlu0 %4628, %v4489
    %v4630 = vpop.permute.xlu0 %4629
    %v4632 = vmul.f32 %v4615, %v3456
    %v4633 = vmul.f32 %v4620, %v3457
    %v4634 = vmul.f32 %v4625, %v3458
    %v4635 = vmul.f32 %v4630, %v3459
    %4637 = vset.pattern.permute.xlu0 0
    %4638 = vperm.xlu0 %4637, %v4502
    %v4639 = vpop.permute.xlu0 %4638
    %4642 = vset.pattern.permute.xlu0 0
    %4643 = vperm.xlu0 %4642, %v4503
    %v4644 = vpop.permute.xlu0 %4643
    %4647 = vset.pattern.permute.xlu0 0
    %4648 = vperm.xlu0 %4647, %v4504
    %v4649 = vpop.permute.xlu0 %4648
    %4652 = vset.pattern.permute.xlu0 0
    %4653 = vperm.xlu0 %4652, %v4505
    %v4654 = vpop.permute.xlu0 %4653
    %v4656 = vmul.f32 %v4639, %v3468
    %v4657 = vmul.f32 %v4644, %v3469
    %v4658 = vmul.f32 %v4649, %v3470
    %v4659 = vmul.f32 %v4654, %v3471
    %v4660 = vadd.f32 %v4632, %v4656
    %v4661 = vadd.f32 %v4633, %v4657
    %v4662 = vadd.f32 %v4634, %v4658
    %v4663 = vadd.f32 %v4635, %v4659
    %4665 = vset.pattern.permute.xlu0 0
    %4666 = vperm.xlu0 %4665, %v4518
    %v4667 = vpop.permute.xlu0 %4666
    %4670 = vset.pattern.permute.xlu0 0
    %4671 = vperm.xlu0 %4670, %v4519
    %v4672 = vpop.permute.xlu0 %4671
    %4675 = vset.pattern.permute.xlu0 0
    %4676 = vperm.xlu0 %4675, %v4520
    %v4677 = vpop.permute.xlu0 %4676
    %4680 = vset.pattern.permute.xlu0 0
    %4681 = vperm.xlu0 %4680, %v4521
    %v4682 = vpop.permute.xlu0 %4681
    %v4684 = vmul.f32 %v4667, %v3362
    %v4685 = vmul.f32 %v4672, %v3365
    %v4686 = vmul.f32 %v4677, %v3370
    %v4687 = vmul.f32 %v4682, %v3373
    %v4688 = vadd.f32 %v4660, %v4684
    %v4689 = vadd.f32 %v4661, %v4685
    %v4690 = vadd.f32 %v4662, %v4686
    %v4691 = vadd.f32 %v4663, %v4687
    %v4692 = vpack.c.bf16 %v4689, %v4688
    %v4693 = vpack.c.bf16 %v4691, %v4690
    %4695 = vset.pattern.permute.xlu0 0
    %4696 = vperm.xlu0 %4695, %v4490
    %v4697 = vpop.permute.xlu0 %4696
    %4700 = vset.pattern.permute.xlu0 0
    %4701 = vperm.xlu0 %4700, %v4491
    %v4702 = vpop.permute.xlu0 %4701
    %4705 = vset.pattern.permute.xlu0 0
    %4706 = vperm.xlu0 %4705, %v4492
    %v4707 = vpop.permute.xlu0 %4706
    %4710 = vset.pattern.permute.xlu0 0
    %4711 = vperm.xlu0 %4710, %v4493
    %v4712 = vpop.permute.xlu0 %4711
    %v4714 = vmul.f32 %v4697, %v3496
    %v4715 = vmul.f32 %v4702, %v3497
    %v4716 = vmul.f32 %v4707, %v3498
    %v4717 = vmul.f32 %v4712, %v3499
    %4719 = vset.pattern.permute.xlu0 0
    %4720 = vperm.xlu0 %4719, %v4506
    %v4721 = vpop.permute.xlu0 %4720
    %4724 = vset.pattern.permute.xlu0 0
    %4725 = vperm.xlu0 %4724, %v4507
    %v4726 = vpop.permute.xlu0 %4725
    %4729 = vset.pattern.permute.xlu0 0
    %4730 = vperm.xlu0 %4729, %v4508
    %v4731 = vpop.permute.xlu0 %4730
    %4734 = vset.pattern.permute.xlu0 0
    %4735 = vperm.xlu0 %4734, %v4509
    %v4736 = vpop.permute.xlu0 %4735
    %v4738 = vmul.f32 %v4721, %v3508
    %v4739 = vmul.f32 %v4726, %v3509
    %v4740 = vmul.f32 %v4731, %v3510
    %v4741 = vmul.f32 %v4736, %v3511
    %v4742 = vadd.f32 %v4714, %v4738
    %v4743 = vadd.f32 %v4715, %v4739
    %v4744 = vadd.f32 %v4716, %v4740
    %v4745 = vadd.f32 %v4717, %v4741
    %4747 = vset.pattern.permute.xlu0 0
    %4748 = vperm.xlu0 %4747, %v4522
    %v4749 = vpop.permute.xlu0 %4748
    %4752 = vset.pattern.permute.xlu0 0
    %4753 = vperm.xlu0 %4752, %v4523
    %v4754 = vpop.permute.xlu0 %4753
    %4757 = vset.pattern.permute.xlu0 0
    %4758 = vperm.xlu0 %4757, %v4524
    %v4759 = vpop.permute.xlu0 %4758
    %4762 = vset.pattern.permute.xlu0 0
    %4763 = vperm.xlu0 %4762, %v4525
    %v4764 = vpop.permute.xlu0 %4763
    %v4766 = vmul.f32 %v4749, %v3378
    %v4767 = vmul.f32 %v4754, %v3381
    %v4768 = vmul.f32 %v4759, %v3386
    %v4769 = vmul.f32 %v4764, %v3389
    %v4770 = vadd.f32 %v4742, %v4766
    %v4771 = vadd.f32 %v4743, %v4767
    %v4772 = vadd.f32 %v4744, %v4768
    %v4773 = vadd.f32 %v4745, %v4769
    %v4774 = vpack.c.bf16 %v4771, %v4770
    %v4775 = vpack.c.bf16 %v4773, %v4772
    %4777 = vset.pattern.permute.xlu0 0
    %4778 = vperm.xlu0 %4777, %v4494
    %v4779 = vpop.permute.xlu0 %4778
    %4782 = vset.pattern.permute.xlu0 0
    %4783 = vperm.xlu0 %4782, %v4495
    %v4784 = vpop.permute.xlu0 %4783
    %4787 = vset.pattern.permute.xlu0 0
    %4788 = vperm.xlu0 %4787, %v4496
    %v4789 = vpop.permute.xlu0 %4788
    %4792 = vset.pattern.permute.xlu0 0
    %4793 = vperm.xlu0 %4792, %v4497
    %v4794 = vpop.permute.xlu0 %4793
    %v4796 = vmul.f32 %v4779, %v3536
    %v4797 = vmul.f32 %v4784, %v3537
    %v4798 = vmul.f32 %v4789, %v3538
    %v4799 = vmul.f32 %v4794, %v3539
    %4801 = vset.pattern.permute.xlu0 0
    %4802 = vperm.xlu0 %4801, %v4510
    %v4803 = vpop.permute.xlu0 %4802
    %4806 = vset.pattern.permute.xlu0 0
    %4807 = vperm.xlu0 %4806, %v4511
    %v4808 = vpop.permute.xlu0 %4807
    %4811 = vset.pattern.permute.xlu0 0
    %4812 = vperm.xlu0 %4811, %v4512
    %v4813 = vpop.permute.xlu0 %4812
    %4816 = vset.pattern.permute.xlu0 0
    %4817 = vperm.xlu0 %4816, %v4513
    %v4818 = vpop.permute.xlu0 %4817
    %v4820 = vmul.f32 %v4803, %v3548
    %v4821 = vmul.f32 %v4808, %v3549
    %v4822 = vmul.f32 %v4813, %v3550
    %v4823 = vmul.f32 %v4818, %v3551
    %v4824 = vadd.f32 %v4796, %v4820
    %v4825 = vadd.f32 %v4797, %v4821
    %v4826 = vadd.f32 %v4798, %v4822
    %v4827 = vadd.f32 %v4799, %v4823
    %4829 = vset.pattern.permute.xlu0 0
    %4830 = vperm.xlu0 %4829, %v4526
    %v4831 = vpop.permute.xlu0 %4830
    %4834 = vset.pattern.permute.xlu0 0
    %4835 = vperm.xlu0 %4834, %v4527
    %v4836 = vpop.permute.xlu0 %4835
    %4839 = vset.pattern.permute.xlu0 0
    %4840 = vperm.xlu0 %4839, %v4528
    %v4841 = vpop.permute.xlu0 %4840
    %4844 = vset.pattern.permute.xlu0 0
    %4845 = vperm.xlu0 %4844, %v4529
    %v4846 = vpop.permute.xlu0 %4845
    %v4848 = vmul.f32 %v4831, %v3394
    %v4849 = vmul.f32 %v4836, %v3397
    %v4850 = vmul.f32 %v4841, %v3402
    %v4851 = vmul.f32 %v4846, %v3405
    %v4852 = vadd.f32 %v4824, %v4848
    %v4853 = vadd.f32 %v4825, %v4849
    %v4854 = vadd.f32 %v4826, %v4850
    %v4855 = vadd.f32 %v4827, %v4851
    %v4856 = vpack.c.bf16 %v4853, %v4852
    %v4857 = vpack.c.bf16 %v4855, %v4854
    %v4858 = vld [vmem:[#allocation5] sm:$0xf]
    %v4859 = vld [vmem:[#allocation5 + $0x4] sm:$0xf]
    %v4860 = vld [vmem:[#allocation5 + $0x8] sm:$0xf]
    %v4861 = vld [vmem:[#allocation5 + $0xc] sm:$0xf]
    %v4862 = vld [vmem:[#allocation5 + $0x10] sm:$0xf]
    %v4863 = vld [vmem:[#allocation5 + $0x14] sm:$0xf]
    %v4864 = vld [vmem:[#allocation5 + $0x18] sm:$0xf]
    %v4865 = vld [vmem:[#allocation5 + $0x1c] sm:$0xf]
    %v4866 = vld [vmem:[#allocation5 + $0x20] sm:$0xf]
    %v4867 = vld [vmem:[#allocation5 + $0x24] sm:$0xf]
    %v4868 = vld [vmem:[#allocation5 + $0x28] sm:$0xf]
    %v4869 = vld [vmem:[#allocation5 + $0x2c] sm:$0xf]
    %v4870 = vld [vmem:[#allocation5 + $0x30] sm:$0xf]
    %v4871 = vld [vmem:[#allocation5 + $0x34] sm:$0xf]
    %v4872 = vld [vmem:[#allocation5 + $0x38] sm:$0xf]
    %v4873 = vld [vmem:[#allocation5 + $0x3c] sm:$0xf]
    %v4874 = vld [vmem:[%s6] sm:$0xff]
    %v4875 = vld [vmem:[%s6 + $0x8] sm:$0xff]
    %v4876 = vld [vmem:[%s6 + $0x10] sm:$0xff]
    %v4877 = vld [vmem:[%s6 + $0x18] sm:$0xff]
    %v4878 = vld [vmem:[%s6 + $0x20] sm:$0xff]
    %v4879 = vld [vmem:[%s6 + $0x28] sm:$0xff]
    %v4880 = vld [vmem:[%s6 + $0x30] sm:$0xff]
    %v4881 = vld [vmem:[%s6 + $0x38] sm:$0xff]
    %v4882 = vld [vmem:[%s6 + $0x40] sm:$0xff]
    %v4883 = vld [vmem:[%s6 + $0x48] sm:$0xff]
    %v4884 = vld [vmem:[%s6 + $0x50] sm:$0xff]
    %v4885 = vld [vmem:[%s6 + $0x58] sm:$0xff]
    %v4886 = vld [vmem:[%s6 + $0x60] sm:$0xff]
    %v4887 = vld [vmem:[%s6 + $0x68] sm:$0xff]
    %v4888 = vld [vmem:[%s6 + $0x70] sm:$0xff]
    %v4889 = vld [vmem:[%s6 + $0x78] sm:$0xff]
    %4891 = vset.pattern.permute.xlu0 0
    %4892 = vperm.xlu0 %4891, %v4874
    %v4893 = vpop.permute.xlu0 %4892
    %4896 = vset.pattern.permute.xlu0 0
    %4897 = vperm.xlu0 %4896, %v4875
    %v4898 = vpop.permute.xlu0 %4897
    %4901 = vset.pattern.permute.xlu0 0
    %4902 = vperm.xlu0 %4901, %v4876
    %v4903 = vpop.permute.xlu0 %4902
    %4906 = vset.pattern.permute.xlu0 0
    %4907 = vperm.xlu0 %4906, %v4877
    %v4908 = vpop.permute.xlu0 %4907
    %4911 = vset.pattern.permute.xlu0 0
    %4912 = vperm.xlu0 %4911, %v4878
    %v4913 = vpop.permute.xlu0 %4912
    %4916 = vset.pattern.permute.xlu0 0
    %4917 = vperm.xlu0 %4916, %v4879
    %v4918 = vpop.permute.xlu0 %4917
    %4921 = vset.pattern.permute.xlu0 0
    %4922 = vperm.xlu0 %4921, %v4880
    %v4923 = vpop.permute.xlu0 %4922
    %4926 = vset.pattern.permute.xlu0 0
    %4927 = vperm.xlu0 %4926, %v4881
    %v4928 = vpop.permute.xlu0 %4927
    %4931 = vset.pattern.permute.xlu0 0
    %4932 = vperm.xlu0 %4931, %v4882
    %v4933 = vpop.permute.xlu0 %4932
    %4936 = vset.pattern.permute.xlu0 0
    %4937 = vperm.xlu0 %4936, %v4883
    %v4938 = vpop.permute.xlu0 %4937
    %4941 = vset.pattern.permute.xlu0 0
    %4942 = vperm.xlu0 %4941, %v4884
    %v4943 = vpop.permute.xlu0 %4942
    %4946 = vset.pattern.permute.xlu0 0
    %4947 = vperm.xlu0 %4946, %v4885
    %v4948 = vpop.permute.xlu0 %4947
    %4951 = vset.pattern.permute.xlu0 0
    %4952 = vperm.xlu0 %4951, %v4886
    %v4953 = vpop.permute.xlu0 %4952
    %4956 = vset.pattern.permute.xlu0 0
    %4957 = vperm.xlu0 %4956, %v4887
    %v4958 = vpop.permute.xlu0 %4957
    %4961 = vset.pattern.permute.xlu0 0
    %4962 = vperm.xlu0 %4961, %v4888
    %v4963 = vpop.permute.xlu0 %4962
    %4966 = vset.pattern.permute.xlu0 0
    %4967 = vperm.xlu0 %4966, %v4889
    %v4968 = vpop.permute.xlu0 %4967
    %v4986 = vunpack.c.l.b16 %v4858
    %v4987 = vunpack.c.l.b16 %v4859
    %v4988 = vunpack.c.l.b16 %v4860
    %v4989 = vunpack.c.l.b16 %v4861
    %v4990 = vunpack.c.l.b16 %v4862
    %v4991 = vunpack.c.l.b16 %v4863
    %v4992 = vunpack.c.l.b16 %v4864
    %v4993 = vunpack.c.l.b16 %v4865
    %v4994 = vunpack.c.l.b16 %v4866
    %v4995 = vunpack.c.l.b16 %v4867
    %v4996 = vunpack.c.l.b16 %v4868
    %v4997 = vunpack.c.l.b16 %v4869
    %v4998 = vunpack.c.l.b16 %v4870
    %v4999 = vunpack.c.l.b16 %v4871
    %v5000 = vunpack.c.l.b16 %v4872
    %v5001 = vunpack.c.l.b16 %v4873
    %v5002 = vpack.c.b16 %v4987, %v4986
    %v5003 = vpack.c.b16 %v4989, %v4988
    %v5004 = vpack.c.b16 %v4991, %v4990
    %v5005 = vpack.c.b16 %v4993, %v4992
    %v5006 = vpack.c.b16 %v4995, %v4994
    %v5007 = vpack.c.b16 %v4997, %v4996
    %v5008 = vpack.c.b16 %v4999, %v4998
    %v5009 = vpack.c.b16 %v5001, %v5000
    %5018 = vmatprep.subr.bf16.mxu0 0
    %5019 = vmatpush1.bf16.msra.mxu0 %v4610
    %5020 = vmatprep.subr.bf16.mxu0 0
    %5021 = vmatpush1.bf16.msra.mxu0 %v4611
    %5022 = vmatprep.subr.bf16.mxu0 0
    %5023 = vmatpush1.bf16.msra.mxu0 %v4692
    %5024 = vmatprep.subr.bf16.mxu0 0
    %5025 = vmatpush1.bf16.msra.mxu0 %v4693
    %5026 = vmatprep.subr.bf16.mxu0 0
    %5027 = vmatpush1.bf16.msra.mxu0 %v4774
    %5028 = vmatprep.subr.bf16.mxu0 0
    %5029 = vmatpush1.bf16.msra.mxu0 %v4775
    %5030 = vmatprep.subr.bf16.mxu0 0
    %5031 = vmatpush1.bf16.msra.mxu0 %v4856
    %5032 = vmatprep.subr.bf16.mxu0 0
    %5033 = vmatpush1.bf16.msra.mxu0 %v4857
    %5034 = vmatprep.subr.bf16.mxu0 0
    %5035 = vmatpush1.bf16.msra.mxu0 0
    %5036 = vmatprep.subr.bf16.mxu0 0
    %5037 = vmatpush1.bf16.msra.mxu0 0
    %5038 = vmatprep.subr.bf16.mxu0 0
    %5039 = vmatpush1.bf16.msra.mxu0 0
    %5040 = vmatprep.subr.bf16.mxu0 0
    %5041 = vmatpush1.bf16.msra.mxu0 0
    %5042 = vmatprep.subr.bf16.mxu0 0
    %5043 = vmatpush1.bf16.msra.mxu0 0
    %5044 = vmatprep.subr.bf16.mxu0 0
    %5045 = vmatpush1.bf16.msra.mxu0 0
    %5046 = vmatprep.subr.bf16.mxu0 0
    %5047 = vmatpush1.bf16.msra.mxu0 0
    %5048 = vmatprep.subr.bf16.mxu0 0
    %5049 = vmatpush1.bf16.msra.mxu0 0
    %5050 = vmatprep.mubr.bf16.mxu0 0
    %5051 = vmatmul.mubr.bf16.gmra.mrb[0].mxu0 %v5002
    %v5052 = vpop.f32.mrb[0].mxu0
    %v5053 = vadd.f32 %v4893, %v5052
    %v5054 = vpop.f32.mrb[0].mxu0
    %v5055 = vpop.f32.mrb[0].mxu0
    %v5056 = vadd.f32 %v4898, %v5055
    %v5057 = vpop.f32.mrb[0].mxu0
    %5058 = vmatprep.mubr.bf16.mxu0 0
    %5059 = vmatmul.mubr.bf16.gmra.mrb[0].mxu0 %v5003
    %v5060 = vpop.f32.mrb[0].mxu0
    %v5061 = vadd.f32 %v4903, %v5060
    %v5062 = vpop.f32.mrb[0].mxu0
    %v5063 = vpop.f32.mrb[0].mxu0
    %v5064 = vadd.f32 %v4908, %v5063
    %v5065 = vpop.f32.mrb[0].mxu0
    %5066 = vmatprep.mubr.bf16.mxu0 0
    %5067 = vmatmul.mubr.bf16.gmra.mrb[0].mxu0 %v5004
    %v5068 = vpop.f32.mrb[0].mxu0
    %v5069 = vadd.f32 %v4913, %v5068
    %v5070 = vpop.f32.mrb[0].mxu0
    %v5071 = vpop.f32.mrb[0].mxu0
    %v5072 = vadd.f32 %v4918, %v5071
    %v5073 = vpop.f32.mrb[0].mxu0
    %5074 = vmatprep.mubr.bf16.mxu0 0
    %5075 = vmatmul.mubr.bf16.gmra.mrb[0].mxu0 %v5005
    %v5076 = vpop.f32.mrb[0].mxu0
    %v5077 = vadd.f32 %v4923, %v5076
    %v5078 = vpop.f32.mrb[0].mxu0
    %v5079 = vpop.f32.mrb[0].mxu0
    %v5080 = vadd.f32 %v4928, %v5079
    %v5081 = vpop.f32.mrb[0].mxu0
    %5082 = vmatprep.mubr.bf16.mxu0 0
    %5083 = vmatmul.mubr.bf16.gmra.mrb[0].mxu0 %v5006
    %v5084 = vpop.f32.mrb[0].mxu0
    %v5085 = vadd.f32 %v4933, %v5084
    %v5086 = vpop.f32.mrb[0].mxu0
    %v5087 = vpop.f32.mrb[0].mxu0
    %v5088 = vadd.f32 %v4938, %v5087
    %v5089 = vpop.f32.mrb[0].mxu0
    %5090 = vmatprep.mubr.bf16.mxu0 0
    %5091 = vmatmul.mubr.bf16.gmra.mrb[0].mxu0 %v5007
    %v5092 = vpop.f32.mrb[0].mxu0
    %v5093 = vadd.f32 %v4943, %v5092
    %v5094 = vpop.f32.mrb[0].mxu0
    %v5095 = vpop.f32.mrb[0].mxu0
    %v5096 = vadd.f32 %v4948, %v5095
    %v5097 = vpop.f32.mrb[0].mxu0
    %5098 = vmatprep.mubr.bf16.mxu0 0
    %5099 = vmatmul.mubr.bf16.gmra.mrb[0].mxu0 %v5008
    %v5100 = vpop.f32.mrb[0].mxu0
    %v5101 = vadd.f32 %v4953, %v5100
    %v5102 = vpop.f32.mrb[0].mxu0
    %v5103 = vpop.f32.mrb[0].mxu0
    %v5104 = vadd.f32 %v4958, %v5103
    %v5105 = vpop.f32.mrb[0].mxu0
    %5106 = vmatprep.mubr.bf16.mxu0 0
    %5107 = vmatmul.mubr.bf16.gmra.mrb[0].mxu0 %v5009
    %v5108 = vpop.f32.mrb[0].mxu0
    %v5109 = vadd.f32 %v4963, %v5108
    %v5110 = vpop.f32.mrb[0].mxu0
    %v5111 = vpop.f32.mrb[0].mxu0
    %v5112 = vadd.f32 %v4968, %v5111
    %v5113 = vpop.f32.mrb[0].mxu0
    %5114 = vdwg.mxu0
    %v5115 = vpack.c.bf16 %v5056, %v5053
    %v5116 = vpack.c.bf16 %v5064, %v5061
    %v5117 = vpack.c.bf16 %v5072, %v5069
    %v5118 = vpack.c.bf16 %v5080, %v5077
    %v5119 = vpack.c.bf16 %v5088, %v5085
    %v5120 = vpack.c.bf16 %v5096, %v5093
    %v5121 = vpack.c.bf16 %v5104, %v5101
    %v5122 = vpack.c.bf16 %v5112, %v5109
    %v5131 = vunpack.c.l.b16 %v5115
    %v5132 = vunpack.c.h.b16 %v5115
    %v5133 = vunpack.c.l.b16 %v5116
    %v5134 = vunpack.c.h.b16 %v5116
    %v5135 = vunpack.c.l.b16 %v5117
    %v5136 = vunpack.c.h.b16 %v5117
    %v5137 = vunpack.c.l.b16 %v5118
    %v5138 = vunpack.c.h.b16 %v5118
    %v5139 = vunpack.c.l.b16 %v5119
    %v5140 = vunpack.c.h.b16 %v5119
    %v5141 = vunpack.c.l.b16 %v5120
    %v5142 = vunpack.c.h.b16 %v5120
    %v5143 = vunpack.c.l.b16 %v5121
    %v5144 = vunpack.c.h.b16 %v5121
    %v5145 = vunpack.c.l.b16 %v5122
    %v5146 = vunpack.c.h.b16 %v5122
    %v5147 = vpack.c.b16 %v5131, %v5131
    %v5148 = vpack.c.b16 %v5132, %v5132
    %v5149 = vpack.c.b16 %v5133, %v5133
    %v5150 = vpack.c.b16 %v5134, %v5134
    %v5151 = vpack.c.b16 %v5135, %v5135
    %v5152 = vpack.c.b16 %v5136, %v5136
    %v5153 = vpack.c.b16 %v5137, %v5137
    %v5154 = vpack.c.b16 %v5138, %v5138
    %v5155 = vpack.c.b16 %v5139, %v5139
    %v5156 = vpack.c.b16 %v5140, %v5140
    %v5157 = vpack.c.b16 %v5141, %v5141
    %v5158 = vpack.c.b16 %v5142, %v5142
    %v5159 = vpack.c.b16 %v5143, %v5143
    %v5160 = vpack.c.b16 %v5144, %v5144
    %v5161 = vpack.c.b16 %v5145, %v5145
    %v5162 = vpack.c.b16 %v5146, %v5146
    %s5179 = scalar_lea.vmem [#allocation7], 64
    %5180 = vst [vmem:[%s5179] sm:$0xf] %v5147
    %5181 = vst [vmem:[%s5179 + $0x4] sm:$0xf] %v5148
    %5182 = vst [vmem:[%s5179 + $0x8] sm:$0xf] %v5149
    %5183 = vst [vmem:[%s5179 + $0xc] sm:$0xf] %v5150
    %5184 = vst [vmem:[%s5179 + $0x10] sm:$0xf] %v5151
    %5185 = vst [vmem:[%s5179 + $0x14] sm:$0xf] %v5152
    %5186 = vst [vmem:[%s5179 + $0x18] sm:$0xf] %v5153
    %5187 = vst [vmem:[%s5179 + $0x1c] sm:$0xf] %v5154
    %5188 = vst [vmem:[%s5179 + $0x20] sm:$0xf] %v5155
    %5189 = vst [vmem:[%s5179 + $0x24] sm:$0xf] %v5156
    %5190 = vst [vmem:[%s5179 + $0x28] sm:$0xf] %v5157
    %5191 = vst [vmem:[%s5179 + $0x2c] sm:$0xf] %v5158
    %5192 = vst [vmem:[%s5179 + $0x30] sm:$0xf] %v5159
    %5193 = vst [vmem:[%s5179 + $0x34] sm:$0xf] %v5160
    %5194 = vst [vmem:[%s5179 + $0x38] sm:$0xf] %v5161
    %5195 = vst [vmem:[%s5179 + $0x3c] sm:$0xf] %v5162
    // Predicated region
    $region38: #{tpu_custom_call.1} parent=1 // pred_check
      _
    $region39: #{tpu_custom_call.1} parent=1 // pred_check_branch
      %5197 = sbr.rel (0) target = $region41
    $region40: #{tpu_custom_call.1} parent=1 // pred_region
      %s5199 = ssub.s32 2048, 2048
      %5200 = vsyncadd [#allocation4], %s5199
      %s5201 = sshll.u32 [#allocation7], 4
      %s5202 = int_to_ptr.vmem [resolvable:$true] %s5201
      %5207 = dma.vmem_to_hbm [thread:$0]  %s5202, 2048, %s7, [#allocation4], 64, 64, 4
    $region41: #{tpu_custom_call.1} parent=1 // pred_fallthru
      _
    // Predicated region
    $region42: #{tpu_custom_call.1} parent=1 // pred_check
      _
    $region43: #{tpu_custom_call.1} parent=1 // pred_check_branch
      %5209 = sbr.rel (0) target = $region45
    $region44: #{tpu_custom_call.1} parent=1 // pred_region
      %5210 = dma.done [#allocation4], 2048
    $region45: #{tpu_custom_call.1} parent=1 // pred_fallthru
      _
    %5211 = vsyncpa [#allocation3], 1
    %5212 = vsyncpa [#allocation6], 1
    %5213 = vsyncpa [#allocation4], 1

</llo_original>
